<compile_context>
chip_gen: v7x
topology: tpu7x:2x2x1
jax: 0.10.0
libtpu: 0.0.40
codegen_flags: <defaults>
</compile_context>

<pallas_src>
import jax
import jax.numpy as jnp
from jax.experimental import pallas as pl
from jax.experimental.pallas import tpu as pltpu

GROUPS = 8
EPS = 1e-5


# ----------------------------------------------------------------------------
# Fused Conv3d(k=3,s=1,p=1) + bias + GroupNorm(8) + ReLU kernel
# ----------------------------------------------------------------------------
def _conv_gn_relu_kernel(x_ref, wb_ref, bias_ref, gamma_ref, beta_ref,
                         g_ref, gt_ref, o_ref, pln_ref):
    """One batch element.

    Refs:
      x_ref     (1, Dp, Hp, Wp*Cin)  bf16  zero-padded input window
      wb_ref    (9, Wp*Cin, W*Cout)  bf16  banded weight, one band per (kd,kh)
      bias_ref  (1, W*Cout)          f32   conv bias tiled over W
      gamma_ref (1, W*Cout)          f32   GN gamma tiled over W
      beta_ref  (1, W*Cout)          f32   GN beta tiled over W
      g_ref     (W*Cout, G)          f32   column -> group membership (0/1)
      gt_ref    (G, W*Cout)          f32   transpose of g_ref
      o_ref     (1, D, H, W*Cout)          fused conv+GN+ReLU output
      pln_ref   (Dp, Hp, Wp*Cin)     f32   VMEM staging scratch
    """
    d, h, wc = o_ref.shape[1], o_ref.shape[2], o_ref.shape[3]
    kb = pln_ref.shape[-1]
    groups = g_ref.shape[1]
    inv_count = 1.0 / float(d * h * (wc // groups))

    # Stage the bf16 HBM window as f32 in VMEM: keeps the per-tap slice +
    # reshape layout-trivial and the elementwise math in f32.
    pln_ref[...] = x_ref[0].astype(jnp.float32)

    # 9 stacked-M matmuls: LHS (D*H, Wp*Cin) bf16 @ band (Wp*Cin, W*Cout) bf16
    # with f32 accumulation.  The band absorbs the 3 width taps + W padding.
    acc = jnp.zeros((d * h, wc), jnp.float32)
    for a in range(3):                       # depth taps
        for b in range(3):                   # height taps
            lhs = pln_ref[pl.ds(a, d), pl.ds(b, h), :]          # (D, H, Kb) f32
            lhs = lhs.reshape(d * h, kb).astype(jnp.bfloat16)
            acc = acc + jnp.dot(lhs, wb_ref[3 * a + b],
                                preferred_element_type=jnp.float32)
    out = acc + bias_ref[...]                                    # (D*H, wc)

    # GroupNorm over the whole per-sample tile (all rows/cols are valid, no
    # padding rows in the output), fully in-register.
    col_s = jnp.sum(out, axis=0, keepdims=True)                  # (1, wc)
    col_q = jnp.sum(out * out, axis=0, keepdims=True)            # (1, wc)
    grp_s = jnp.dot(col_s, g_ref[...], preferred_element_type=jnp.float32)
    grp_q = jnp.dot(col_q, g_ref[...], preferred_element_type=jnp.float32)
    mean = grp_s * inv_count                                      # (1, G)
    var = jnp.maximum(grp_q * inv_count - mean * mean, 0.0)       # clamp >= 0
    rstd = jax.lax.rsqrt(var + EPS)
    mean_c = jnp.dot(mean, gt_ref[...], preferred_element_type=jnp.float32)
    rstd_c = jnp.dot(rstd, gt_ref[...], preferred_element_type=jnp.float32)
    scale = rstd_c * gamma_ref[...]                               # (1, wc)
    shift = beta_ref[...] - mean_c * scale
    y = jnp.maximum(out * scale + shift, 0.0)
    o_ref[0] = y.reshape(d, h, wc).astype(o_ref.dtype)


# ----------------------------------------------------------------------------
# Host-side helpers
# ----------------------------------------------------------------------------
def _build_banded_weight(w_dhwio, w_out, wp):
    """(kd,kh,kw,Cin,Cout) -> (kd*kh, Wp*Cin, W*Cout) banded weight.

    band[3a+b, p*Cin + i, x*Cout + o] = w[a, b, p-x, i, o]  (0 <= p-x <= 2)
    so (plane[b:b+H] @ band[3a+b]) accumulates the (a,b,*) taps for all W
    output positions at once; W-axis zero padding is absorbed by the band.
    """
    kd, kh, kw, cin, cout = w_dhwio.shape
    sel = (jnp.arange(wp)[None, None, :] ==
           (jnp.arange(w_out)[None, :, None] + jnp.arange(kw)[:, None, None]))
    sel = sel.astype(w_dhwio.dtype)                              # (kw, W, Wp)
    band = jnp.einsum("cwp,abcio->abpiwo", sel, w_dhwio)
    return band.reshape(kd * kh, wp * cin, w_out * cout)


def conv3d_gn_relu(x, w_dhwio, bias, gamma, beta, *,
                   out_dtype=jnp.float32, groups=GROUPS):
    """Fused Conv3d(k=3,s=1,p=1)+bias+GroupNorm(groups)+ReLU.

    x: (N, D, H, W, Cin).  Returns (N, D, H, W*Cout) with columns ordered
    (w-major, channel-minor), i.e. reshapeable to (N, D, H, W, Cout).
    """
    n, d, h, w, cin = x.shape
    kd, kh, kw, _, cout = w_dhwio.shape
    assert kd == kh == kw == 3, "kernel is specialized for k=3"
    assert cout % groups == 0
    dp, hp, wp = d + 2, h + 2, w + 2
    kb = wp * cin
    wc = w * cout
    cg = cout // groups

    # bf16 activations in HBM (halved read); math stays f32 in-kernel.
    xp = jnp.pad(x.astype(jnp.bfloat16),
                 ((0, 0), (1, 1), (1, 1), (1, 1), (0, 0))).reshape(n, dp, hp, kb)
    band = _build_banded_weight(w_dhwio.astype(jnp.float32), w, wp)
    band = band.astype(jnp.bfloat16)
    bias_cols = jnp.tile(bias.astype(jnp.float32), w).reshape(1, wc)
    gamma_cols = jnp.tile(gamma.astype(jnp.float32), w).reshape(1, wc)
    beta_cols = jnp.tile(beta.astype(jnp.float32), w).reshape(1, wc)
    col_group = (jnp.arange(wc) % cout) // cg
    gmat = (col_group[:, None] == jnp.arange(groups)[None, :]).astype(jnp.float32)
    gmat_t = gmat.T

    return pl.pallas_call(
        _conv_gn_relu_kernel,
        out_shape=jax.ShapeDtypeStruct((n, d, h, wc), out_dtype),
        grid=(n,),
        in_specs=[
            pl.BlockSpec((1, dp, hp, kb), lambda i: (i, 0, 0, 0)),
            pl.BlockSpec((9, kb, wc), lambda i: (0, 0, 0)),
            pl.BlockSpec((1, wc), lambda i: (0, 0)),
            pl.BlockSpec((1, wc), lambda i: (0, 0)),
            pl.BlockSpec((1, wc), lambda i: (0, 0)),
            pl.BlockSpec((wc, groups), lambda i: (0, 0)),
            pl.BlockSpec((groups, wc), lambda i: (0, 0)),
        ],
        out_specs=pl.BlockSpec((1, d, h, wc), lambda i: (i, 0, 0, 0)),
        scratch_shapes=[pltpu.VMEM((dp, hp, kb), jnp.float32)],
        compiler_params=pltpu.CompilerParams(
            dimension_semantics=("parallel",)),
    )(xp, band, bias_cols, gamma_cols, beta_cols, gmat, gmat_t)


def conv_block_3d_forward(x, p):
    n, d, h, w, _ = x.shape
    cout = p["w1"].shape[-1]
    # stage 1: conv + GN + ReLU fused; intermediate kept bf16, lane-dense.
    y1 = conv3d_gn_relu(x, p["w1"], p["b1"], p["g1"], p["be1"],
                        out_dtype=jnp.bfloat16)
    y1 = y1.reshape(n, d, h, w, cout)
    # stage 2: conv + GN + ReLU fused; final output f32.
    y2 = conv3d_gn_relu(y1, p["w2"], p["b2"], p["g2"], p["be2"],
                        out_dtype=jnp.float32)
    return y2.reshape(n, d, h, w, cout)


# ----------------------------------------------------------------------------
# Pure-JAX reference (validation only)
# ----------------------------------------------------------------------------
def _gn_relu_ref(x, gamma, beta, groups=GROUPS, eps=EPS):
    n, d, h, w, c = x.shape
    xg = x.reshape(n, d, h, w, groups, c // groups)
    mean = xg.mean(axis=(1, 2, 3, 5), keepdims=True)
    var = xg.var(axis=(1, 2, 3, 5), keepdims=True)
    y = ((xg - mean) / jnp.sqrt(var + eps)).reshape(n, d, h, w, c)
    return jnp.maximum(y * gamma + beta, 0.0)


def _conv3d_ref(x, w, b):
    out = jax.lax.conv_general_dilated(
        x, w, window_strides=(1, 1, 1), padding=[(1, 1)] * 3,
        dimension_numbers=("NDHWC", "DHWIO", "NDHWC"))
    return out + b


def conv_block_3d_ref(x, p):
    h = _conv3d_ref(x, p["w1"], p["b1"])
    h = _gn_relu_ref(h, p["g1"], p["be1"])
    h = _conv3d_ref(h, p["w2"], p["b2"])
    h = _gn_relu_ref(h, p["g2"], p["be2"])
    return h


# ----------------------------------------------------------------------------
if __name__ == "__main__":
    key = jax.random.PRNGKey(0)
    ks = jax.random.split(key, 9)

    N, D, H, W = 2, 8, 8, 8
    ch_in, ch_out = 4, 16        # GroupNorm(8, ch_out) -> ch_out % 8 == 0
    # W * ch_out == 128 -> conv / GN output slabs are exact 128-lane tiles.

    x = jax.random.normal(ks[0], (N, D, H, W, ch_in), jnp.float32)
    params = {
        "w1": 0.05 * jax.random.normal(ks[1], (3, 3, 3, ch_in, ch_out), jnp.float32),
        "b1": 0.1 * jax.random.normal(ks[2], (ch_out,), jnp.float32),
        "g1": 1.0 + 0.1 * jax.random.normal(ks[3], (ch_out,), jnp.float32),
        "be1": 0.1 * jax.random.normal(ks[4], (ch_out,), jnp.float32),
        "w2": 0.05 * jax.random.normal(ks[5], (3, 3, 3, ch_out, ch_out), jnp.float32),
        "b2": 0.1 * jax.random.normal(ks[6], (ch_out,), jnp.float32),
        "g2": 1.0 + 0.1 * jax.random.normal(ks[7], (ch_out,), jnp.float32),
        "be2": 0.1 * jax.random.normal(ks[8], (ch_out,), jnp.float32),
    }

    fwd = jax.jit(lambda xx: conv_block_3d_forward(xx, params))
    out = jax.block_until_ready(fwd(x))
    assert out.shape == (N, D, H, W, ch_out), out.shape

    ref = conv_block_3d_ref(x, params)
    err = float(jnp.max(jnp.abs(out - ref)))
    # bf16 MXU inputs + bf16 inter-stage activation with f32 accumulation.
    assert err < 1e-1, f"Pallas/ref mismatch: max abs err = {err}"

    print("KERNEL_OK")
</pallas_src>

<mosaic_0001>
module attributes {stable_mosaic.version = 11 : i64} {
  func.func @_conv_gn_relu_kernel(%arg0: i32, %arg1: memref<1x10x10x40xbf16, #tpu.memory_space<vmem>>, %arg2: memref<9x40x128xbf16, #tpu.memory_space<vmem>>, %arg3: memref<1x128xf32, #tpu.memory_space<vmem>>, %arg4: memref<1x128xf32, #tpu.memory_space<vmem>>, %arg5: memref<1x128xf32, #tpu.memory_space<vmem>>, %arg6: memref<128x8xf32, #tpu.memory_space<vmem>>, %arg7: memref<8x128xf32, #tpu.memory_space<vmem>>, %arg8: memref<1x8x8x128xbf16, #tpu.memory_space<vmem>>, %arg9: memref<10x10x40xf32, #tpu.memory_space<vmem>>) attributes {dimension_semantics = [#tpu.dimension_semantics<parallel>], iteration_bounds = array<i64: 2>, scalar_prefetch = 0 : i64, scratch_operands = 1 : i64, tpu.core_type = #tpu.core_type<tc>, window_params = [{transform_indices = @transform_0, window_bounds = array<i64: 1, 10, 10, 40>}, {pipeline_mode = #tpu.pipeline_mode<synchronous>, transform_indices = @transform_1, window_bounds = array<i64: 9, 40, 128>}, {pipeline_mode = #tpu.pipeline_mode<synchronous>, transform_indices = @transform_2, window_bounds = array<i64: 1, 128>}, {pipeline_mode = #tpu.pipeline_mode<synchronous>, transform_indices = @transform_3, window_bounds = array<i64: 1, 128>}, {pipeline_mode = #tpu.pipeline_mode<synchronous>, transform_indices = @transform_4, window_bounds = array<i64: 1, 128>}, {pipeline_mode = #tpu.pipeline_mode<synchronous>, transform_indices = @transform_5, window_bounds = array<i64: 128, 8>}, {pipeline_mode = #tpu.pipeline_mode<synchronous>, transform_indices = @transform_6, window_bounds = array<i64: 8, 128>}, {transform_indices = @transform_7, window_bounds = array<i64: 1, 8, 8, 128>}]} {
    %c0 = arith.constant 0 : index
    %c0_0 = arith.constant 0 : index
    %c0_1 = arith.constant 0 : index
    %c0_2 = arith.constant 0 : index
    %0 = vector.load %arg1[%c0, %c0_0, %c0_1, %c0_2] : memref<1x10x10x40xbf16, #tpu.memory_space<vmem>>, vector<1x10x10x40xbf16>
    %1 = vector.shape_cast %0 : vector<1x10x10x40xbf16> to vector<10x10x40xbf16>
    %2 = arith.extf %1 : vector<10x10x40xbf16> to vector<10x10x40xf32>
    %c0_3 = arith.constant 0 : index
    %c0_4 = arith.constant 0 : index
    %c0_5 = arith.constant 0 : index
    %3 = vector.load %arg9[%c0_3, %c0_4, %c0_5] : memref<10x10x40xf32, #tpu.memory_space<vmem>>, vector<10x10x40xf32>
    tpu.vector_store %arg9[%c0_3, %c0_4, %c0_5], %2 {strides = array<i32>} : memref<10x10x40xf32, #tpu.memory_space<vmem>>, vector<10x10x40xf32>,
    %cst = arith.constant 0.000000e+00 : f32
    %4 = vector.broadcast %cst : f32 to vector<64x128xf32>
    %c0_6 = arith.constant 0 : index
    %c0_7 = arith.constant 0 : index
    %c0_8 = arith.constant 0 : index
    %5 = vector.load %arg9[%c0_6, %c0_7, %c0_8] : memref<10x10x40xf32, #tpu.memory_space<vmem>>, vector<8x8x40xf32>
    %6 = vector.shape_cast %5 : vector<8x8x40xf32> to vector<64x40xf32>
    %7 = arith.truncf %6 : vector<64x40xf32> to vector<64x40xbf16>
    %c0_9 = arith.constant 0 : index
    %c0_10 = arith.constant 0 : index
    %c0_11 = arith.constant 0 : index
    %8 = vector.load %arg2[%c0_9, %c0_10, %c0_11] : memref<9x40x128xbf16, #tpu.memory_space<vmem>>, vector<1x40x128xbf16>
    %9 = vector.shape_cast %8 : vector<1x40x128xbf16> to vector<40x128xbf16>
    %cst_12 = arith.constant dense<0.000000e+00> : vector<64x128xf32>
    %10 = tpu.matmul %7, %9, %cst_12 {dimension_numbers = #tpu.dot_dimension_numbers<[1], [0], [0], [1], [0, 0, 1, 1], [], []>} : vector<64x40xbf16>, vector<40x128xbf16>, vector<64x128xf32> -> vector<64x128xf32>
    %11 = arith.addf %4, %10 : vector<64x128xf32>
    %c0_13 = arith.constant 0 : index
    %c1 = arith.constant 1 : index
    %c0_14 = arith.constant 0 : index
    %12 = vector.load %arg9[%c0_13, %c1, %c0_14] : memref<10x10x40xf32, #tpu.memory_space<vmem>>, vector<8x8x40xf32>
    %13 = vector.shape_cast %12 : vector<8x8x40xf32> to vector<64x40xf32>
    %14 = arith.truncf %13 : vector<64x40xf32> to vector<64x40xbf16>
    %c1_15 = arith.constant 1 : index
    %c0_16 = arith.constant 0 : index
    %c0_17 = arith.constant 0 : index
    %15 = vector.load %arg2[%c1_15, %c0_16, %c0_17] : memref<9x40x128xbf16, #tpu.memory_space<vmem>>, vector<1x40x128xbf16>
    %16 = vector.shape_cast %15 : vector<1x40x128xbf16> to vector<40x128xbf16>
    %cst_18 = arith.constant dense<0.000000e+00> : vector<64x128xf32>
    %17 = tpu.matmul %14, %16, %cst_18 {dimension_numbers = #tpu.dot_dimension_numbers<[1], [0], [0], [1], [0, 0, 1, 1], [], []>} : vector<64x40xbf16>, vector<40x128xbf16>, vector<64x128xf32> -> vector<64x128xf32>
    %18 = arith.addf %11, %17 : vector<64x128xf32>
    %c0_19 = arith.constant 0 : index
    %c2 = arith.constant 2 : index
    %c0_20 = arith.constant 0 : index
    %19 = vector.load %arg9[%c0_19, %c2, %c0_20] : memref<10x10x40xf32, #tpu.memory_space<vmem>>, vector<8x8x40xf32>
    %20 = vector.shape_cast %19 : vector<8x8x40xf32> to vector<64x40xf32>
    %21 = arith.truncf %20 : vector<64x40xf32> to vector<64x40xbf16>
    %c2_21 = arith.constant 2 : index
    %c0_22 = arith.constant 0 : index
    %c0_23 = arith.constant 0 : index
    %22 = vector.load %arg2[%c2_21, %c0_22, %c0_23] : memref<9x40x128xbf16, #tpu.memory_space<vmem>>, vector<1x40x128xbf16>
    %23 = vector.shape_cast %22 : vector<1x40x128xbf16> to vector<40x128xbf16>
    %cst_24 = arith.constant dense<0.000000e+00> : vector<64x128xf32>
    %24 = tpu.matmul %21, %23, %cst_24 {dimension_numbers = #tpu.dot_dimension_numbers<[1], [0], [0], [1], [0, 0, 1, 1], [], []>} : vector<64x40xbf16>, vector<40x128xbf16>, vector<64x128xf32> -> vector<64x128xf32>
    %25 = arith.addf %18, %24 : vector<64x128xf32>
    %c1_25 = arith.constant 1 : index
    %c0_26 = arith.constant 0 : index
    %c0_27 = arith.constant 0 : index
    %26 = vector.load %arg9[%c1_25, %c0_26, %c0_27] : memref<10x10x40xf32, #tpu.memory_space<vmem>>, vector<8x8x40xf32>
    %27 = vector.shape_cast %26 : vector<8x8x40xf32> to vector<64x40xf32>
    %28 = arith.truncf %27 : vector<64x40xf32> to vector<64x40xbf16>
    %c3 = arith.constant 3 : index
    %c0_28 = arith.constant 0 : index
    %c0_29 = arith.constant 0 : index
    %29 = vector.load %arg2[%c3, %c0_28, %c0_29] : memref<9x40x128xbf16, #tpu.memory_space<vmem>>, vector<1x40x128xbf16>
    %30 = vector.shape_cast %29 : vector<1x40x128xbf16> to vector<40x128xbf16>
    %cst_30 = arith.constant dense<0.000000e+00> : vector<64x128xf32>
    %31 = tpu.matmul %28, %30, %cst_30 {dimension_numbers = #tpu.dot_dimension_numbers<[1], [0], [0], [1], [0, 0, 1, 1], [], []>} : vector<64x40xbf16>, vector<40x128xbf16>, vector<64x128xf32> -> vector<64x128xf32>
    %32 = arith.addf %25, %31 : vector<64x128xf32>
    %c1_31 = arith.constant 1 : index
    %c1_32 = arith.constant 1 : index
    %c0_33 = arith.constant 0 : index
    %33 = vector.load %arg9[%c1_31, %c1_32, %c0_33] : memref<10x10x40xf32, #tpu.memory_space<vmem>>, vector<8x8x40xf32>
    %34 = vector.shape_cast %33 : vector<8x8x40xf32> to vector<64x40xf32>
    %35 = arith.truncf %34 : vector<64x40xf32> to vector<64x40xbf16>
    %c4 = arith.constant 4 : index
    %c0_34 = arith.constant 0 : index
    %c0_35 = arith.constant 0 : index
    %36 = vector.load %arg2[%c4, %c0_34, %c0_35] : memref<9x40x128xbf16, #tpu.memory_space<vmem>>, vector<1x40x128xbf16>
    %37 = vector.shape_cast %36 : vector<1x40x128xbf16> to vector<40x128xbf16>
    %cst_36 = arith.constant dense<0.000000e+00> : vector<64x128xf32>
    %38 = tpu.matmul %35, %37, %cst_36 {dimension_numbers = #tpu.dot_dimension_numbers<[1], [0], [0], [1], [0, 0, 1, 1], [], []>} : vector<64x40xbf16>, vector<40x128xbf16>, vector<64x128xf32> -> vector<64x128xf32>
    %39 = arith.addf %32, %38 : vector<64x128xf32>
    %c1_37 = arith.constant 1 : index
    %c2_38 = arith.constant 2 : index
    %c0_39 = arith.constant 0 : index
    %40 = vector.load %arg9[%c1_37, %c2_38, %c0_39] : memref<10x10x40xf32, #tpu.memory_space<vmem>>, vector<8x8x40xf32>
    %41 = vector.shape_cast %40 : vector<8x8x40xf32> to vector<64x40xf32>
    %42 = arith.truncf %41 : vector<64x40xf32> to vector<64x40xbf16>
    %c5 = arith.constant 5 : index
    %c0_40 = arith.constant 0 : index
    %c0_41 = arith.constant 0 : index
    %43 = vector.load %arg2[%c5, %c0_40, %c0_41] : memref<9x40x128xbf16, #tpu.memory_space<vmem>>, vector<1x40x128xbf16>
    %44 = vector.shape_cast %43 : vector<1x40x128xbf16> to vector<40x128xbf16>
    %cst_42 = arith.constant dense<0.000000e+00> : vector<64x128xf32>
    %45 = tpu.matmul %42, %44, %cst_42 {dimension_numbers = #tpu.dot_dimension_numbers<[1], [0], [0], [1], [0, 0, 1, 1], [], []>} : vector<64x40xbf16>, vector<40x128xbf16>, vector<64x128xf32> -> vector<64x128xf32>
    %46 = arith.addf %39, %45 : vector<64x128xf32>
    %c2_43 = arith.constant 2 : index
    %c0_44 = arith.constant 0 : index
    %c0_45 = arith.constant 0 : index
    %47 = vector.load %arg9[%c2_43, %c0_44, %c0_45] : memref<10x10x40xf32, #tpu.memory_space<vmem>>, vector<8x8x40xf32>
    %48 = vector.shape_cast %47 : vector<8x8x40xf32> to vector<64x40xf32>
    %49 = arith.truncf %48 : vector<64x40xf32> to vector<64x40xbf16>
    %c6 = arith.constant 6 : index
    %c0_46 = arith.constant 0 : index
    %c0_47 = arith.constant 0 : index
    %50 = vector.load %arg2[%c6, %c0_46, %c0_47] : memref<9x40x128xbf16, #tpu.memory_space<vmem>>, vector<1x40x128xbf16>
    %51 = vector.shape_cast %50 : vector<1x40x128xbf16> to vector<40x128xbf16>
    %cst_48 = arith.constant dense<0.000000e+00> : vector<64x128xf32>
    %52 = tpu.matmul %49, %51, %cst_48 {dimension_numbers = #tpu.dot_dimension_numbers<[1], [0], [0], [1], [0, 0, 1, 1], [], []>} : vector<64x40xbf16>, vector<40x128xbf16>, vector<64x128xf32> -> vector<64x128xf32>
    %53 = arith.addf %46, %52 : vector<64x128xf32>
    %c2_49 = arith.constant 2 : index
    %c1_50 = arith.constant 1 : index
    %c0_51 = arith.constant 0 : index
    %54 = vector.load %arg9[%c2_49, %c1_50, %c0_51] : memref<10x10x40xf32, #tpu.memory_space<vmem>>, vector<8x8x40xf32>
    %55 = vector.shape_cast %54 : vector<8x8x40xf32> to vector<64x40xf32>
    %56 = arith.truncf %55 : vector<64x40xf32> to vector<64x40xbf16>
    %c7 = arith.constant 7 : index
    %c0_52 = arith.constant 0 : index
    %c0_53 = arith.constant 0 : index
    %57 = vector.load %arg2[%c7, %c0_52, %c0_53] : memref<9x40x128xbf16, #tpu.memory_space<vmem>>, vector<1x40x128xbf16>
    %58 = vector.shape_cast %57 : vector<1x40x128xbf16> to vector<40x128xbf16>
    %cst_54 = arith.constant dense<0.000000e+00> : vector<64x128xf32>
    %59 = tpu.matmul %56, %58, %cst_54 {dimension_numbers = #tpu.dot_dimension_numbers<[1], [0], [0], [1], [0, 0, 1, 1], [], []>} : vector<64x40xbf16>, vector<40x128xbf16>, vector<64x128xf32> -> vector<64x128xf32>
    %60 = arith.addf %53, %59 : vector<64x128xf32>
    %c2_55 = arith.constant 2 : index
    %c2_56 = arith.constant 2 : index
    %c0_57 = arith.constant 0 : index
    %61 = vector.load %arg9[%c2_55, %c2_56, %c0_57] : memref<10x10x40xf32, #tpu.memory_space<vmem>>, vector<8x8x40xf32>
    %62 = vector.shape_cast %61 : vector<8x8x40xf32> to vector<64x40xf32>
    %63 = arith.truncf %62 : vector<64x40xf32> to vector<64x40xbf16>
    %c8 = arith.constant 8 : index
    %c0_58 = arith.constant 0 : index
    %c0_59 = arith.constant 0 : index
    %64 = vector.load %arg2[%c8, %c0_58, %c0_59] : memref<9x40x128xbf16, #tpu.memory_space<vmem>>, vector<1x40x128xbf16>
    %65 = vector.shape_cast %64 : vector<1x40x128xbf16> to vector<40x128xbf16>
    %cst_60 = arith.constant dense<0.000000e+00> : vector<64x128xf32>
    %66 = tpu.matmul %63, %65, %cst_60 {dimension_numbers = #tpu.dot_dimension_numbers<[1], [0], [0], [1], [0, 0, 1, 1], [], []>} : vector<64x40xbf16>, vector<40x128xbf16>, vector<64x128xf32> -> vector<64x128xf32>
    %67 = arith.addf %60, %66 : vector<64x128xf32>
    %c0_61 = arith.constant 0 : index
    %c0_62 = arith.constant 0 : index
    %68 = vector.load %arg3[%c0_61, %c0_62] : memref<1x128xf32, #tpu.memory_space<vmem>>, vector<1x128xf32>
    %69 = vector.broadcast %68 : vector<1x128xf32> to vector<64x128xf32>
    %70 = arith.addf %67, %69 : vector<64x128xf32>
    %cst_63 = arith.constant dense<0.000000e+00> : vector<128xf32>
    %71 = vector.multi_reduction <add>, %70, %cst_63 [0] : vector<64x128xf32> to vector<128xf32>
    %72 = vector.shape_cast %71 : vector<128xf32> to vector<1x128xf32>
    %73 = arith.mulf %70, %70 : vector<64x128xf32>
    %cst_64 = arith.constant dense<0.000000e+00> : vector<128xf32>
    %74 = vector.multi_reduction <add>, %73, %cst_64 [0] : vector<64x128xf32> to vector<128xf32>
    %75 = vector.shape_cast %74 : vector<128xf32> to vector<1x128xf32>
    %c0_65 = arith.constant 0 : index
    %c0_66 = arith.constant 0 : index
    %76 = vector.load %arg6[%c0_65, %c0_66] : memref<128x8xf32, #tpu.memory_space<vmem>>, vector<128x8xf32>
    %cst_67 = arith.constant dense<0.000000e+00> : vector<1x8xf32>
    %77 = tpu.matmul %72, %76, %cst_67 {dimension_numbers = #tpu.dot_dimension_numbers<[1], [0], [0], [1], [0, 0, 1, 1], [], []>} : vector<1x128xf32>, vector<128x8xf32>, vector<1x8xf32> -> vector<1x8xf32>
    %c0_68 = arith.constant 0 : index
    %c0_69 = arith.constant 0 : index
    %78 = vector.load %arg6[%c0_68, %c0_69] : memref<128x8xf32, #tpu.memory_space<vmem>>, vector<128x8xf32>
    %cst_70 = arith.constant dense<0.000000e+00> : vector<1x8xf32>
    %79 = tpu.matmul %75, %78, %cst_70 {dimension_numbers = #tpu.dot_dimension_numbers<[1], [0], [0], [1], [0, 0, 1, 1], [], []>} : vector<1x128xf32>, vector<128x8xf32>, vector<1x8xf32> -> vector<1x8xf32>
    %cst_71 = arith.constant 9.765625E-4 : f32
    %80 = vector.broadcast %cst_71 : f32 to vector<1x8xf32>
    %81 = arith.mulf %77, %80 : vector<1x8xf32>
    %cst_72 = arith.constant 9.765625E-4 : f32
    %82 = vector.broadcast %cst_72 : f32 to vector<1x8xf32>
    %83 = arith.mulf %79, %82 : vector<1x8xf32>
    %84 = arith.mulf %81, %81 : vector<1x8xf32>
    %85 = arith.subf %83, %84 : vector<1x8xf32>
    %cst_73 = arith.constant 0.000000e+00 : f32
    %86 = vector.broadcast %cst_73 : f32 to vector<1x8xf32>
    %87 = arith.maximumf %85, %86 : vector<1x8xf32>
    %cst_74 = arith.constant 9.99999974E-6 : f32
    %88 = vector.broadcast %cst_74 : f32 to vector<1x8xf32>
    %89 = arith.addf %87, %88 : vector<1x8xf32>
    %90 = math.rsqrt %89 : vector<1x8xf32>
    %c0_75 = arith.constant 0 : index
    %c0_76 = arith.constant 0 : index
    %91 = vector.load %arg7[%c0_75, %c0_76] : memref<8x128xf32, #tpu.memory_space<vmem>>, vector<8x128xf32>
    %cst_77 = arith.constant dense<0.000000e+00> : vector<1x128xf32>
    %92 = tpu.matmul %81, %91, %cst_77 {dimension_numbers = #tpu.dot_dimension_numbers<[1], [0], [0], [1], [0, 0, 1, 1], [], []>} : vector<1x8xf32>, vector<8x128xf32>, vector<1x128xf32> -> vector<1x128xf32>
    %c0_78 = arith.constant 0 : index
    %c0_79 = arith.constant 0 : index
    %93 = vector.load %arg7[%c0_78, %c0_79] : memref<8x128xf32, #tpu.memory_space<vmem>>, vector<8x128xf32>
    %cst_80 = arith.constant dense<0.000000e+00> : vector<1x128xf32>
    %94 = tpu.matmul %90, %93, %cst_80 {dimension_numbers = #tpu.dot_dimension_numbers<[1], [0], [0], [1], [0, 0, 1, 1], [], []>} : vector<1x8xf32>, vector<8x128xf32>, vector<1x128xf32> -> vector<1x128xf32>
    %c0_81 = arith.constant 0 : index
    %c0_82 = arith.constant 0 : index
    %95 = vector.load %arg4[%c0_81, %c0_82] : memref<1x128xf32, #tpu.memory_space<vmem>>, vector<1x128xf32>
    %96 = arith.mulf %94, %95 : vector<1x128xf32>
    %c0_83 = arith.constant 0 : index
    %c0_84 = arith.constant 0 : index
    %97 = vector.load %arg5[%c0_83, %c0_84] : memref<1x128xf32, #tpu.memory_space<vmem>>, vector<1x128xf32>
    %98 = arith.mulf %92, %96 : vector<1x128xf32>
    %99 = arith.subf %97, %98 : vector<1x128xf32>
    %100 = vector.broadcast %96 : vector<1x128xf32> to vector<64x128xf32>
    %101 = arith.mulf %70, %100 : vector<64x128xf32>
    %102 = vector.broadcast %99 : vector<1x128xf32> to vector<64x128xf32>
    %103 = arith.addf %101, %102 : vector<64x128xf32>
    %cst_85 = arith.constant 0.000000e+00 : f32
    %104 = vector.broadcast %cst_85 : f32 to vector<64x128xf32>
    %105 = arith.maximumf %103, %104 : vector<64x128xf32>
    %106 = vector.shape_cast %105 : vector<64x128xf32> to vector<8x8x128xf32>
    %107 = arith.truncf %106 : vector<8x8x128xf32> to vector<8x8x128xbf16>
    %c0_86 = arith.constant 0 : index
    %c0_87 = arith.constant 0 : index
    %c0_88 = arith.constant 0 : index
    %c0_89 = arith.constant 0 : index
    %108 = vector.load %arg8[%c0_86, %c0_87, %c0_88, %c0_89] : memref<1x8x8x128xbf16, #tpu.memory_space<vmem>>, vector<1x8x8x128xbf16>
    %109 = vector.shape_cast %108 : vector<1x8x8x128xbf16> to vector<8x8x128xbf16>
    %110 = vector.shape_cast %107 : vector<8x8x128xbf16> to vector<1x8x8x128xbf16>
    tpu.vector_store %arg8[%c0_86, %c0_87, %c0_88, %c0_89], %110 {strides = array<i32>} : memref<1x8x8x128xbf16, #tpu.memory_space<vmem>>, vector<1x8x8x128xbf16>,
    return
  }
  func.func @transform_0(%arg0: i32) -> (i32, i32, i32, i32) {
    %c0_i32 = arith.constant 0 : i32
    %c0_i32_0 = arith.constant 0 : i32
    %c0_i32_1 = arith.constant 0 : i32
    %c0_i32_2 = arith.constant 0 : i32
    return %arg0, %c0_i32, %c0_i32_0, %c0_i32_1 : i32, i32, i32, i32
  }
  func.func @transform_1(%arg0: i32) -> (i32, i32, i32) {
    %c0_i32 = arith.constant 0 : i32
    %c0_i32_0 = arith.constant 0 : i32
    %c0_i32_1 = arith.constant 0 : i32
    %c0_i32_2 = arith.constant 0 : i32
    return %c0_i32, %c0_i32_0, %c0_i32_1 : i32, i32, i32
  }
  func.func @transform_2(%arg0: i32) -> (i32, i32) {
    %c0_i32 = arith.constant 0 : i32
    %c0_i32_0 = arith.constant 0 : i32
    %c0_i32_1 = arith.constant 0 : i32
    return %c0_i32, %c0_i32_0 : i32, i32
  }
  func.func @transform_3(%arg0: i32) -> (i32, i32) {
    %c0_i32 = arith.constant 0 : i32
    %c0_i32_0 = arith.constant 0 : i32
    %c0_i32_1 = arith.constant 0 : i32
    return %c0_i32, %c0_i32_0 : i32, i32
  }
  func.func @transform_4(%arg0: i32) -> (i32, i32) {
    %c0_i32 = arith.constant 0 : i32
    %c0_i32_0 = arith.constant 0 : i32
    %c0_i32_1 = arith.constant 0 : i32
    return %c0_i32, %c0_i32_0 : i32, i32
  }
  func.func @transform_5(%arg0: i32) -> (i32, i32) {
    %c0_i32 = arith.constant 0 : i32
    %c0_i32_0 = arith.constant 0 : i32
    %c0_i32_1 = arith.constant 0 : i32
    return %c0_i32, %c0_i32_0 : i32, i32
  }
  func.func @transform_6(%arg0: i32) -> (i32, i32) {
    %c0_i32 = arith.constant 0 : i32
    %c0_i32_0 = arith.constant 0 : i32
    %c0_i32_1 = arith.constant 0 : i32
    return %c0_i32, %c0_i32_0 : i32, i32
  }
  func.func @transform_7(%arg0: i32) -> (i32, i32, i32, i32) {
    %c0_i32 = arith.constant 0 : i32
    %c0_i32_0 = arith.constant 0 : i32
    %c0_i32_1 = arith.constant 0 : i32
    %c0_i32_2 = arith.constant 0 : i32
    return %arg0, %c0_i32, %c0_i32_0, %c0_i32_1 : i32, i32, i32, i32
  }
}

module attributes {stable_mosaic.version = 11 : i64} {
  func.func @_conv_gn_relu_kernel(%arg0: i32, %arg1: memref<1x10x10x160xbf16, #tpu.memory_space<vmem>>, %arg2: memref<9x160x128xbf16, #tpu.memory_space<vmem>>, %arg3: memref<1x128xf32, #tpu.memory_space<vmem>>, %arg4: memref<1x128xf32, #tpu.memory_space<vmem>>, %arg5: memref<1x128xf32, #tpu.memory_space<vmem>>, %arg6: memref<128x8xf32, #tpu.memory_space<vmem>>, %arg7: memref<8x128xf32, #tpu.memory_space<vmem>>, %arg8: memref<1x8x8x128xf32, #tpu.memory_space<vmem>>, %arg9: memref<10x10x160xf32, #tpu.memory_space<vmem>>) attributes {dimension_semantics = [#tpu.dimension_semantics<parallel>], iteration_bounds = array<i64: 2>, scalar_prefetch = 0 : i64, scratch_operands = 1 : i64, tpu.core_type = #tpu.core_type<tc>, window_params = [{transform_indices = @transform_0, window_bounds = array<i64: 1, 10, 10, 160>}, {pipeline_mode = #tpu.pipeline_mode<synchronous>, transform_indices = @transform_1, window_bounds = array<i64: 9, 160, 128>}, {pipeline_mode = #tpu.pipeline_mode<synchronous>, transform_indices = @transform_2, window_bounds = array<i64: 1, 128>}, {pipeline_mode = #tpu.pipeline_mode<synchronous>, transform_indices = @transform_3, window_bounds = array<i64: 1, 128>}, {pipeline_mode = #tpu.pipeline_mode<synchronous>, transform_indices = @transform_4, window_bounds = array<i64: 1, 128>}, {pipeline_mode = #tpu.pipeline_mode<synchronous>, transform_indices = @transform_5, window_bounds = array<i64: 128, 8>}, {pipeline_mode = #tpu.pipeline_mode<synchronous>, transform_indices = @transform_6, window_bounds = array<i64: 8, 128>}, {transform_indices = @transform_7, window_bounds = array<i64: 1, 8, 8, 128>}]} {
    %c0 = arith.constant 0 : index
    %c0_0 = arith.constant 0 : index
    %c0_1 = arith.constant 0 : index
    %c0_2 = arith.constant 0 : index
    %0 = vector.load %arg1[%c0, %c0_0, %c0_1, %c0_2] : memref<1x10x10x160xbf16, #tpu.memory_space<vmem>>, vector<1x10x10x160xbf16>
    %1 = vector.shape_cast %0 : vector<1x10x10x160xbf16> to vector<10x10x160xbf16>
    %2 = arith.extf %1 : vector<10x10x160xbf16> to vector<10x10x160xf32>
    %c0_3 = arith.constant 0 : index
    %c0_4 = arith.constant 0 : index
    %c0_5 = arith.constant 0 : index
    %3 = vector.load %arg9[%c0_3, %c0_4, %c0_5] : memref<10x10x160xf32, #tpu.memory_space<vmem>>, vector<10x10x160xf32>
    tpu.vector_store %arg9[%c0_3, %c0_4, %c0_5], %2 {strides = array<i32>} : memref<10x10x160xf32, #tpu.memory_space<vmem>>, vector<10x10x160xf32>,
    %cst = arith.constant 0.000000e+00 : f32
    %4 = vector.broadcast %cst : f32 to vector<64x128xf32>
    %c0_6 = arith.constant 0 : index
    %c0_7 = arith.constant 0 : index
    %c0_8 = arith.constant 0 : index
    %5 = vector.load %arg9[%c0_6, %c0_7, %c0_8] : memref<10x10x160xf32, #tpu.memory_space<vmem>>, vector<8x8x160xf32>
    %6 = vector.shape_cast %5 : vector<8x8x160xf32> to vector<64x160xf32>
    %7 = arith.truncf %6 : vector<64x160xf32> to vector<64x160xbf16>
    %c0_9 = arith.constant 0 : index
    %c0_10 = arith.constant 0 : index
    %c0_11 = arith.constant 0 : index
    %8 = vector.load %arg2[%c0_9, %c0_10, %c0_11] : memref<9x160x128xbf16, #tpu.memory_space<vmem>>, vector<1x160x128xbf16>
    %9 = vector.shape_cast %8 : vector<1x160x128xbf16> to vector<160x128xbf16>
    %cst_12 = arith.constant dense<0.000000e+00> : vector<64x128xf32>
    %10 = tpu.matmul %7, %9, %cst_12 {dimension_numbers = #tpu.dot_dimension_numbers<[1], [0], [0], [1], [0, 0, 1, 1], [], []>} : vector<64x160xbf16>, vector<160x128xbf16>, vector<64x128xf32> -> vector<64x128xf32>
    %11 = arith.addf %4, %10 : vector<64x128xf32>
    %c0_13 = arith.constant 0 : index
    %c1 = arith.constant 1 : index
    %c0_14 = arith.constant 0 : index
    %12 = vector.load %arg9[%c0_13, %c1, %c0_14] : memref<10x10x160xf32, #tpu.memory_space<vmem>>, vector<8x8x160xf32>
    %13 = vector.shape_cast %12 : vector<8x8x160xf32> to vector<64x160xf32>
    %14 = arith.truncf %13 : vector<64x160xf32> to vector<64x160xbf16>
    %c1_15 = arith.constant 1 : index
    %c0_16 = arith.constant 0 : index
    %c0_17 = arith.constant 0 : index
    %15 = vector.load %arg2[%c1_15, %c0_16, %c0_17] : memref<9x160x128xbf16, #tpu.memory_space<vmem>>, vector<1x160x128xbf16>
    %16 = vector.shape_cast %15 : vector<1x160x128xbf16> to vector<160x128xbf16>
    %cst_18 = arith.constant dense<0.000000e+00> : vector<64x128xf32>
    %17 = tpu.matmul %14, %16, %cst_18 {dimension_numbers = #tpu.dot_dimension_numbers<[1], [0], [0], [1], [0, 0, 1, 1], [], []>} : vector<64x160xbf16>, vector<160x128xbf16>, vector<64x128xf32> -> vector<64x128xf32>
    %18 = arith.addf %11, %17 : vector<64x128xf32>
    %c0_19 = arith.constant 0 : index
    %c2 = arith.constant 2 : index
    %c0_20 = arith.constant 0 : index
    %19 = vector.load %arg9[%c0_19, %c2, %c0_20] : memref<10x10x160xf32, #tpu.memory_space<vmem>>, vector<8x8x160xf32>
    %20 = vector.shape_cast %19 : vector<8x8x160xf32> to vector<64x160xf32>
    %21 = arith.truncf %20 : vector<64x160xf32> to vector<64x160xbf16>
    %c2_21 = arith.constant 2 : index
    %c0_22 = arith.constant 0 : index
    %c0_23 = arith.constant 0 : index
    %22 = vector.load %arg2[%c2_21, %c0_22, %c0_23] : memref<9x160x128xbf16, #tpu.memory_space<vmem>>, vector<1x160x128xbf16>
    %23 = vector.shape_cast %22 : vector<1x160x128xbf16> to vector<160x128xbf16>
    %cst_24 = arith.constant dense<0.000000e+00> : vector<64x128xf32>
    %24 = tpu.matmul %21, %23, %cst_24 {dimension_numbers = #tpu.dot_dimension_numbers<[1], [0], [0], [1], [0, 0, 1, 1], [], []>} : vector<64x160xbf16>, vector<160x128xbf16>, vector<64x128xf32> -> vector<64x128xf32>
    %25 = arith.addf %18, %24 : vector<64x128xf32>
    %c1_25 = arith.constant 1 : index
    %c0_26 = arith.constant 0 : index
    %c0_27 = arith.constant 0 : index
    %26 = vector.load %arg9[%c1_25, %c0_26, %c0_27] : memref<10x10x160xf32, #tpu.memory_space<vmem>>, vector<8x8x160xf32>
    %27 = vector.shape_cast %26 : vector<8x8x160xf32> to vector<64x160xf32>
    %28 = arith.truncf %27 : vector<64x160xf32> to vector<64x160xbf16>
    %c3 = arith.constant 3 : index
    %c0_28 = arith.constant 0 : index
    %c0_29 = arith.constant 0 : index
    %29 = vector.load %arg2[%c3, %c0_28, %c0_29] : memref<9x160x128xbf16, #tpu.memory_space<vmem>>, vector<1x160x128xbf16>
    %30 = vector.shape_cast %29 : vector<1x160x128xbf16> to vector<160x128xbf16>
    %cst_30 = arith.constant dense<0.000000e+00> : vector<64x128xf32>
    %31 = tpu.matmul %28, %30, %cst_30 {dimension_numbers = #tpu.dot_dimension_numbers<[1], [0], [0], [1], [0, 0, 1, 1], [], []>} : vector<64x160xbf16>, vector<160x128xbf16>, vector<64x128xf32> -> vector<64x128xf32>
    %32 = arith.addf %25, %31 : vector<64x128xf32>
    %c1_31 = arith.constant 1 : index
    %c1_32 = arith.constant 1 : index
    %c0_33 = arith.constant 0 : index
    %33 = vector.load %arg9[%c1_31, %c1_32, %c0_33] : memref<10x10x160xf32, #tpu.memory_space<vmem>>, vector<8x8x160xf32>
    %34 = vector.shape_cast %33 : vector<8x8x160xf32> to vector<64x160xf32>
    %35 = arith.truncf %34 : vector<64x160xf32> to vector<64x160xbf16>
    %c4 = arith.constant 4 : index
    %c0_34 = arith.constant 0 : index
    %c0_35 = arith.constant 0 : index
    %36 = vector.load %arg2[%c4, %c0_34, %c0_35] : memref<9x160x128xbf16, #tpu.memory_space<vmem>>, vector<1x160x128xbf16>
    %37 = vector.shape_cast %36 : vector<1x160x128xbf16> to vector<160x128xbf16>
    %cst_36 = arith.constant dense<0.000000e+00> : vector<64x128xf32>
    %38 = tpu.matmul %35, %37, %cst_36 {dimension_numbers = #tpu.dot_dimension_numbers<[1], [0], [0], [1], [0, 0, 1, 1], [], []>} : vector<64x160xbf16>, vector<160x128xbf16>, vector<64x128xf32> -> vector<64x128xf32>
    %39 = arith.addf %32, %38 : vector<64x128xf32>
    %c1_37 = arith.constant 1 : index
    %c2_38 = arith.constant 2 : index
    %c0_39 = arith.constant 0 : index
    %40 = vector.load %arg9[%c1_37, %c2_38, %c0_39] : memref<10x10x160xf32, #tpu.memory_space<vmem>>, vector<8x8x160xf32>
    %41 = vector.shape_cast %40 : vector<8x8x160xf32> to vector<64x160xf32>
    %42 = arith.truncf %41 : vector<64x160xf32> to vector<64x160xbf16>
    %c5 = arith.constant 5 : index
    %c0_40 = arith.constant 0 : index
    %c0_41 = arith.constant 0 : index
    %43 = vector.load %arg2[%c5, %c0_40, %c0_41] : memref<9x160x128xbf16, #tpu.memory_space<vmem>>, vector<1x160x128xbf16>
    %44 = vector.shape_cast %43 : vector<1x160x128xbf16> to vector<160x128xbf16>
    %cst_42 = arith.constant dense<0.000000e+00> : vector<64x128xf32>
    %45 = tpu.matmul %42, %44, %cst_42 {dimension_numbers = #tpu.dot_dimension_numbers<[1], [0], [0], [1], [0, 0, 1, 1], [], []>} : vector<64x160xbf16>, vector<160x128xbf16>, vector<64x128xf32> -> vector<64x128xf32>
    %46 = arith.addf %39, %45 : vector<64x128xf32>
    %c2_43 = arith.constant 2 : index
    %c0_44 = arith.constant 0 : index
    %c0_45 = arith.constant 0 : index
    %47 = vector.load %arg9[%c2_43, %c0_44, %c0_45] : memref<10x10x160xf32, #tpu.memory_space<vmem>>, vector<8x8x160xf32>
    %48 = vector.shape_cast %47 : vector<8x8x160xf32> to vector<64x160xf32>
    %49 = arith.truncf %48 : vector<64x160xf32> to vector<64x160xbf16>
    %c6 = arith.constant 6 : index
    %c0_46 = arith.constant 0 : index
    %c0_47 = arith.constant 0 : index
    %50 = vector.load %arg2[%c6, %c0_46, %c0_47] : memref<9x160x128xbf16, #tpu.memory_space<vmem>>, vector<1x160x128xbf16>
    %51 = vector.shape_cast %50 : vector<1x160x128xbf16> to vector<160x128xbf16>
    %cst_48 = arith.constant dense<0.000000e+00> : vector<64x128xf32>
    %52 = tpu.matmul %49, %51, %cst_48 {dimension_numbers = #tpu.dot_dimension_numbers<[1], [0], [0], [1], [0, 0, 1, 1], [], []>} : vector<64x160xbf16>, vector<160x128xbf16>, vector<64x128xf32> -> vector<64x128xf32>
    %53 = arith.addf %46, %52 : vector<64x128xf32>
    %c2_49 = arith.constant 2 : index
    %c1_50 = arith.constant 1 : index
    %c0_51 = arith.constant 0 : index
    %54 = vector.load %arg9[%c2_49, %c1_50, %c0_51] : memref<10x10x160xf32, #tpu.memory_space<vmem>>, vector<8x8x160xf32>
    %55 = vector.shape_cast %54 : vector<8x8x160xf32> to vector<64x160xf32>
    %56 = arith.truncf %55 : vector<64x160xf32> to vector<64x160xbf16>
    %c7 = arith.constant 7 : index
    %c0_52 = arith.constant 0 : index
    %c0_53 = arith.constant 0 : index
    %57 = vector.load %arg2[%c7, %c0_52, %c0_53] : memref<9x160x128xbf16, #tpu.memory_space<vmem>>, vector<1x160x128xbf16>
    %58 = vector.shape_cast %57 : vector<1x160x128xbf16> to vector<160x128xbf16>
    %cst_54 = arith.constant dense<0.000000e+00> : vector<64x128xf32>
    %59 = tpu.matmul %56, %58, %cst_54 {dimension_numbers = #tpu.dot_dimension_numbers<[1], [0], [0], [1], [0, 0, 1, 1], [], []>} : vector<64x160xbf16>, vector<160x128xbf16>, vector<64x128xf32> -> vector<64x128xf32>
    %60 = arith.addf %53, %59 : vector<64x128xf32>
    %c2_55 = arith.constant 2 : index
    %c2_56 = arith.constant 2 : index
    %c0_57 = arith.constant 0 : index
    %61 = vector.load %arg9[%c2_55, %c2_56, %c0_57] : memref<10x10x160xf32, #tpu.memory_space<vmem>>, vector<8x8x160xf32>
    %62 = vector.shape_cast %61 : vector<8x8x160xf32> to vector<64x160xf32>
    %63 = arith.truncf %62 : vector<64x160xf32> to vector<64x160xbf16>
    %c8 = arith.constant 8 : index
    %c0_58 = arith.constant 0 : index
    %c0_59 = arith.constant 0 : index
    %64 = vector.load %arg2[%c8, %c0_58, %c0_59] : memref<9x160x128xbf16, #tpu.memory_space<vmem>>, vector<1x160x128xbf16>
    %65 = vector.shape_cast %64 : vector<1x160x128xbf16> to vector<160x128xbf16>
    %cst_60 = arith.constant dense<0.000000e+00> : vector<64x128xf32>
    %66 = tpu.matmul %63, %65, %cst_60 {dimension_numbers = #tpu.dot_dimension_numbers<[1], [0], [0], [1], [0, 0, 1, 1], [], []>} : vector<64x160xbf16>, vector<160x128xbf16>, vector<64x128xf32> -> vector<64x128xf32>
    %67 = arith.addf %60, %66 : vector<64x128xf32>
    %c0_61 = arith.constant 0 : index
    %c0_62 = arith.constant 0 : index
    %68 = vector.load %arg3[%c0_61, %c0_62] : memref<1x128xf32, #tpu.memory_space<vmem>>, vector<1x128xf32>
    %69 = vector.broadcast %68 : vector<1x128xf32> to vector<64x128xf32>
    %70 = arith.addf %67, %69 : vector<64x128xf32>
    %cst_63 = arith.constant dense<0.000000e+00> : vector<128xf32>
    %71 = vector.multi_reduction <add>, %70, %cst_63 [0] : vector<64x128xf32> to vector<128xf32>
    %72 = vector.shape_cast %71 : vector<128xf32> to vector<1x128xf32>
    %73 = arith.mulf %70, %70 : vector<64x128xf32>
    %cst_64 = arith.constant dense<0.000000e+00> : vector<128xf32>
    %74 = vector.multi_reduction <add>, %73, %cst_64 [0] : vector<64x128xf32> to vector<128xf32>
    %75 = vector.shape_cast %74 : vector<128xf32> to vector<1x128xf32>
    %c0_65 = arith.constant 0 : index
    %c0_66 = arith.constant 0 : index
    %76 = vector.load %arg6[%c0_65, %c0_66] : memref<128x8xf32, #tpu.memory_space<vmem>>, vector<128x8xf32>
    %cst_67 = arith.constant dense<0.000000e+00> : vector<1x8xf32>
    %77 = tpu.matmul %72, %76, %cst_67 {dimension_numbers = #tpu.dot_dimension_numbers<[1], [0], [0], [1], [0, 0, 1, 1], [], []>} : vector<1x128xf32>, vector<128x8xf32>, vector<1x8xf32> -> vector<1x8xf32>
    %c0_68 = arith.constant 0 : index
    %c0_69 = arith.constant 0 : index
    %78 = vector.load %arg6[%c0_68, %c0_69] : memref<128x8xf32, #tpu.memory_space<vmem>>, vector<128x8xf32>
    %cst_70 = arith.constant dense<0.000000e+00> : vector<1x8xf32>
    %79 = tpu.matmul %75, %78, %cst_70 {dimension_numbers = #tpu.dot_dimension_numbers<[1], [0], [0], [1], [0, 0, 1, 1], [], []>} : vector<1x128xf32>, vector<128x8xf32>, vector<1x8xf32> -> vector<1x8xf32>
    %cst_71 = arith.constant 9.765625E-4 : f32
    %80 = vector.broadcast %cst_71 : f32 to vector<1x8xf32>
    %81 = arith.mulf %77, %80 : vector<1x8xf32>
    %cst_72 = arith.constant 9.765625E-4 : f32
    %82 = vector.broadcast %cst_72 : f32 to vector<1x8xf32>
    %83 = arith.mulf %79, %82 : vector<1x8xf32>
    %84 = arith.mulf %81, %81 : vector<1x8xf32>
    %85 = arith.subf %83, %84 : vector<1x8xf32>
    %cst_73 = arith.constant 0.000000e+00 : f32
    %86 = vector.broadcast %cst_73 : f32 to vector<1x8xf32>
    %87 = arith.maximumf %85, %86 : vector<1x8xf32>
    %cst_74 = arith.constant 9.99999974E-6 : f32
    %88 = vector.broadcast %cst_74 : f32 to vector<1x8xf32>
    %89 = arith.addf %87, %88 : vector<1x8xf32>
    %90 = math.rsqrt %89 : vector<1x8xf32>
    %c0_75 = arith.constant 0 : index
    %c0_76 = arith.constant 0 : index
    %91 = vector.load %arg7[%c0_75, %c0_76] : memref<8x128xf32, #tpu.memory_space<vmem>>, vector<8x128xf32>
    %cst_77 = arith.constant dense<0.000000e+00> : vector<1x128xf32>
    %92 = tpu.matmul %81, %91, %cst_77 {dimension_numbers = #tpu.dot_dimension_numbers<[1], [0], [0], [1], [0, 0, 1, 1], [], []>} : vector<1x8xf32>, vector<8x128xf32>, vector<1x128xf32> -> vector<1x128xf32>
    %c0_78 = arith.constant 0 : index
    %c0_79 = arith.constant 0 : index
    %93 = vector.load %arg7[%c0_78, %c0_79] : memref<8x128xf32, #tpu.memory_space<vmem>>, vector<8x128xf32>
    %cst_80 = arith.constant dense<0.000000e+00> : vector<1x128xf32>
    %94 = tpu.matmul %90, %93, %cst_80 {dimension_numbers = #tpu.dot_dimension_numbers<[1], [0], [0], [1], [0, 0, 1, 1], [], []>} : vector<1x8xf32>, vector<8x128xf32>, vector<1x128xf32> -> vector<1x128xf32>
    %c0_81 = arith.constant 0 : index
    %c0_82 = arith.constant 0 : index
    %95 = vector.load %arg4[%c0_81, %c0_82] : memref<1x128xf32, #tpu.memory_space<vmem>>, vector<1x128xf32>
    %96 = arith.mulf %94, %95 : vector<1x128xf32>
    %c0_83 = arith.constant 0 : index
    %c0_84 = arith.constant 0 : index
    %97 = vector.load %arg5[%c0_83, %c0_84] : memref<1x128xf32, #tpu.memory_space<vmem>>, vector<1x128xf32>
    %98 = arith.mulf %92, %96 : vector<1x128xf32>
    %99 = arith.subf %97, %98 : vector<1x128xf32>
    %100 = vector.broadcast %96 : vector<1x128xf32> to vector<64x128xf32>
    %101 = arith.mulf %70, %100 : vector<64x128xf32>
    %102 = vector.broadcast %99 : vector<1x128xf32> to vector<64x128xf32>
    %103 = arith.addf %101, %102 : vector<64x128xf32>
    %cst_85 = arith.constant 0.000000e+00 : f32
    %104 = vector.broadcast %cst_85 : f32 to vector<64x128xf32>
    %105 = arith.maximumf %103, %104 : vector<64x128xf32>
    %106 = vector.shape_cast %105 : vector<64x128xf32> to vector<8x8x128xf32>
    %c0_86 = arith.constant 0 : index
    %c0_87 = arith.constant 0 : index
    %c0_88 = arith.constant 0 : index
    %c0_89 = arith.constant 0 : index
    %107 = vector.load %arg8[%c0_86, %c0_87, %c0_88, %c0_89] : memref<1x8x8x128xf32, #tpu.memory_space<vmem>>, vector<1x8x8x128xf32>
    %108 = vector.shape_cast %107 : vector<1x8x8x128xf32> to vector<8x8x128xf32>
    %109 = vector.shape_cast %106 : vector<8x8x128xf32> to vector<1x8x8x128xf32>
    tpu.vector_store %arg8[%c0_86, %c0_87, %c0_88, %c0_89], %109 {strides = array<i32>} : memref<1x8x8x128xf32, #tpu.memory_space<vmem>>, vector<1x8x8x128xf32>,
    return
  }
  func.func @transform_0(%arg0: i32) -> (i32, i32, i32, i32) {
    %c0_i32 = arith.constant 0 : i32
    %c0_i32_0 = arith.constant 0 : i32
    %c0_i32_1 = arith.constant 0 : i32
    %c0_i32_2 = arith.constant 0 : i32
    return %arg0, %c0_i32, %c0_i32_0, %c0_i32_1 : i32, i32, i32, i32
  }
  func.func @transform_1(%arg0: i32) -> (i32, i32, i32) {
    %c0_i32 = arith.constant 0 : i32
    %c0_i32_0 = arith.constant 0 : i32
    %c0_i32_1 = arith.constant 0 : i32
    %c0_i32_2 = arith.constant 0 : i32
    return %c0_i32, %c0_i32_0, %c0_i32_1 : i32, i32, i32
  }
  func.func @transform_2(%arg0: i32) -> (i32, i32) {
    %c0_i32 = arith.constant 0 : i32
    %c0_i32_0 = arith.constant 0 : i32
    %c0_i32_1 = arith.constant 0 : i32
    return %c0_i32, %c0_i32_0 : i32, i32
  }
  func.func @transform_3(%arg0: i32) -> (i32, i32) {
    %c0_i32 = arith.constant 0 : i32
    %c0_i32_0 = arith.constant 0 : i32
    %c0_i32_1 = arith.constant 0 : i32
    return %c0_i32, %c0_i32_0 : i32, i32
  }
  func.func @transform_4(%arg0: i32) -> (i32, i32) {
    %c0_i32 = arith.constant 0 : i32
    %c0_i32_0 = arith.constant 0 : i32
    %c0_i32_1 = arith.constant 0 : i32
    return %c0_i32, %c0_i32_0 : i32, i32
  }
  func.func @transform_5(%arg0: i32) -> (i32, i32) {
    %c0_i32 = arith.constant 0 : i32
    %c0_i32_0 = arith.constant 0 : i32
    %c0_i32_1 = arith.constant 0 : i32
    return %c0_i32, %c0_i32_0 : i32, i32
  }
  func.func @transform_6(%arg0: i32) -> (i32, i32) {
    %c0_i32 = arith.constant 0 : i32
    %c0_i32_0 = arith.constant 0 : i32
    %c0_i32_1 = arith.constant 0 : i32
    return %c0_i32, %c0_i32_0 : i32, i32
  }
  func.func @transform_7(%arg0: i32) -> (i32, i32, i32, i32) {
    %c0_i32 = arith.constant 0 : i32
    %c0_i32_0 = arith.constant 0 : i32
    %c0_i32_1 = arith.constant 0 : i32
    %c0_i32_2 = arith.constant 0 : i32
    return %arg0, %c0_i32, %c0_i32_0, %c0_i32_1 : i32, i32, i32, i32
  }
}

</mosaic_0001>

<llo_original>
// kernel: tile.26
$region0: #{tile.26}
  #allocation0 [shape = 's32[1]{0}', space=sflag, size = 0x4, scoped, tag = 'scoped memory for tile.26']
  %s0 = inlined_call_operand.vmem [shape: f32[16], index: 0, kind: input, shape index: {}]
  %s1 = inlined_call_operand.vmem [shape: f32[8,16], index: 1, kind: output, shape index: {}]
  // Predicated region
  $region2: #{tile.26} parent=0 // pred_check
    _
  $region3: #{tile.26} parent=0 // pred_check_branch
    %3 = sbr.rel (0) target = $region5
  $region4: #{tile.26} parent=0 // pred_region
    _
  $region5: #{tile.26} parent=0 // pred_fallthru
    _
  %v4 = vld [vmem:[%s0] ss:$0 sm:$0xff]
  %5 = vst [vmem:[%s1] sm:$0xff] %v4

// kernel: tile.27
$region0: #{tile.27}
  %s0 = inlined_call_operand.vmem [shape: f32[8,16], index: 0, kind: input, shape index: {}]
  %s1 = inlined_call_operand.vmem [shape: f32[1,128], index: 1, kind: output, shape index: {}]
  $region1: #{tile.27} parent=0
    #allocation0 [shape = 'u8[4096]{0}', space=vmem, size = 0x1000, scoped, tag = 'scoped mem for output reshape']
    %v2 = vld [vmem:[%s0] sm:$0x1]
    %vm3 = vcmask 130048
    %4 = vst.msk [vmem:[#allocation0] sm:$0x1] %vm3, %v2
    %s5 = scalar_lea.vmem %s0, 7
    %v6 = vld [vmem:[%s5] sm:$0x1]
    %7 = vrot.lane.b32.xlu0 %v6, 112
    %v8 = vpop.permute.xlu0 %7
    %vm9 = vcmask 1048448
    %10 = vst.msk [vmem:[#allocation0] sm:$0x1] %vm9, %v8
    %s11 = scalar_lea.vmem %s0, 6
    %v12 = vld [vmem:[%s11] sm:$0x1]
    %13 = vrot.lane.b32.xlu0 %v12, 96
    %v14 = vpop.permute.xlu0 %13
    %vm15 = vcmask 917248
    %16 = vst.msk [vmem:[#allocation0] sm:$0x1] %vm15, %v14
    %s17 = scalar_lea.vmem %s0, 5
    %v18 = vld [vmem:[%s17] sm:$0x1]
    %19 = vrot.lane.b32.xlu0 %v18, 80
    %v20 = vpop.permute.xlu0 %19
    %vm21 = vcmask 786048
    %22 = vst.msk [vmem:[#allocation0] sm:$0x1] %vm21, %v20
    %s23 = scalar_lea.vmem %s0, 4
    %v24 = vld [vmem:[%s23] sm:$0x1]
    %25 = vrot.lane.b32.xlu0 %v24, 64
    %v26 = vpop.permute.xlu0 %25
    %vm27 = vcmask 654848
    %28 = vst.msk [vmem:[#allocation0] sm:$0x1] %vm27, %v26
    %s29 = scalar_lea.vmem %s0, 3
    %v30 = vld [vmem:[%s29] sm:$0x1]
    %31 = vrot.lane.b32.xlu0 %v30, 48
    %v32 = vpop.permute.xlu0 %31
    %vm33 = vcmask 523648
    %34 = vst.msk [vmem:[#allocation0] sm:$0x1] %vm33, %v32
    %s35 = scalar_lea.vmem %s0, 2
    %v36 = vld [vmem:[%s35] sm:$0x1]
    %37 = vrot.lane.b32.xlu0 %v36, 32
    %v38 = vpop.permute.xlu0 %37
    %vm39 = vcmask 392448
    %40 = vst.msk [vmem:[#allocation0] sm:$0x1] %vm39, %v38
    %s41 = scalar_lea.vmem %s0, 1
    %v42 = vld [vmem:[%s41] sm:$0x1]
    %43 = vrot.lane.b32.xlu0 %v42, 16
    %v44 = vpop.permute.xlu0 %43
    %vm45 = vcmask 261248
    %46 = vst.msk [vmem:[#allocation0] sm:$0x1] %vm45, %v44
    %s48 = sshllo.u32 0, 1
    %v50 = vld [vmem:[#allocation0] sm:%s48]
    %s51 = sshllo.u32 0, 1
    %52 = vst [vmem:[%s1] sm:%s51] %v50

// kernel: _lambda_.2
$region0: #{_lambda_.2}
  #allocation0 [shape = 'u32[]', space=smem, size = 0x4, offset = 0x4, fixed_abs, tag = 'smem constant byte address 0x4 - core index']
  #allocation1 [shape = 'u32[144,128]{1,0:T(1,128)}', space=vmem, size = 0x12000, scoped, tag = 'internal scratch']
  #allocation2 [shape = 'f32[10,10,40]{2,1,0:T(8,128)}', space=vmem, size = 0x14000, scoped, tag = 'scratch operand']
  %s0 = inlined_call_operand.vmem [shape: bf16[2,10,10,40], index: 0, kind: input, shape index: {}]
  %s1 = inlined_call_operand.vmem [shape: bf16[9,40,128], index: 1, kind: input, shape index: {}]
  %s2 = inlined_call_operand.vmem [shape: f32[1,128], index: 2, kind: input, shape index: {}]
  %s3 = inlined_call_operand.vmem [shape: f32[1,128], index: 3, kind: input, shape index: {}]
  %s4 = inlined_call_operand.vmem [shape: f32[1,128], index: 4, kind: input, shape index: {}]
  %s5 = inlined_call_operand.vmem [shape: f32[128,8], index: 5, kind: input, shape index: {}]
  %s6 = inlined_call_operand.vmem [shape: f32[8,128], index: 6, kind: input, shape index: {}]
  %s7 = inlined_call_operand.vmem [shape: bf16[2,8,8,128], index: 7, kind: output, shape index: {}]
  %s8 = sld [smem:[#allocation0]]
  $region61: #{_lambda_.2} parent=0
    _
  %s10 = ssub.s32 1, %s8
  %s11 = scalar_select 0, %s10, %s8
  loop: start=0, step=1, limit=4
  $region2: #{_lambda_.2} parent=0 // loop_pre_header
    _
  $region3: #{_lambda_.2} parent=0 // loop_header
    %s13 = sphi 0, %s17
    %p14 = scmp.ge.s32.totalorder %s13, 4
    %s23 = sphi 0, %s25
    %s26 = sphi 0, %s23
    %s27 = sphi 0, %s26
    %s43 = sphi 0, %s27
    %s47 = sphi 0, %s47
    %s49 = sphi 0, %s47
    %s50 = sphi 0, %s49
    %s64 = sphi 0, %s50
    %s68 = sphi 0, %s68
    %s70 = sphi 0, %s68
    %s71 = sphi 0, %s70
    %s85 = sphi 0, %s71
    %s89 = sphi 0, %s89
    %s91 = sphi 0, %s89
    %s92 = sphi 0, %s91
    %s106 = sphi 0, %s92
    %s110 = sphi 0, %s110
    %s112 = sphi 0, %s110
    %s113 = sphi 0, %s112
    %s127 = sphi 0, %s113
    %s131 = sphi 0, %s131
    %s133 = sphi 0, %s131
    %s134 = sphi 0, %s133
    %s148 = sphi 0, %s134
    %s152 = sphi 0, %s152
    %s154 = sphi 0, %s152
    %s155 = sphi 0, %s154
    %s169 = sphi 0, %s155
    %s175 = sphi 0, %s177
    %s178 = sphi 0, %s175
    %s179 = sphi 0, %s178
    %s195 = sphi 0, %s179
  $region4: #{_lambda_.2} parent=0 // loop_header_branch
    %16 = sbr.rel (%p14) target = $region8
  $region5: #{_lambda_.2} parent=0 // loop_body
    %s18 = ssub.s32 %s13, 1
    %s19 = ssub.s32 %s13, 2
    %s20 = sadd.s32 %s13, 1
    %s21 = ssub.s32 %s13, %s20
    %p22 = scmp.eq.s32.totalorder %s21, 0
    %s24 = sadd.s32 %s23, 1
    %s25 = scalar_select %p22, %s23, %s24
    %p28 = pneg %p22
    %p29 = scmp.eq.s32.totalorder %s13, 1
    %p30 = por %p28, %p29
    %p31 = scmp.ne.s32.totalorder %s23, %s26
    %p32 = scmp.eq.s32.totalorder %s13, 0
    %p33 = por %p31, %p32
    %p34 = scmp.ne.s32.totalorder %s23, %s26
    %p35 = scmp.eq.s32.totalorder %s18, 1
    %p36 = por %p34, %p35
    %p37 = scmp.ne.s32.totalorder %s26, %s27
    %p38 = scmp.eq.s32.totalorder %s18, 0
    %p39 = por %p37, %p38
    %p40 = scmp.ne.s32.totalorder %s26, %s27
    %p41 = scmp.eq.s32.totalorder %s19, 1
    %p42 = por %p40, %p41
    %p44 = scmp.ne.s32.totalorder %s27, %s43
    %p45 = scmp.eq.s32.totalorder %s19, 0
    %p46 = por %p44, %p45
    %s48 = sadd.s32 %s47, 1
    %p51 = scmp.eq.s32.totalorder %s13, 1
    %p52 = scmp.ne.s32.totalorder %s47, %s49
    %p53 = scmp.eq.s32.totalorder %s13, 0
    %p54 = por %p52, %p53
    %p55 = scmp.ne.s32.totalorder %s47, %s49
    %p56 = scmp.eq.s32.totalorder %s18, 1
    %p57 = por %p55, %p56
    %p58 = scmp.ne.s32.totalorder %s49, %s50
    %p59 = scmp.eq.s32.totalorder %s18, 0
    %p60 = por %p58, %p59
    %p61 = scmp.ne.s32.totalorder %s49, %s50
    %p62 = scmp.eq.s32.totalorder %s19, 1
    %p63 = por %p61, %p62
    %p65 = scmp.ne.s32.totalorder %s50, %s64
    %p66 = scmp.eq.s32.totalorder %s19, 0
    %p67 = por %p65, %p66
    %s69 = sadd.s32 %s68, 1
    %p72 = scmp.eq.s32.totalorder %s13, 1
    %p73 = scmp.ne.s32.totalorder %s68, %s70
    %p74 = scmp.eq.s32.totalorder %s13, 0
    %p75 = por %p73, %p74
    %p76 = scmp.ne.s32.totalorder %s68, %s70
    %p77 = scmp.eq.s32.totalorder %s18, 1
    %p78 = por %p76, %p77
    %p79 = scmp.ne.s32.totalorder %s70, %s71
    %p80 = scmp.eq.s32.totalorder %s18, 0
    %p81 = por %p79, %p80
    %p82 = scmp.ne.s32.totalorder %s70, %s71
    %p83 = scmp.eq.s32.totalorder %s19, 1
    %p84 = por %p82, %p83
    %p86 = scmp.ne.s32.totalorder %s71, %s85
    %p87 = scmp.eq.s32.totalorder %s19, 0
    %p88 = por %p86, %p87
    %s90 = sadd.s32 %s89, 1
    %p93 = scmp.eq.s32.totalorder %s13, 1
    %p94 = scmp.ne.s32.totalorder %s89, %s91
    %p95 = scmp.eq.s32.totalorder %s13, 0
    %p96 = por %p94, %p95
    %p97 = scmp.ne.s32.totalorder %s89, %s91
    %p98 = scmp.eq.s32.totalorder %s18, 1
    %p99 = por %p97, %p98
    %p100 = scmp.ne.s32.totalorder %s91, %s92
    %p101 = scmp.eq.s32.totalorder %s18, 0
    %p102 = por %p100, %p101
    %p103 = scmp.ne.s32.totalorder %s91, %s92
    %p104 = scmp.eq.s32.totalorder %s19, 1
    %p105 = por %p103, %p104
    %p107 = scmp.ne.s32.totalorder %s92, %s106
    %p108 = scmp.eq.s32.totalorder %s19, 0
    %p109 = por %p107, %p108
    %s111 = sadd.s32 %s110, 1
    %p114 = scmp.eq.s32.totalorder %s13, 1
    %p115 = scmp.ne.s32.totalorder %s110, %s112
    %p116 = scmp.eq.s32.totalorder %s13, 0
    %p117 = por %p115, %p116
    %p118 = scmp.ne.s32.totalorder %s110, %s112
    %p119 = scmp.eq.s32.totalorder %s18, 1
    %p120 = por %p118, %p119
    %p121 = scmp.ne.s32.totalorder %s112, %s113
    %p122 = scmp.eq.s32.totalorder %s18, 0
    %p123 = por %p121, %p122
    %p124 = scmp.ne.s32.totalorder %s112, %s113
    %p125 = scmp.eq.s32.totalorder %s19, 1
    %p126 = por %p124, %p125
    %p128 = scmp.ne.s32.totalorder %s113, %s127
    %p129 = scmp.eq.s32.totalorder %s19, 0
    %p130 = por %p128, %p129
    %s132 = sadd.s32 %s131, 1
    %p135 = scmp.eq.s32.totalorder %s13, 1
    %p136 = scmp.ne.s32.totalorder %s131, %s133
    %p137 = scmp.eq.s32.totalorder %s13, 0
    %p138 = por %p136, %p137
    %p139 = scmp.ne.s32.totalorder %s131, %s133
    %p140 = scmp.eq.s32.totalorder %s18, 1
    %p141 = por %p139, %p140
    %p142 = scmp.ne.s32.totalorder %s133, %s134
    %p143 = scmp.eq.s32.totalorder %s18, 0
    %p144 = por %p142, %p143
    %p145 = scmp.ne.s32.totalorder %s133, %s134
    %p146 = scmp.eq.s32.totalorder %s19, 1
    %p147 = por %p145, %p146
    %p149 = scmp.ne.s32.totalorder %s134, %s148
    %p150 = scmp.eq.s32.totalorder %s19, 0
    %p151 = por %p149, %p150
    %s153 = sadd.s32 %s152, 1
    %p156 = scmp.eq.s32.totalorder %s13, 1
    %p157 = scmp.ne.s32.totalorder %s152, %s154
    %p158 = scmp.eq.s32.totalorder %s13, 0
    %p159 = por %p157, %p158
    %p160 = scmp.ne.s32.totalorder %s152, %s154
    %p161 = scmp.eq.s32.totalorder %s18, 1
    %p162 = por %p160, %p161
    %p163 = scmp.ne.s32.totalorder %s154, %s155
    %p164 = scmp.eq.s32.totalorder %s18, 0
    %p165 = por %p163, %p164
    %p166 = scmp.ne.s32.totalorder %s154, %s155
    %p167 = scmp.eq.s32.totalorder %s19, 1
    %p168 = por %p166, %p167
    %p170 = scmp.ne.s32.totalorder %s155, %s169
    %p171 = scmp.eq.s32.totalorder %s19, 0
    %p172 = por %p170, %p171
    %s173 = ssub.s32 %s13, %s20
    %p174 = scmp.eq.s32.totalorder %s173, 0
    %s176 = sadd.s32 %s175, 1
    %s177 = scalar_select %p174, %s175, %s176
    %p180 = pneg %p174
    %p181 = scmp.eq.s32.totalorder %s13, 1
    %p182 = por %p180, %p181
    %p183 = scmp.ne.s32.totalorder %s175, %s178
    %p184 = scmp.eq.s32.totalorder %s13, 0
    %p185 = por %p183, %p184
    %p186 = scmp.ne.s32.totalorder %s175, %s178
    %p187 = scmp.eq.s32.totalorder %s18, 1
    %p188 = por %p186, %p187
    %p189 = scmp.ne.s32.totalorder %s178, %s179
    %p190 = scmp.eq.s32.totalorder %s18, 0
    %p191 = por %p189, %p190
    %p192 = scmp.ne.s32.totalorder %s178, %s179
    %p193 = scmp.eq.s32.totalorder %s19, 1
    %p194 = por %p192, %p193
    %p196 = scmp.ne.s32.totalorder %s179, %s195
    %p197 = scmp.eq.s32.totalorder %s19, 0
    %p198 = por %p196, %p197
    %p199 = scmp.le.s32.totalorder 1, %s13
    %p200 = scmp.lt.s32.totalorder %s13, 3
    %p201 = pnand %p199, %p200
    %p202 = pneg %p201
    // Predicated region
    $region9: #{_lambda_.2} parent=5 // pred_check
      _
    $region10: #{_lambda_.2} parent=5 // pred_check_branch
      %204 = sbr.rel (%p201) target = $region12
    $region11: #{_lambda_.2} parent=5 // pred_region
      %s205 = ssub.s32 %s13, 1
      // Predicated region
      $region13: #{_lambda_.2} parent=11 // pred_check
        %p206 = pneg %p60
      $region14: #{_lambda_.2} parent=11 // pred_check_branch
        %208 = sbr.rel (%p206) target = $region16
      $region15: #{_lambda_.2} parent=11 // pred_region
        _
      $region16: #{_lambda_.2} parent=11 // pred_fallthru
        _
      // Predicated region
      $region17: #{_lambda_.2} parent=11 // pred_check
        %p209 = pneg %p81
      $region18: #{_lambda_.2} parent=11 // pred_check_branch
        %211 = sbr.rel (%p209) target = $region20
      $region19: #{_lambda_.2} parent=11 // pred_region
        _
      $region20: #{_lambda_.2} parent=11 // pred_fallthru
        _
      // Predicated region
      $region21: #{_lambda_.2} parent=11 // pred_check
        %p212 = pneg %p102
      $region22: #{_lambda_.2} parent=11 // pred_check_branch
        %214 = sbr.rel (%p212) target = $region24
      $region23: #{_lambda_.2} parent=11 // pred_region
        _
      $region24: #{_lambda_.2} parent=11 // pred_fallthru
        _
      // Predicated region
      $region25: #{_lambda_.2} parent=11 // pred_check
        %p215 = pneg %p123
      $region26: #{_lambda_.2} parent=11 // pred_check_branch
        %217 = sbr.rel (%p215) target = $region28
      $region27: #{_lambda_.2} parent=11 // pred_region
        _
      $region28: #{_lambda_.2} parent=11 // pred_fallthru
        _
      // Predicated region
      $region29: #{_lambda_.2} parent=11 // pred_check
        %p218 = pneg %p144
      $region30: #{_lambda_.2} parent=11 // pred_check_branch
        %220 = sbr.rel (%p218) target = $region32
      $region31: #{_lambda_.2} parent=11 // pred_region
        _
      $region32: #{_lambda_.2} parent=11 // pred_fallthru
        _
      // Predicated region
      $region33: #{_lambda_.2} parent=11 // pred_check
        %p221 = pneg %p165
      $region34: #{_lambda_.2} parent=11 // pred_check_branch
        %223 = sbr.rel (%p221) target = $region36
      $region35: #{_lambda_.2} parent=11 // pred_region
        _
      $region36: #{_lambda_.2} parent=11 // pred_fallthru
        _
    $region12: #{_lambda_.2} parent=5 // pred_fallthru
      _
    %p224 = scmp.lt.s32.totalorder %s13, 2
    // Predicated region
    $region37: #{_lambda_.2} parent=5 // pred_check
      %p225 = pneg %p224
    $region38: #{_lambda_.2} parent=5 // pred_check_branch
      %227 = sbr.rel (%p225) target = $region40
    $region39: #{_lambda_.2} parent=5 // pred_region
      // Predicated region
      $region41: #{_lambda_.2} parent=39 // pred_check
        %p228 = pneg %p33
      $region42: #{_lambda_.2} parent=39 // pred_check_branch
        %230 = sbr.rel (%p228) target = $region44
      $region43: #{_lambda_.2} parent=39 // pred_region
        %p231 = scmp.lt.s32.totalorder %s13, 1
        %s232 = scalar_select %p231, %s13, 1
        %s233 = smul.addr %s232, 20
        %s234 = smul.addr %s233, 4
        %s235 = scalar_lea.vmem %s0, %s234
      $region44: #{_lambda_.2} parent=39 // pred_fallthru
        _
    $region40: #{_lambda_.2} parent=5 // pred_fallthru
      _
    %p236 = scmp.le.s32.totalorder 1, %s13
    %p237 = scmp.lt.s32.totalorder %s13, 3
    %p238 = pnand %p236, %p237
    %p239 = pneg %p238
    // Predicated region
    $region45: #{_lambda_.2} parent=5 // pred_check
      _
    $region46: #{_lambda_.2} parent=5 // pred_check_branch
      %241 = sbr.rel (%p238) target = $region48
    $region47: #{_lambda_.2} parent=5 // pred_region
      %s242 = ssub.s32 %s13, 1
      %p243 = scmp.lt.s32.totalorder %s18, 1
      %s244 = scalar_select %p243, %s18, 1
      %s245 = smul.addr %s244, 20
      %s246 = smul.addr %s245, 4
      %s247 = scalar_lea.vmem %s0, %s246
      %p248 = pneg %p39
      %p249 = pneg %p36
      %p250 = pneg %p60
      %p251 = pneg %p57
      %p252 = pneg %p81
      %p253 = pneg %p78
      %p254 = pneg %p102
      %p255 = pneg %p99
      %p256 = pneg %p123
      %p257 = pneg %p120
      %p258 = pneg %p144
      %p259 = pneg %p141
      %p260 = pneg %p165
      %p261 = pneg %p162
      %p262 = pneg %p191
      %p263 = pneg %p188
      %p264 = scmp.lt.s32.totalorder %s18, 1
      %s265 = scalar_select %p264, %s18, 1
      %s266 = smul.addr %s265, 8
      %s267 = smul.addr %s266, 4
      %s268 = scalar_lea.vmem %s7, %s267
      %p269 = scmp.lt.s32.totalorder %s18, 1
      %s270 = scalar_select %p269, %s18, 1
      %s271 = smul.addr %s270, 20
      %s272 = smul.addr %s271, 4
      %s273 = scalar_lea.vmem %s0, %s272
      %p274 = scmp.lt.s32.totalorder %s18, 1
      %s275 = scalar_select %p274, %s18, 1
      %s276 = smul.addr %s275, 8
      %s277 = smul.addr %s276, 4
      %s278 = scalar_lea.vmem %s7, %s277
      %v280 = vld [vmem:[%s273] sm:$0xf]
      %v281 = vld [vmem:[%s273 + $0x4] sm:$0x1]
      %v282 = vld [vmem:[%s273 + $0x8] sm:$0xf]
      %v283 = vld [vmem:[%s273 + $0xc] sm:$0x1]
      %v284 = vld [vmem:[%s273 + $0x10] sm:$0xf]
      %v285 = vld [vmem:[%s273 + $0x14] sm:$0x1]
      %v286 = vld [vmem:[%s273 + $0x18] sm:$0xf]
      %v287 = vld [vmem:[%s273 + $0x1c] sm:$0x1]
      %v288 = vld [vmem:[%s273 + $0x20] sm:$0xf]
      %v289 = vld [vmem:[%s273 + $0x24] sm:$0x1]
      %v290 = vld [vmem:[%s273 + $0x28] sm:$0xf]
      %v291 = vld [vmem:[%s273 + $0x2c] sm:$0x1]
      %v292 = vld [vmem:[%s273 + $0x30] sm:$0xf]
      %v293 = vld [vmem:[%s273 + $0x34] sm:$0x1]
      %v294 = vld [vmem:[%s273 + $0x38] sm:$0xf]
      %v295 = vld [vmem:[%s273 + $0x3c] sm:$0x1]
      %v296 = vld [vmem:[%s273 + $0x40] sm:$0xf]
      %v297 = vld [vmem:[%s273 + $0x44] sm:$0x1]
      %v298 = vld [vmem:[%s273 + $0x48] sm:$0xf]
      %v299 = vld [vmem:[%s273 + $0x4c] sm:$0x1]
      %v300 = vunpack.c.l.bf16 %v280
      %v301 = vunpack.c.l.bf16 %v281
      %v302 = vunpack.c.l.bf16 %v282
      %v303 = vunpack.c.l.bf16 %v283
      %v304 = vunpack.c.l.bf16 %v284
      %v305 = vunpack.c.l.bf16 %v285
      %v306 = vunpack.c.l.bf16 %v286
      %v307 = vunpack.c.l.bf16 %v287
      %v308 = vunpack.c.l.bf16 %v288
      %v309 = vunpack.c.l.bf16 %v289
      %v310 = vunpack.c.l.bf16 %v290
      %v311 = vunpack.c.l.bf16 %v291
      %v312 = vunpack.c.l.bf16 %v292
      %v313 = vunpack.c.l.bf16 %v293
      %v314 = vunpack.c.l.bf16 %v294
      %v315 = vunpack.c.l.bf16 %v295
      %v316 = vunpack.c.l.bf16 %v296
      %v317 = vunpack.c.l.bf16 %v297
      %v318 = vunpack.c.l.bf16 %v298
      %v319 = vunpack.c.l.bf16 %v299
      %vm320 = vcmask 326656
      %321 = vst.msk [vmem:[#allocation2] sm:$0xff] %vm320, %v300
      %vm322 = vcmask 320512
      %323 = vst.msk [vmem:[#allocation2 + $0x8] sm:$0x3] %vm322, %v301
      %324 = vst.msk [vmem:[#allocation2 + $0x10] sm:$0xff] %vm320, %v302
      %325 = vst.msk [vmem:[#allocation2 + $0x18] sm:$0x3] %vm322, %v303
      %326 = vst.msk [vmem:[#allocation2 + $0x20] sm:$0xff] %vm320, %v304
      %327 = vst.msk [vmem:[#allocation2 + $0x28] sm:$0x3] %vm322, %v305
      %328 = vst.msk [vmem:[#allocation2 + $0x30] sm:$0xff] %vm320, %v306
      %329 = vst.msk [vmem:[#allocation2 + $0x38] sm:$0x3] %vm322, %v307
      %330 = vst.msk [vmem:[#allocation2 + $0x40] sm:$0xff] %vm320, %v308
      %331 = vst.msk [vmem:[#allocation2 + $0x48] sm:$0x3] %vm322, %v309
      %332 = vst.msk [vmem:[#allocation2 + $0x50] sm:$0xff] %vm320, %v310
      %333 = vst.msk [vmem:[#allocation2 + $0x58] sm:$0x3] %vm322, %v311
      %334 = vst.msk [vmem:[#allocation2 + $0x60] sm:$0xff] %vm320, %v312
      %335 = vst.msk [vmem:[#allocation2 + $0x68] sm:$0x3] %vm322, %v313
      %336 = vst.msk [vmem:[#allocation2 + $0x70] sm:$0xff] %vm320, %v314
      %337 = vst.msk [vmem:[#allocation2 + $0x78] sm:$0x3] %vm322, %v315
      %338 = vst.msk [vmem:[#allocation2 + $0x80] sm:$0xff] %vm320, %v316
      %339 = vst.msk [vmem:[#allocation2 + $0x88] sm:$0x3] %vm322, %v317
      %340 = vst.msk [vmem:[#allocation2 + $0x90] sm:$0xff] %vm320, %v318
      %341 = vst.msk [vmem:[#allocation2 + $0x98] sm:$0x3] %vm322, %v319
      %v342 = vld [vmem:[#allocation2] sm:$0xff]
      %v343 = vld [vmem:[#allocation2 + $0x10] sm:$0xff]
      %v344 = vld [vmem:[#allocation2 + $0x20] sm:$0xff]
      %v345 = vld [vmem:[#allocation2 + $0x30] sm:$0xff]
      %v346 = vld [vmem:[#allocation2 + $0x40] sm:$0xff]
      %v347 = vld [vmem:[#allocation2 + $0x50] sm:$0xff]
      %v348 = vld [vmem:[#allocation2 + $0x60] sm:$0xff]
      %v349 = vld [vmem:[#allocation2 + $0x70] sm:$0xff]
      %v350 = vpack.c.bf16 %v343, %v342
      %v351 = vpack.c.bf16 %v345, %v344
      %v352 = vpack.c.bf16 %v347, %v346
      %v353 = vpack.c.bf16 %v349, %v348
      %v354 = vld [vmem:[%s1] sm:$0xf]
      %v355 = vld [vmem:[%s1 + $0x4] sm:$0xf]
      %v356 = vld [vmem:[%s1 + $0x8] sm:$0xf]
      %v357 = vld [vmem:[%s1 + $0xc] sm:$0xf]
      %v358 = vld [vmem:[%s1 + $0x10] sm:$0xf]
      %v359 = vld [vmem:[#allocation2 + $0x1] sm:$0xff]
      %v360 = vld [vmem:[#allocation2 + $0x11] sm:$0xff]
      %v361 = vld [vmem:[#allocation2 + $0x21] sm:$0xff]
      %v362 = vld [vmem:[#allocation2 + $0x31] sm:$0xff]
      %v363 = vld [vmem:[#allocation2 + $0x41] sm:$0xff]
      %v364 = vld [vmem:[#allocation2 + $0x51] sm:$0xff]
      %v365 = vld [vmem:[#allocation2 + $0x61] sm:$0xff]
      %v366 = vld [vmem:[#allocation2 + $0x71] sm:$0xff]
      %v367 = vpack.c.bf16 %v360, %v359
      %v368 = vpack.c.bf16 %v362, %v361
      %v369 = vpack.c.bf16 %v364, %v363
      %v370 = vpack.c.bf16 %v366, %v365
      %s371 = scalar_lea.vmem %s1, 20
      %v372 = vld [vmem:[%s371] sm:$0xf]
      %v373 = vld [vmem:[%s371 + $0x4] sm:$0xf]
      %v374 = vld [vmem:[%s371 + $0x8] sm:$0xf]
      %v375 = vld [vmem:[%s371 + $0xc] sm:$0xf]
      %v376 = vld [vmem:[%s371 + $0x10] sm:$0xf]
      %v382 = vunpack.c.l.b16 %v372
      %v383 = vunpack.c.l.b16 %v373
      %v384 = vunpack.c.l.b16 %v374
      %v385 = vunpack.c.l.b16 %v375
      %v386 = vunpack.c.l.b16 %v376
      %v387 = vpack.c.b16 %v383, %v382
      %v388 = vpack.c.b16 %v385, %v384
      %v389 = vpack.c.b16 %v386, %v386
      %v393 = vsel %vm320, %v367, 0
      %v396 = vsel %vm320, %v368, 0
      %v399 = vsel %vm320, %v369, 0
      %v402 = vsel %vm320, %v370, 0
      %vm404 = vcmask 1043456
      %v406 = vsel %vm404, %v389, 0
      %408 = vmatprep.subr.bf16.mxu0 0
      %409 = vmatpush1.bf16.msra.mxu0 %v387
      %410 = vmatprep.subr.bf16.mxu0 0
      %411 = vmatpush1.bf16.msra.mxu0 %v388
      %412 = vmatprep.subr.bf16.mxu0 0
      %413 = vmatpush1.bf16.msra.mxu0 %v406
      %414 = vmatprep.subr.bf16.mxu0 0
      %415 = vmatpush1.bf16.msra.mxu0 0
      %416 = vmatprep.subr.bf16.mxu0 0
      %417 = vmatpush1.bf16.msra.mxu0 0
      %418 = vmatprep.subr.bf16.mxu0 0
      %419 = vmatpush1.bf16.msra.mxu0 0
      %420 = vmatprep.subr.bf16.mxu0 0
      %421 = vmatpush1.bf16.msra.mxu0 0
      %422 = vmatprep.subr.bf16.mxu0 0
      %423 = vmatpush1.bf16.msra.mxu0 0
      %424 = vmatprep.subr.bf16.mxu0 0
      %425 = vmatpush1.bf16.msra.mxu0 0
      %426 = vmatprep.subr.bf16.mxu0 0
      %427 = vmatpush1.bf16.msra.mxu0 0
      %428 = vmatprep.subr.bf16.mxu0 0
      %429 = vmatpush1.bf16.msra.mxu0 0
      %430 = vmatprep.subr.bf16.mxu0 0
      %431 = vmatpush1.bf16.msra.mxu0 0
      %432 = vmatprep.subr.bf16.mxu0 0
      %433 = vmatpush1.bf16.msra.mxu0 0
      %434 = vmatprep.subr.bf16.mxu0 0
      %435 = vmatpush1.bf16.msra.mxu0 0
      %436 = vmatprep.subr.bf16.mxu0 0
      %437 = vmatpush1.bf16.msra.mxu0 0
      %438 = vmatprep.subr.bf16.mxu0 0
      %439 = vmatpush1.bf16.msra.mxu0 0
      %440 = vmatprep.mubr.bf16.mxu0 0
      %441 = vmatmul.mubr.bf16.gmra.mrb[0].mxu0 %v393
      %v442 = vpop.f32.mrb[0].mxu0
      %v443 = vadd.f32 0.0, %v442
      %v444 = vpop.f32.mrb[0].mxu0
      %v445 = vpop.f32.mrb[0].mxu0
      %v446 = vadd.f32 0.0, %v445
      %v447 = vpop.f32.mrb[0].mxu0
      %448 = vmatprep.mubr.bf16.mxu0 0
      %449 = vmatmul.mubr.bf16.gmra.mrb[0].mxu0 %v396
      %v450 = vpop.f32.mrb[0].mxu0
      %v451 = vadd.f32 0.0, %v450
      %v452 = vpop.f32.mrb[0].mxu0
      %v453 = vpop.f32.mrb[0].mxu0
      %v454 = vadd.f32 0.0, %v453
      %v455 = vpop.f32.mrb[0].mxu0
      %456 = vmatprep.mubr.bf16.mxu0 0
      %457 = vmatmul.mubr.bf16.gmra.mrb[0].mxu0 %v399
      %v458 = vpop.f32.mrb[0].mxu0
      %v459 = vadd.f32 0.0, %v458
      %v460 = vpop.f32.mrb[0].mxu0
      %v461 = vpop.f32.mrb[0].mxu0
      %v462 = vadd.f32 0.0, %v461
      %v463 = vpop.f32.mrb[0].mxu0
      %464 = vmatprep.mubr.bf16.mxu0 0
      %465 = vmatmul.mubr.bf16.gmra.mrb[0].mxu0 %v402
      %v466 = vpop.f32.mrb[0].mxu0
      %v467 = vadd.f32 0.0, %v466
      %v468 = vpop.f32.mrb[0].mxu0
      %v469 = vpop.f32.mrb[0].mxu0
      %v470 = vadd.f32 0.0, %v469
      %v471 = vpop.f32.mrb[0].mxu0
      %472 = vdwg.mxu0
      %v478 = vunpack.c.l.b16 %v354
      %v479 = vunpack.c.l.b16 %v355
      %v480 = vunpack.c.l.b16 %v356
      %v481 = vunpack.c.l.b16 %v357
      %v482 = vunpack.c.l.b16 %v358
      %v483 = vpack.c.b16 %v479, %v478
      %v484 = vpack.c.b16 %v481, %v480
      %v485 = vpack.c.b16 %v482, %v482
      %v489 = vsel %vm320, %v350, 0
      %v492 = vsel %vm320, %v351, 0
      %v495 = vsel %vm320, %v352, 0
      %v498 = vsel %vm320, %v353, 0
      %v501 = vsel %vm404, %v485, 0
      %503 = vmatprep.subr.bf16.mxu0 0
      %504 = vmatpush1.bf16.msra.mxu0 %v483
      %505 = vmatprep.subr.bf16.mxu0 0
      %506 = vmatpush1.bf16.msra.mxu0 %v484
      %507 = vmatprep.subr.bf16.mxu0 0
      %508 = vmatpush1.bf16.msra.mxu0 %v501
      %509 = vmatprep.subr.bf16.mxu0 0
      %510 = vmatpush1.bf16.msra.mxu0 0
      %511 = vmatprep.subr.bf16.mxu0 0
      %512 = vmatpush1.bf16.msra.mxu0 0
      %513 = vmatprep.subr.bf16.mxu0 0
      %514 = vmatpush1.bf16.msra.mxu0 0
      %515 = vmatprep.subr.bf16.mxu0 0
      %516 = vmatpush1.bf16.msra.mxu0 0
      %517 = vmatprep.subr.bf16.mxu0 0
      %518 = vmatpush1.bf16.msra.mxu0 0
      %519 = vmatprep.subr.bf16.mxu0 0
      %520 = vmatpush1.bf16.msra.mxu0 0
      %521 = vmatprep.subr.bf16.mxu0 0
      %522 = vmatpush1.bf16.msra.mxu0 0
      %523 = vmatprep.subr.bf16.mxu0 0
      %524 = vmatpush1.bf16.msra.mxu0 0
      %525 = vmatprep.subr.bf16.mxu0 0
      %526 = vmatpush1.bf16.msra.mxu0 0
      %527 = vmatprep.subr.bf16.mxu0 0
      %528 = vmatpush1.bf16.msra.mxu0 0
      %529 = vmatprep.subr.bf16.mxu0 0
      %530 = vmatpush1.bf16.msra.mxu0 0
      %531 = vmatprep.subr.bf16.mxu0 0
      %532 = vmatpush1.bf16.msra.mxu0 0
      %533 = vmatprep.subr.bf16.mxu0 0
      %534 = vmatpush1.bf16.msra.mxu0 0
      %535 = vmatprep.mubr.bf16.mxu0 0
      %536 = vmatmul.mubr.bf16.gmra.mrb[0].mxu0 %v489
      %v537 = vpop.f32.mrb[0].mxu0
      %v538 = vadd.f32 %v443, %v537
      %v539 = vpop.f32.mrb[0].mxu0
      %v540 = vpop.f32.mrb[0].mxu0
      %v541 = vadd.f32 %v446, %v540
      %v542 = vpop.f32.mrb[0].mxu0
      %543 = vmatprep.mubr.bf16.mxu0 0
      %544 = vmatmul.mubr.bf16.gmra.mrb[0].mxu0 %v492
      %v545 = vpop.f32.mrb[0].mxu0
      %v546 = vadd.f32 %v451, %v545
      %v547 = vpop.f32.mrb[0].mxu0
      %v548 = vpop.f32.mrb[0].mxu0
      %v549 = vadd.f32 %v454, %v548
      %v550 = vpop.f32.mrb[0].mxu0
      %551 = vmatprep.mubr.bf16.mxu0 0
      %552 = vmatmul.mubr.bf16.gmra.mrb[0].mxu0 %v495
      %v553 = vpop.f32.mrb[0].mxu0
      %v554 = vadd.f32 %v459, %v553
      %v555 = vpop.f32.mrb[0].mxu0
      %v556 = vpop.f32.mrb[0].mxu0
      %v557 = vadd.f32 %v462, %v556
      %v558 = vpop.f32.mrb[0].mxu0
      %559 = vmatprep.mubr.bf16.mxu0 0
      %560 = vmatmul.mubr.bf16.gmra.mrb[0].mxu0 %v498
      %v561 = vpop.f32.mrb[0].mxu0
      %v562 = vadd.f32 %v467, %v561
      %v563 = vpop.f32.mrb[0].mxu0
      %v564 = vpop.f32.mrb[0].mxu0
      %v565 = vadd.f32 %v470, %v564
      %v566 = vpop.f32.mrb[0].mxu0
      %567 = vdwg.mxu0
      %v568 = vld [vmem:[#allocation2 + $0x2] sm:$0xff]
      %v569 = vld [vmem:[#allocation2 + $0x12] sm:$0xff]
      %v570 = vld [vmem:[#allocation2 + $0x22] sm:$0xff]
      %v571 = vld [vmem:[#allocation2 + $0x32] sm:$0xff]
      %v572 = vld [vmem:[#allocation2 + $0x42] sm:$0xff]
      %v573 = vld [vmem:[#allocation2 + $0x52] sm:$0xff]
      %v574 = vld [vmem:[#allocation2 + $0x62] sm:$0xff]
      %v575 = vld [vmem:[#allocation2 + $0x72] sm:$0xff]
      %v576 = vpack.c.bf16 %v569, %v568
      %v577 = vpack.c.bf16 %v571, %v570
      %v578 = vpack.c.bf16 %v573, %v572
      %v579 = vpack.c.bf16 %v575, %v574
      %s580 = scalar_lea.vmem %s1, 40
      %v581 = vld [vmem:[%s580] sm:$0xf]
      %v582 = vld [vmem:[%s580 + $0x4] sm:$0xf]
      %v583 = vld [vmem:[%s580 + $0x8] sm:$0xf]
      %v584 = vld [vmem:[%s580 + $0xc] sm:$0xf]
      %v585 = vld [vmem:[%s580 + $0x10] sm:$0xf]
      %v591 = vunpack.c.l.b16 %v581
      %v592 = vunpack.c.l.b16 %v582
      %v593 = vunpack.c.l.b16 %v583
      %v594 = vunpack.c.l.b16 %v584
      %v595 = vunpack.c.l.b16 %v585
      %v596 = vpack.c.b16 %v592, %v591
      %v597 = vpack.c.b16 %v594, %v593
      %v598 = vpack.c.b16 %v595, %v595
      %v602 = vsel %vm320, %v576, 0
      %v605 = vsel %vm320, %v577, 0
      %v608 = vsel %vm320, %v578, 0
      %v611 = vsel %vm320, %v579, 0
      %v614 = vsel %vm404, %v598, 0
      %616 = vmatprep.subr.bf16.mxu0 0
      %617 = vmatpush1.bf16.msra.mxu0 %v596
      %618 = vmatprep.subr.bf16.mxu0 0
      %619 = vmatpush1.bf16.msra.mxu0 %v597
      %620 = vmatprep.subr.bf16.mxu0 0
      %621 = vmatpush1.bf16.msra.mxu0 %v614
      %622 = vmatprep.subr.bf16.mxu0 0
      %623 = vmatpush1.bf16.msra.mxu0 0
      %624 = vmatprep.subr.bf16.mxu0 0
      %625 = vmatpush1.bf16.msra.mxu0 0
      %626 = vmatprep.subr.bf16.mxu0 0
      %627 = vmatpush1.bf16.msra.mxu0 0
      %628 = vmatprep.subr.bf16.mxu0 0
      %629 = vmatpush1.bf16.msra.mxu0 0
      %630 = vmatprep.subr.bf16.mxu0 0
      %631 = vmatpush1.bf16.msra.mxu0 0
      %632 = vmatprep.subr.bf16.mxu0 0
      %633 = vmatpush1.bf16.msra.mxu0 0
      %634 = vmatprep.subr.bf16.mxu0 0
      %635 = vmatpush1.bf16.msra.mxu0 0
      %636 = vmatprep.subr.bf16.mxu0 0
      %637 = vmatpush1.bf16.msra.mxu0 0
      %638 = vmatprep.subr.bf16.mxu0 0
      %639 = vmatpush1.bf16.msra.mxu0 0
      %640 = vmatprep.subr.bf16.mxu0 0
      %641 = vmatpush1.bf16.msra.mxu0 0
      %642 = vmatprep.subr.bf16.mxu0 0
      %643 = vmatpush1.bf16.msra.mxu0 0
      %644 = vmatprep.subr.bf16.mxu0 0
      %645 = vmatpush1.bf16.msra.mxu0 0
      %646 = vmatprep.subr.bf16.mxu0 0
      %647 = vmatpush1.bf16.msra.mxu0 0
      %648 = vmatprep.mubr.bf16.mxu0 0
      %649 = vmatmul.mubr.bf16.gmra.mrb[0].mxu0 %v602
      %v650 = vpop.f32.mrb[0].mxu0
      %v651 = vadd.f32 0.0, %v650
      %v652 = vpop.f32.mrb[0].mxu0
      %v653 = vpop.f32.mrb[0].mxu0
      %v654 = vadd.f32 0.0, %v653
      %v655 = vpop.f32.mrb[0].mxu0
      %656 = vmatprep.mubr.bf16.mxu0 0
      %657 = vmatmul.mubr.bf16.gmra.mrb[0].mxu0 %v605
      %v658 = vpop.f32.mrb[0].mxu0
      %v659 = vadd.f32 0.0, %v658
      %v660 = vpop.f32.mrb[0].mxu0
      %v661 = vpop.f32.mrb[0].mxu0
      %v662 = vadd.f32 0.0, %v661
      %v663 = vpop.f32.mrb[0].mxu0
      %664 = vmatprep.mubr.bf16.mxu0 0
      %665 = vmatmul.mubr.bf16.gmra.mrb[0].mxu0 %v608
      %v666 = vpop.f32.mrb[0].mxu0
      %v667 = vadd.f32 0.0, %v666
      %v668 = vpop.f32.mrb[0].mxu0
      %v669 = vpop.f32.mrb[0].mxu0
      %v670 = vadd.f32 0.0, %v669
      %v671 = vpop.f32.mrb[0].mxu0
      %672 = vmatprep.mubr.bf16.mxu0 0
      %673 = vmatmul.mubr.bf16.gmra.mrb[0].mxu0 %v611
      %v674 = vpop.f32.mrb[0].mxu0
      %v675 = vadd.f32 0.0, %v674
      %v676 = vpop.f32.mrb[0].mxu0
      %v677 = vpop.f32.mrb[0].mxu0
      %v678 = vadd.f32 0.0, %v677
      %v679 = vpop.f32.mrb[0].mxu0
      %680 = vdwg.mxu0
      %v681 = vadd.f32 %v538, %v651
      %v682 = vadd.f32 %v541, %v654
      %v683 = vadd.f32 %v546, %v659
      %v684 = vadd.f32 %v549, %v662
      %v685 = vadd.f32 %v554, %v667
      %v686 = vadd.f32 %v557, %v670
      %v687 = vadd.f32 %v562, %v675
      %v688 = vadd.f32 %v565, %v678
      %s689 = scalar_lea.vmem [#allocation2], 16
      %v690 = vld [vmem:[%s689] sm:$0xff]
      %v691 = vld [vmem:[%s689 + $0x10] sm:$0xff]
      %v692 = vld [vmem:[%s689 + $0x20] sm:$0xff]
      %v693 = vld [vmem:[%s689 + $0x30] sm:$0xff]
      %v694 = vld [vmem:[%s689 + $0x40] sm:$0xff]
      %v695 = vld [vmem:[%s689 + $0x50] sm:$0xff]
      %v696 = vld [vmem:[%s689 + $0x60] sm:$0xff]
      %v697 = vld [vmem:[%s689 + $0x70] sm:$0xff]
      %v698 = vpack.c.bf16 %v691, %v690
      %v699 = vpack.c.bf16 %v693, %v692
      %v700 = vpack.c.bf16 %v695, %v694
      %v701 = vpack.c.bf16 %v697, %v696
      %s702 = scalar_lea.vmem %s1, 60
      %v703 = vld [vmem:[%s702] sm:$0xf]
      %v704 = vld [vmem:[%s702 + $0x4] sm:$0xf]
      %v705 = vld [vmem:[%s702 + $0x8] sm:$0xf]
      %v706 = vld [vmem:[%s702 + $0xc] sm:$0xf]
      %v707 = vld [vmem:[%s702 + $0x10] sm:$0xf]
      %v713 = vunpack.c.l.b16 %v703
      %v714 = vunpack.c.l.b16 %v704
      %v715 = vunpack.c.l.b16 %v705
      %v716 = vunpack.c.l.b16 %v706
      %v717 = vunpack.c.l.b16 %v707
      %v718 = vpack.c.b16 %v714, %v713
      %v719 = vpack.c.b16 %v716, %v715
      %v720 = vpack.c.b16 %v717, %v717
      %v724 = vsel %vm320, %v698, 0
      %v727 = vsel %vm320, %v699, 0
      %v730 = vsel %vm320, %v700, 0
      %v733 = vsel %vm320, %v701, 0
      %v736 = vsel %vm404, %v720, 0
      %738 = vmatprep.subr.bf16.mxu0 0
      %739 = vmatpush1.bf16.msra.mxu0 %v718
      %740 = vmatprep.subr.bf16.mxu0 0
      %741 = vmatpush1.bf16.msra.mxu0 %v719
      %742 = vmatprep.subr.bf16.mxu0 0
      %743 = vmatpush1.bf16.msra.mxu0 %v736
      %744 = vmatprep.subr.bf16.mxu0 0
      %745 = vmatpush1.bf16.msra.mxu0 0
      %746 = vmatprep.subr.bf16.mxu0 0
      %747 = vmatpush1.bf16.msra.mxu0 0
      %748 = vmatprep.subr.bf16.mxu0 0
      %749 = vmatpush1.bf16.msra.mxu0 0
      %750 = vmatprep.subr.bf16.mxu0 0
      %751 = vmatpush1.bf16.msra.mxu0 0
      %752 = vmatprep.subr.bf16.mxu0 0
      %753 = vmatpush1.bf16.msra.mxu0 0
      %754 = vmatprep.subr.bf16.mxu0 0
      %755 = vmatpush1.bf16.msra.mxu0 0
      %756 = vmatprep.subr.bf16.mxu0 0
      %757 = vmatpush1.bf16.msra.mxu0 0
      %758 = vmatprep.subr.bf16.mxu0 0
      %759 = vmatpush1.bf16.msra.mxu0 0
      %760 = vmatprep.subr.bf16.mxu0 0
      %761 = vmatpush1.bf16.msra.mxu0 0
      %762 = vmatprep.subr.bf16.mxu0 0
      %763 = vmatpush1.bf16.msra.mxu0 0
      %764 = vmatprep.subr.bf16.mxu0 0
      %765 = vmatpush1.bf16.msra.mxu0 0
      %766 = vmatprep.subr.bf16.mxu0 0
      %767 = vmatpush1.bf16.msra.mxu0 0
      %768 = vmatprep.subr.bf16.mxu0 0
      %769 = vmatpush1.bf16.msra.mxu0 0
      %770 = vmatprep.mubr.bf16.mxu0 0
      %771 = vmatmul.mubr.bf16.gmra.mrb[0].mxu0 %v724
      %v772 = vpop.f32.mrb[0].mxu0
      %v773 = vadd.f32 0.0, %v772
      %v774 = vpop.f32.mrb[0].mxu0
      %v775 = vpop.f32.mrb[0].mxu0
      %v776 = vadd.f32 0.0, %v775
      %v777 = vpop.f32.mrb[0].mxu0
      %778 = vmatprep.mubr.bf16.mxu0 0
      %779 = vmatmul.mubr.bf16.gmra.mrb[0].mxu0 %v727
      %v780 = vpop.f32.mrb[0].mxu0
      %v781 = vadd.f32 0.0, %v780
      %v782 = vpop.f32.mrb[0].mxu0
      %v783 = vpop.f32.mrb[0].mxu0
      %v784 = vadd.f32 0.0, %v783
      %v785 = vpop.f32.mrb[0].mxu0
      %786 = vmatprep.mubr.bf16.mxu0 0
      %787 = vmatmul.mubr.bf16.gmra.mrb[0].mxu0 %v730
      %v788 = vpop.f32.mrb[0].mxu0
      %v789 = vadd.f32 0.0, %v788
      %v790 = vpop.f32.mrb[0].mxu0
      %v791 = vpop.f32.mrb[0].mxu0
      %v792 = vadd.f32 0.0, %v791
      %v793 = vpop.f32.mrb[0].mxu0
      %794 = vmatprep.mubr.bf16.mxu0 0
      %795 = vmatmul.mubr.bf16.gmra.mrb[0].mxu0 %v733
      %v796 = vpop.f32.mrb[0].mxu0
      %v797 = vadd.f32 0.0, %v796
      %v798 = vpop.f32.mrb[0].mxu0
      %v799 = vpop.f32.mrb[0].mxu0
      %v800 = vadd.f32 0.0, %v799
      %v801 = vpop.f32.mrb[0].mxu0
      %802 = vdwg.mxu0
      %v803 = vadd.f32 %v681, %v773
      %v804 = vadd.f32 %v682, %v776
      %v805 = vadd.f32 %v683, %v781
      %v806 = vadd.f32 %v684, %v784
      %v807 = vadd.f32 %v685, %v789
      %v808 = vadd.f32 %v686, %v792
      %v809 = vadd.f32 %v687, %v797
      %v810 = vadd.f32 %v688, %v800
      %v811 = vld [vmem:[%s689 + $0x1] sm:$0xff]
      %v812 = vld [vmem:[%s689 + $0x11] sm:$0xff]
      %v813 = vld [vmem:[%s689 + $0x21] sm:$0xff]
      %v814 = vld [vmem:[%s689 + $0x31] sm:$0xff]
      %v815 = vld [vmem:[%s689 + $0x41] sm:$0xff]
      %v816 = vld [vmem:[%s689 + $0x51] sm:$0xff]
      %v817 = vld [vmem:[%s689 + $0x61] sm:$0xff]
      %v818 = vld [vmem:[%s689 + $0x71] sm:$0xff]
      %v819 = vpack.c.bf16 %v812, %v811
      %v820 = vpack.c.bf16 %v814, %v813
      %v821 = vpack.c.bf16 %v816, %v815
      %v822 = vpack.c.bf16 %v818, %v817
      %s823 = scalar_lea.vmem %s1, 80
      %v824 = vld [vmem:[%s823] sm:$0xf]
      %v825 = vld [vmem:[%s823 + $0x4] sm:$0xf]
      %v826 = vld [vmem:[%s823 + $0x8] sm:$0xf]
      %v827 = vld [vmem:[%s823 + $0xc] sm:$0xf]
      %v828 = vld [vmem:[%s823 + $0x10] sm:$0xf]
      %v834 = vunpack.c.l.b16 %v824
      %v835 = vunpack.c.l.b16 %v825
      %v836 = vunpack.c.l.b16 %v826
      %v837 = vunpack.c.l.b16 %v827
      %v838 = vunpack.c.l.b16 %v828
      %v839 = vpack.c.b16 %v835, %v834
      %v840 = vpack.c.b16 %v837, %v836
      %v841 = vpack.c.b16 %v838, %v838
      %v845 = vsel %vm320, %v819, 0
      %v848 = vsel %vm320, %v820, 0
      %v851 = vsel %vm320, %v821, 0
      %v854 = vsel %vm320, %v822, 0
      %v857 = vsel %vm404, %v841, 0
      %859 = vmatprep.subr.bf16.mxu0 0
      %860 = vmatpush1.bf16.msra.mxu0 %v839
      %861 = vmatprep.subr.bf16.mxu0 0
      %862 = vmatpush1.bf16.msra.mxu0 %v840
      %863 = vmatprep.subr.bf16.mxu0 0
      %864 = vmatpush1.bf16.msra.mxu0 %v857
      %865 = vmatprep.subr.bf16.mxu0 0
      %866 = vmatpush1.bf16.msra.mxu0 0
      %867 = vmatprep.subr.bf16.mxu0 0
      %868 = vmatpush1.bf16.msra.mxu0 0
      %869 = vmatprep.subr.bf16.mxu0 0
      %870 = vmatpush1.bf16.msra.mxu0 0
      %871 = vmatprep.subr.bf16.mxu0 0
      %872 = vmatpush1.bf16.msra.mxu0 0
      %873 = vmatprep.subr.bf16.mxu0 0
      %874 = vmatpush1.bf16.msra.mxu0 0
      %875 = vmatprep.subr.bf16.mxu0 0
      %876 = vmatpush1.bf16.msra.mxu0 0
      %877 = vmatprep.subr.bf16.mxu0 0
      %878 = vmatpush1.bf16.msra.mxu0 0
      %879 = vmatprep.subr.bf16.mxu0 0
      %880 = vmatpush1.bf16.msra.mxu0 0
      %881 = vmatprep.subr.bf16.mxu0 0
      %882 = vmatpush1.bf16.msra.mxu0 0
      %883 = vmatprep.subr.bf16.mxu0 0
      %884 = vmatpush1.bf16.msra.mxu0 0
      %885 = vmatprep.subr.bf16.mxu0 0
      %886 = vmatpush1.bf16.msra.mxu0 0
      %887 = vmatprep.subr.bf16.mxu0 0
      %888 = vmatpush1.bf16.msra.mxu0 0
      %889 = vmatprep.subr.bf16.mxu0 0
      %890 = vmatpush1.bf16.msra.mxu0 0
      %891 = vmatprep.mubr.bf16.mxu0 0
      %892 = vmatmul.mubr.bf16.gmra.mrb[0].mxu0 %v845
      %v893 = vpop.f32.mrb[0].mxu0
      %v894 = vadd.f32 0.0, %v893
      %v895 = vpop.f32.mrb[0].mxu0
      %v896 = vpop.f32.mrb[0].mxu0
      %v897 = vadd.f32 0.0, %v896
      %v898 = vpop.f32.mrb[0].mxu0
      %899 = vmatprep.mubr.bf16.mxu0 0
      %900 = vmatmul.mubr.bf16.gmra.mrb[0].mxu0 %v848
      %v901 = vpop.f32.mrb[0].mxu0
      %v902 = vadd.f32 0.0, %v901
      %v903 = vpop.f32.mrb[0].mxu0
      %v904 = vpop.f32.mrb[0].mxu0
      %v905 = vadd.f32 0.0, %v904
      %v906 = vpop.f32.mrb[0].mxu0
      %907 = vmatprep.mubr.bf16.mxu0 0
      %908 = vmatmul.mubr.bf16.gmra.mrb[0].mxu0 %v851
      %v909 = vpop.f32.mrb[0].mxu0
      %v910 = vadd.f32 0.0, %v909
      %v911 = vpop.f32.mrb[0].mxu0
      %v912 = vpop.f32.mrb[0].mxu0
      %v913 = vadd.f32 0.0, %v912
      %v914 = vpop.f32.mrb[0].mxu0
      %915 = vmatprep.mubr.bf16.mxu0 0
      %916 = vmatmul.mubr.bf16.gmra.mrb[0].mxu0 %v854
      %v917 = vpop.f32.mrb[0].mxu0
      %v918 = vadd.f32 0.0, %v917
      %v919 = vpop.f32.mrb[0].mxu0
      %v920 = vpop.f32.mrb[0].mxu0
      %v921 = vadd.f32 0.0, %v920
      %v922 = vpop.f32.mrb[0].mxu0
      %923 = vdwg.mxu0
      %v924 = vadd.f32 %v803, %v894
      %v925 = vadd.f32 %v804, %v897
      %v926 = vadd.f32 %v805, %v902
      %v927 = vadd.f32 %v806, %v905
      %v928 = vadd.f32 %v807, %v910
      %v929 = vadd.f32 %v808, %v913
      %v930 = vadd.f32 %v809, %v918
      %v931 = vadd.f32 %v810, %v921
      %v932 = vld [vmem:[%s689 + $0x2] sm:$0xff]
      %v933 = vld [vmem:[%s689 + $0x12] sm:$0xff]
      %v934 = vld [vmem:[%s689 + $0x22] sm:$0xff]
      %v935 = vld [vmem:[%s689 + $0x32] sm:$0xff]
      %v936 = vld [vmem:[%s689 + $0x42] sm:$0xff]
      %v937 = vld [vmem:[%s689 + $0x52] sm:$0xff]
      %v938 = vld [vmem:[%s689 + $0x62] sm:$0xff]
      %v939 = vld [vmem:[%s689 + $0x72] sm:$0xff]
      %v940 = vpack.c.bf16 %v933, %v932
      %v941 = vpack.c.bf16 %v935, %v934
      %v942 = vpack.c.bf16 %v937, %v936
      %v943 = vpack.c.bf16 %v939, %v938
      %s944 = scalar_lea.vmem %s1, 100
      %v945 = vld [vmem:[%s944] sm:$0xf]
      %v946 = vld [vmem:[%s944 + $0x4] sm:$0xf]
      %v947 = vld [vmem:[%s944 + $0x8] sm:$0xf]
      %v948 = vld [vmem:[%s944 + $0xc] sm:$0xf]
      %v949 = vld [vmem:[%s944 + $0x10] sm:$0xf]
      %v955 = vunpack.c.l.b16 %v945
      %v956 = vunpack.c.l.b16 %v946
      %v957 = vunpack.c.l.b16 %v947
      %v958 = vunpack.c.l.b16 %v948
      %v959 = vunpack.c.l.b16 %v949
      %v960 = vpack.c.b16 %v956, %v955
      %v961 = vpack.c.b16 %v958, %v957
      %v962 = vpack.c.b16 %v959, %v959
      %v966 = vsel %vm320, %v940, 0
      %v969 = vsel %vm320, %v941, 0
      %v972 = vsel %vm320, %v942, 0
      %v975 = vsel %vm320, %v943, 0
      %v978 = vsel %vm404, %v962, 0
      %980 = vmatprep.subr.bf16.mxu0 0
      %981 = vmatpush1.bf16.msra.mxu0 %v960
      %982 = vmatprep.subr.bf16.mxu0 0
      %983 = vmatpush1.bf16.msra.mxu0 %v961
      %984 = vmatprep.subr.bf16.mxu0 0
      %985 = vmatpush1.bf16.msra.mxu0 %v978
      %986 = vmatprep.subr.bf16.mxu0 0
      %987 = vmatpush1.bf16.msra.mxu0 0
      %988 = vmatprep.subr.bf16.mxu0 0
      %989 = vmatpush1.bf16.msra.mxu0 0
      %990 = vmatprep.subr.bf16.mxu0 0
      %991 = vmatpush1.bf16.msra.mxu0 0
      %992 = vmatprep.subr.bf16.mxu0 0
      %993 = vmatpush1.bf16.msra.mxu0 0
      %994 = vmatprep.subr.bf16.mxu0 0
      %995 = vmatpush1.bf16.msra.mxu0 0
      %996 = vmatprep.subr.bf16.mxu0 0
      %997 = vmatpush1.bf16.msra.mxu0 0
      %998 = vmatprep.subr.bf16.mxu0 0
      %999 = vmatpush1.bf16.msra.mxu0 0
      %1000 = vmatprep.subr.bf16.mxu0 0
      %1001 = vmatpush1.bf16.msra.mxu0 0
      %1002 = vmatprep.subr.bf16.mxu0 0
      %1003 = vmatpush1.bf16.msra.mxu0 0
      %1004 = vmatprep.subr.bf16.mxu0 0
      %1005 = vmatpush1.bf16.msra.mxu0 0
      %1006 = vmatprep.subr.bf16.mxu0 0
      %1007 = vmatpush1.bf16.msra.mxu0 0
      %1008 = vmatprep.subr.bf16.mxu0 0
      %1009 = vmatpush1.bf16.msra.mxu0 0
      %1010 = vmatprep.subr.bf16.mxu0 0
      %1011 = vmatpush1.bf16.msra.mxu0 0
      %1012 = vmatprep.mubr.bf16.mxu0 0
      %1013 = vmatmul.mubr.bf16.gmra.mrb[0].mxu0 %v966
      %v1014 = vpop.f32.mrb[0].mxu0
      %v1015 = vadd.f32 0.0, %v1014
      %v1016 = vpop.f32.mrb[0].mxu0
      %v1017 = vpop.f32.mrb[0].mxu0
      %v1018 = vadd.f32 0.0, %v1017
      %v1019 = vpop.f32.mrb[0].mxu0
      %1020 = vmatprep.mubr.bf16.mxu0 0
      %1021 = vmatmul.mubr.bf16.gmra.mrb[0].mxu0 %v969
      %v1022 = vpop.f32.mrb[0].mxu0
      %v1023 = vadd.f32 0.0, %v1022
      %v1024 = vpop.f32.mrb[0].mxu0
      %v1025 = vpop.f32.mrb[0].mxu0
      %v1026 = vadd.f32 0.0, %v1025
      %v1027 = vpop.f32.mrb[0].mxu0
      %1028 = vmatprep.mubr.bf16.mxu0 0
      %1029 = vmatmul.mubr.bf16.gmra.mrb[0].mxu0 %v972
      %v1030 = vpop.f32.mrb[0].mxu0
      %v1031 = vadd.f32 0.0, %v1030
      %v1032 = vpop.f32.mrb[0].mxu0
      %v1033 = vpop.f32.mrb[0].mxu0
      %v1034 = vadd.f32 0.0, %v1033
      %v1035 = vpop.f32.mrb[0].mxu0
      %1036 = vmatprep.mubr.bf16.mxu0 0
      %1037 = vmatmul.mubr.bf16.gmra.mrb[0].mxu0 %v975
      %v1038 = vpop.f32.mrb[0].mxu0
      %v1039 = vadd.f32 0.0, %v1038
      %v1040 = vpop.f32.mrb[0].mxu0
      %v1041 = vpop.f32.mrb[0].mxu0
      %v1042 = vadd.f32 0.0, %v1041
      %v1043 = vpop.f32.mrb[0].mxu0
      %1044 = vdwg.mxu0
      %v1045 = vadd.f32 %v924, %v1015
      %v1046 = vadd.f32 %v925, %v1018
      %v1047 = vadd.f32 %v926, %v1023
      %v1048 = vadd.f32 %v927, %v1026
      %v1049 = vadd.f32 %v928, %v1031
      %v1050 = vadd.f32 %v929, %v1034
      %v1051 = vadd.f32 %v930, %v1039
      %v1052 = vadd.f32 %v931, %v1042
      %s1053 = scalar_lea.vmem [#allocation2], 32
      %v1054 = vld [vmem:[%s1053] sm:$0xff]
      %v1055 = vld [vmem:[%s1053 + $0x10] sm:$0xff]
      %v1056 = vld [vmem:[%s1053 + $0x20] sm:$0xff]
      %v1057 = vld [vmem:[%s1053 + $0x30] sm:$0xff]
      %v1058 = vld [vmem:[%s1053 + $0x40] sm:$0xff]
      %v1059 = vld [vmem:[%s1053 + $0x50] sm:$0xff]
      %v1060 = vld [vmem:[%s1053 + $0x60] sm:$0xff]
      %v1061 = vld [vmem:[%s1053 + $0x70] sm:$0xff]
      %v1062 = vpack.c.bf16 %v1055, %v1054
      %v1063 = vpack.c.bf16 %v1057, %v1056
      %v1064 = vpack.c.bf16 %v1059, %v1058
      %v1065 = vpack.c.bf16 %v1061, %v1060
      %s1066 = scalar_lea.vmem %s1, 120
      %v1067 = vld [vmem:[%s1066] sm:$0xf]
      %v1068 = vld [vmem:[%s1066 + $0x4] sm:$0xf]
      %v1069 = vld [vmem:[%s1066 + $0x8] sm:$0xf]
      %v1070 = vld [vmem:[%s1066 + $0xc] sm:$0xf]
      %v1071 = vld [vmem:[%s1066 + $0x10] sm:$0xf]
      %v1077 = vunpack.c.l.b16 %v1067
      %v1078 = vunpack.c.l.b16 %v1068
      %v1079 = vunpack.c.l.b16 %v1069
      %v1080 = vunpack.c.l.b16 %v1070
      %v1081 = vunpack.c.l.b16 %v1071
      %v1082 = vpack.c.b16 %v1078, %v1077
      %v1083 = vpack.c.b16 %v1080, %v1079
      %v1084 = vpack.c.b16 %v1081, %v1081
      %v1088 = vsel %vm320, %v1062, 0
      %v1091 = vsel %vm320, %v1063, 0
      %v1094 = vsel %vm320, %v1064, 0
      %v1097 = vsel %vm320, %v1065, 0
      %v1100 = vsel %vm404, %v1084, 0
      %1102 = vmatprep.subr.bf16.mxu0 0
      %1103 = vmatpush1.bf16.msra.mxu0 %v1082
      %1104 = vmatprep.subr.bf16.mxu0 0
      %1105 = vmatpush1.bf16.msra.mxu0 %v1083
      %1106 = vmatprep.subr.bf16.mxu0 0
      %1107 = vmatpush1.bf16.msra.mxu0 %v1100
      %1108 = vmatprep.subr.bf16.mxu0 0
      %1109 = vmatpush1.bf16.msra.mxu0 0
      %1110 = vmatprep.subr.bf16.mxu0 0
      %1111 = vmatpush1.bf16.msra.mxu0 0
      %1112 = vmatprep.subr.bf16.mxu0 0
      %1113 = vmatpush1.bf16.msra.mxu0 0
      %1114 = vmatprep.subr.bf16.mxu0 0
      %1115 = vmatpush1.bf16.msra.mxu0 0
      %1116 = vmatprep.subr.bf16.mxu0 0
      %1117 = vmatpush1.bf16.msra.mxu0 0
      %1118 = vmatprep.subr.bf16.mxu0 0
      %1119 = vmatpush1.bf16.msra.mxu0 0
      %1120 = vmatprep.subr.bf16.mxu0 0
      %1121 = vmatpush1.bf16.msra.mxu0 0
      %1122 = vmatprep.subr.bf16.mxu0 0
      %1123 = vmatpush1.bf16.msra.mxu0 0
      %1124 = vmatprep.subr.bf16.mxu0 0
      %1125 = vmatpush1.bf16.msra.mxu0 0
      %1126 = vmatprep.subr.bf16.mxu0 0
      %1127 = vmatpush1.bf16.msra.mxu0 0
      %1128 = vmatprep.subr.bf16.mxu0 0
      %1129 = vmatpush1.bf16.msra.mxu0 0
      %1130 = vmatprep.subr.bf16.mxu0 0
      %1131 = vmatpush1.bf16.msra.mxu0 0
      %1132 = vmatprep.subr.bf16.mxu0 0
      %1133 = vmatpush1.bf16.msra.mxu0 0
      %1134 = vmatprep.mubr.bf16.mxu0 0
      %1135 = vmatmul.mubr.bf16.gmra.mrb[0].mxu0 %v1088
      %v1136 = vpop.f32.mrb[0].mxu0
      %v1137 = vadd.f32 0.0, %v1136
      %v1138 = vpop.f32.mrb[0].mxu0
      %v1139 = vpop.f32.mrb[0].mxu0
      %v1140 = vadd.f32 0.0, %v1139
      %v1141 = vpop.f32.mrb[0].mxu0
      %1142 = vmatprep.mubr.bf16.mxu0 0
      %1143 = vmatmul.mubr.bf16.gmra.mrb[0].mxu0 %v1091
      %v1144 = vpop.f32.mrb[0].mxu0
      %v1145 = vadd.f32 0.0, %v1144
      %v1146 = vpop.f32.mrb[0].mxu0
      %v1147 = vpop.f32.mrb[0].mxu0
      %v1148 = vadd.f32 0.0, %v1147
      %v1149 = vpop.f32.mrb[0].mxu0
      %1150 = vmatprep.mubr.bf16.mxu0 0
      %1151 = vmatmul.mubr.bf16.gmra.mrb[0].mxu0 %v1094
      %v1152 = vpop.f32.mrb[0].mxu0
      %v1153 = vadd.f32 0.0, %v1152
      %v1154 = vpop.f32.mrb[0].mxu0
      %v1155 = vpop.f32.mrb[0].mxu0
      %v1156 = vadd.f32 0.0, %v1155
      %v1157 = vpop.f32.mrb[0].mxu0
      %1158 = vmatprep.mubr.bf16.mxu0 0
      %1159 = vmatmul.mubr.bf16.gmra.mrb[0].mxu0 %v1097
      %v1160 = vpop.f32.mrb[0].mxu0
      %v1161 = vadd.f32 0.0, %v1160
      %v1162 = vpop.f32.mrb[0].mxu0
      %v1163 = vpop.f32.mrb[0].mxu0
      %v1164 = vadd.f32 0.0, %v1163
      %v1165 = vpop.f32.mrb[0].mxu0
      %1166 = vdwg.mxu0
      %v1167 = vadd.f32 %v1045, %v1137
      %v1168 = vadd.f32 %v1046, %v1140
      %v1169 = vadd.f32 %v1047, %v1145
      %v1170 = vadd.f32 %v1048, %v1148
      %v1171 = vadd.f32 %v1049, %v1153
      %v1172 = vadd.f32 %v1050, %v1156
      %v1173 = vadd.f32 %v1051, %v1161
      %v1174 = vadd.f32 %v1052, %v1164
      %v1175 = vld [vmem:[%s1053 + $0x1] sm:$0xff]
      %v1176 = vld [vmem:[%s1053 + $0x11] sm:$0xff]
      %v1177 = vld [vmem:[%s1053 + $0x21] sm:$0xff]
      %v1178 = vld [vmem:[%s1053 + $0x31] sm:$0xff]
      %v1179 = vld [vmem:[%s1053 + $0x41] sm:$0xff]
      %v1180 = vld [vmem:[%s1053 + $0x51] sm:$0xff]
      %v1181 = vld [vmem:[%s1053 + $0x61] sm:$0xff]
      %v1182 = vld [vmem:[%s1053 + $0x71] sm:$0xff]
      %v1183 = vpack.c.bf16 %v1176, %v1175
      %v1184 = vpack.c.bf16 %v1178, %v1177
      %v1185 = vpack.c.bf16 %v1180, %v1179
      %v1186 = vpack.c.bf16 %v1182, %v1181
      %s1187 = scalar_lea.vmem %s1, 140
      %v1188 = vld [vmem:[%s1187] sm:$0xf]
      %v1189 = vld [vmem:[%s1187 + $0x4] sm:$0xf]
      %v1190 = vld [vmem:[%s1187 + $0x8] sm:$0xf]
      %v1191 = vld [vmem:[%s1187 + $0xc] sm:$0xf]
      %v1192 = vld [vmem:[%s1187 + $0x10] sm:$0xf]
      %v1198 = vunpack.c.l.b16 %v1188
      %v1199 = vunpack.c.l.b16 %v1189
      %v1200 = vunpack.c.l.b16 %v1190
      %v1201 = vunpack.c.l.b16 %v1191
      %v1202 = vunpack.c.l.b16 %v1192
      %v1203 = vpack.c.b16 %v1199, %v1198
      %v1204 = vpack.c.b16 %v1201, %v1200
      %v1205 = vpack.c.b16 %v1202, %v1202
      %v1209 = vsel %vm320, %v1183, 0
      %v1212 = vsel %vm320, %v1184, 0
      %v1215 = vsel %vm320, %v1185, 0
      %v1218 = vsel %vm320, %v1186, 0
      %v1221 = vsel %vm404, %v1205, 0
      %1223 = vmatprep.subr.bf16.mxu0 0
      %1224 = vmatpush1.bf16.msra.mxu0 %v1203
      %1225 = vmatprep.subr.bf16.mxu0 0
      %1226 = vmatpush1.bf16.msra.mxu0 %v1204
      %1227 = vmatprep.subr.bf16.mxu0 0
      %1228 = vmatpush1.bf16.msra.mxu0 %v1221
      %1229 = vmatprep.subr.bf16.mxu0 0
      %1230 = vmatpush1.bf16.msra.mxu0 0
      %1231 = vmatprep.subr.bf16.mxu0 0
      %1232 = vmatpush1.bf16.msra.mxu0 0
      %1233 = vmatprep.subr.bf16.mxu0 0
      %1234 = vmatpush1.bf16.msra.mxu0 0
      %1235 = vmatprep.subr.bf16.mxu0 0
      %1236 = vmatpush1.bf16.msra.mxu0 0
      %1237 = vmatprep.subr.bf16.mxu0 0
      %1238 = vmatpush1.bf16.msra.mxu0 0
      %1239 = vmatprep.subr.bf16.mxu0 0
      %1240 = vmatpush1.bf16.msra.mxu0 0
      %1241 = vmatprep.subr.bf16.mxu0 0
      %1242 = vmatpush1.bf16.msra.mxu0 0
      %1243 = vmatprep.subr.bf16.mxu0 0
      %1244 = vmatpush1.bf16.msra.mxu0 0
      %1245 = vmatprep.subr.bf16.mxu0 0
      %1246 = vmatpush1.bf16.msra.mxu0 0
      %1247 = vmatprep.subr.bf16.mxu0 0
      %1248 = vmatpush1.bf16.msra.mxu0 0
      %1249 = vmatprep.subr.bf16.mxu0 0
      %1250 = vmatpush1.bf16.msra.mxu0 0
      %1251 = vmatprep.subr.bf16.mxu0 0
      %1252 = vmatpush1.bf16.msra.mxu0 0
      %1253 = vmatprep.subr.bf16.mxu0 0
      %1254 = vmatpush1.bf16.msra.mxu0 0
      %1255 = vmatprep.mubr.bf16.mxu0 0
      %1256 = vmatmul.mubr.bf16.gmra.mrb[0].mxu0 %v1209
      %v1257 = vpop.f32.mrb[0].mxu0
      %v1258 = vadd.f32 0.0, %v1257
      %v1259 = vpop.f32.mrb[0].mxu0
      %v1260 = vpop.f32.mrb[0].mxu0
      %v1261 = vadd.f32 0.0, %v1260
      %v1262 = vpop.f32.mrb[0].mxu0
      %1263 = vmatprep.mubr.bf16.mxu0 0
      %1264 = vmatmul.mubr.bf16.gmra.mrb[0].mxu0 %v1212
      %v1265 = vpop.f32.mrb[0].mxu0
      %v1266 = vadd.f32 0.0, %v1265
      %v1267 = vpop.f32.mrb[0].mxu0
      %v1268 = vpop.f32.mrb[0].mxu0
      %v1269 = vadd.f32 0.0, %v1268
      %v1270 = vpop.f32.mrb[0].mxu0
      %1271 = vmatprep.mubr.bf16.mxu0 0
      %1272 = vmatmul.mubr.bf16.gmra.mrb[0].mxu0 %v1215
      %v1273 = vpop.f32.mrb[0].mxu0
      %v1274 = vadd.f32 0.0, %v1273
      %v1275 = vpop.f32.mrb[0].mxu0
      %v1276 = vpop.f32.mrb[0].mxu0
      %v1277 = vadd.f32 0.0, %v1276
      %v1278 = vpop.f32.mrb[0].mxu0
      %1279 = vmatprep.mubr.bf16.mxu0 0
      %1280 = vmatmul.mubr.bf16.gmra.mrb[0].mxu0 %v1218
      %v1281 = vpop.f32.mrb[0].mxu0
      %v1282 = vadd.f32 0.0, %v1281
      %v1283 = vpop.f32.mrb[0].mxu0
      %v1284 = vpop.f32.mrb[0].mxu0
      %v1285 = vadd.f32 0.0, %v1284
      %v1286 = vpop.f32.mrb[0].mxu0
      %1287 = vdwg.mxu0
      %v1288 = vadd.f32 %v1167, %v1258
      %v1289 = vadd.f32 %v1168, %v1261
      %v1290 = vadd.f32 %v1169, %v1266
      %v1291 = vadd.f32 %v1170, %v1269
      %v1292 = vadd.f32 %v1171, %v1274
      %v1293 = vadd.f32 %v1172, %v1277
      %v1294 = vadd.f32 %v1173, %v1282
      %v1295 = vadd.f32 %v1174, %v1285
      %v1296 = vld [vmem:[%s1053 + $0x2] sm:$0xff]
      %v1297 = vld [vmem:[%s1053 + $0x12] sm:$0xff]
      %v1298 = vld [vmem:[%s1053 + $0x22] sm:$0xff]
      %v1299 = vld [vmem:[%s1053 + $0x32] sm:$0xff]
      %v1300 = vld [vmem:[%s1053 + $0x42] sm:$0xff]
      %v1301 = vld [vmem:[%s1053 + $0x52] sm:$0xff]
      %v1302 = vld [vmem:[%s1053 + $0x62] sm:$0xff]
      %v1303 = vld [vmem:[%s1053 + $0x72] sm:$0xff]
      %v1304 = vpack.c.bf16 %v1297, %v1296
      %v1305 = vpack.c.bf16 %v1299, %v1298
      %v1306 = vpack.c.bf16 %v1301, %v1300
      %v1307 = vpack.c.bf16 %v1303, %v1302
      %s1308 = scalar_lea.vmem %s1, 160
      %v1309 = vld [vmem:[%s1308] sm:$0xf]
      %v1310 = vld [vmem:[%s1308 + $0x4] sm:$0xf]
      %v1311 = vld [vmem:[%s1308 + $0x8] sm:$0xf]
      %v1312 = vld [vmem:[%s1308 + $0xc] sm:$0xf]
      %v1313 = vld [vmem:[%s1308 + $0x10] sm:$0xf]
      %v1319 = vunpack.c.l.b16 %v1309
      %v1320 = vunpack.c.l.b16 %v1310
      %v1321 = vunpack.c.l.b16 %v1311
      %v1322 = vunpack.c.l.b16 %v1312
      %v1323 = vunpack.c.l.b16 %v1313
      %v1324 = vpack.c.b16 %v1320, %v1319
      %v1325 = vpack.c.b16 %v1322, %v1321
      %v1326 = vpack.c.b16 %v1323, %v1323
      %v1330 = vsel %vm320, %v1304, 0
      %v1333 = vsel %vm320, %v1305, 0
      %v1336 = vsel %vm320, %v1306, 0
      %v1339 = vsel %vm320, %v1307, 0
      %v1342 = vsel %vm404, %v1326, 0
      %1344 = vmatprep.subr.bf16.mxu0 0
      %1345 = vmatpush1.bf16.msra.mxu0 %v1324
      %1346 = vmatprep.subr.bf16.mxu0 0
      %1347 = vmatpush1.bf16.msra.mxu0 %v1325
      %1348 = vmatprep.subr.bf16.mxu0 0
      %1349 = vmatpush1.bf16.msra.mxu0 %v1342
      %1350 = vmatprep.subr.bf16.mxu0 0
      %1351 = vmatpush1.bf16.msra.mxu0 0
      %1352 = vmatprep.subr.bf16.mxu0 0
      %1353 = vmatpush1.bf16.msra.mxu0 0
      %1354 = vmatprep.subr.bf16.mxu0 0
      %1355 = vmatpush1.bf16.msra.mxu0 0
      %1356 = vmatprep.subr.bf16.mxu0 0
      %1357 = vmatpush1.bf16.msra.mxu0 0
      %1358 = vmatprep.subr.bf16.mxu0 0
      %1359 = vmatpush1.bf16.msra.mxu0 0
      %1360 = vmatprep.subr.bf16.mxu0 0
      %1361 = vmatpush1.bf16.msra.mxu0 0
      %1362 = vmatprep.subr.bf16.mxu0 0
      %1363 = vmatpush1.bf16.msra.mxu0 0
      %1364 = vmatprep.subr.bf16.mxu0 0
      %1365 = vmatpush1.bf16.msra.mxu0 0
      %1366 = vmatprep.subr.bf16.mxu0 0
      %1367 = vmatpush1.bf16.msra.mxu0 0
      %1368 = vmatprep.subr.bf16.mxu0 0
      %1369 = vmatpush1.bf16.msra.mxu0 0
      %1370 = vmatprep.subr.bf16.mxu0 0
      %1371 = vmatpush1.bf16.msra.mxu0 0
      %1372 = vmatprep.subr.bf16.mxu0 0
      %1373 = vmatpush1.bf16.msra.mxu0 0
      %1374 = vmatprep.subr.bf16.mxu0 0
      %1375 = vmatpush1.bf16.msra.mxu0 0
      %1376 = vmatprep.mubr.bf16.mxu0 0
      %1377 = vmatmul.mubr.bf16.gmra.mrb[0].mxu0 %v1330
      %v1378 = vpop.f32.mrb[0].mxu0
      %v1379 = vadd.f32 0.0, %v1378
      %v1380 = vpop.f32.mrb[0].mxu0
      %v1381 = vpop.f32.mrb[0].mxu0
      %v1382 = vadd.f32 0.0, %v1381
      %v1383 = vpop.f32.mrb[0].mxu0
      %1384 = vmatprep.mubr.bf16.mxu0 0
      %1385 = vmatmul.mubr.bf16.gmra.mrb[0].mxu0 %v1333
      %v1386 = vpop.f32.mrb[0].mxu0
      %v1387 = vadd.f32 0.0, %v1386
      %v1388 = vpop.f32.mrb[0].mxu0
      %v1389 = vpop.f32.mrb[0].mxu0
      %v1390 = vadd.f32 0.0, %v1389
      %v1391 = vpop.f32.mrb[0].mxu0
      %1392 = vmatprep.mubr.bf16.mxu0 0
      %1393 = vmatmul.mubr.bf16.gmra.mrb[0].mxu0 %v1336
      %v1394 = vpop.f32.mrb[0].mxu0
      %v1395 = vadd.f32 0.0, %v1394
      %v1396 = vpop.f32.mrb[0].mxu0
      %v1397 = vpop.f32.mrb[0].mxu0
      %v1398 = vadd.f32 0.0, %v1397
      %v1399 = vpop.f32.mrb[0].mxu0
      %1400 = vmatprep.mubr.bf16.mxu0 0
      %1401 = vmatmul.mubr.bf16.gmra.mrb[0].mxu0 %v1339
      %v1402 = vpop.f32.mrb[0].mxu0
      %v1403 = vadd.f32 0.0, %v1402
      %v1404 = vpop.f32.mrb[0].mxu0
      %v1405 = vpop.f32.mrb[0].mxu0
      %v1406 = vadd.f32 0.0, %v1405
      %v1407 = vpop.f32.mrb[0].mxu0
      %1408 = vdwg.mxu0
      %v1409 = vadd.f32 %v1288, %v1379
      %v1410 = vadd.f32 %v1289, %v1382
      %v1411 = vadd.f32 %v1290, %v1387
      %v1412 = vadd.f32 %v1291, %v1390
      %v1413 = vadd.f32 %v1292, %v1395
      %v1414 = vadd.f32 %v1293, %v1398
      %v1415 = vadd.f32 %v1294, %v1403
      %v1416 = vadd.f32 %v1295, %v1406
      %v1417 = vld [vmem:[%s2] sm:$0x1]
      %v1419 = vlaneseq
      %v1420 = vshrl.u32 %v1419, 7
      %v1421 = vsub.s32 0, %v1420
      %v1422 = vrot.slane %v1417, %v1421
      %v1424 = vadd.f32 %v1409, %v1422
      %v1425 = vadd.f32 %v1410, %v1422
      %v1426 = vadd.f32 %v1411, %v1422
      %v1427 = vadd.f32 %v1412, %v1422
      %v1428 = vadd.f32 %v1413, %v1422
      %v1429 = vadd.f32 %v1414, %v1422
      %v1430 = vadd.f32 %v1415, %v1422
      %v1431 = vadd.f32 %v1416, %v1422
      %v1432 = vadd.f32 %v1424, %v1425
      %v1433 = vadd.f32 %v1432, %v1426
      %v1434 = vadd.f32 %v1433, %v1427
      %v1435 = vadd.f32 %v1434, %v1428
      %v1436 = vadd.f32 %v1435, %v1429
      %v1437 = vadd.f32 %v1436, %v1430
      %v1438 = vadd.f32 %v1437, %v1431
      %v1439 = vrot.slane %v1438, 4
      %v1440 = vadd.f32 %v1438, %v1439
      %v1441 = vrot.slane %v1440, 2
      %v1442 = vadd.f32 %v1440, %v1441
      %v1443 = vrot.slane %v1442, 1
      %v1444 = vadd.f32 %v1442, %v1443
      %v1445 = vmul.f32 %v1424, %v1424
      %v1446 = vmul.f32 %v1425, %v1425
      %v1447 = vmul.f32 %v1426, %v1426
      %v1448 = vmul.f32 %v1427, %v1427
      %v1449 = vmul.f32 %v1428, %v1428
      %v1450 = vmul.f32 %v1429, %v1429
      %v1451 = vmul.f32 %v1430, %v1430
      %v1452 = vmul.f32 %v1431, %v1431
      %v1453 = vadd.f32 %v1445, %v1446
      %v1454 = vadd.f32 %v1453, %v1447
      %v1455 = vadd.f32 %v1454, %v1448
      %v1456 = vadd.f32 %v1455, %v1449
      %v1457 = vadd.f32 %v1456, %v1450
      %v1458 = vadd.f32 %v1457, %v1451
      %v1459 = vadd.f32 %v1458, %v1452
      %v1460 = vrot.slane %v1459, 4
      %v1461 = vadd.f32 %v1459, %v1460
      %v1462 = vrot.slane %v1461, 2
      %v1463 = vadd.f32 %v1461, %v1462
      %v1464 = vrot.slane %v1463, 1
      %v1465 = vadd.f32 %v1463, %v1464
      %v1466 = vld [vmem:[%s5] sm:$0xff]
      %v1467 = vld [vmem:[%s5 + $0x8] sm:$0xff]
      %v1468 = vld [vmem:[%s5 + $0x10] sm:$0xff]
      %v1469 = vld [vmem:[%s5 + $0x18] sm:$0xff]
      %v1470 = vld [vmem:[%s5 + $0x20] sm:$0xff]
      %v1471 = vld [vmem:[%s5 + $0x28] sm:$0xff]
      %v1472 = vld [vmem:[%s5 + $0x30] sm:$0xff]
      %v1473 = vld [vmem:[%s5 + $0x38] sm:$0xff]
      %v1474 = vld [vmem:[%s5 + $0x40] sm:$0xff]
      %v1475 = vld [vmem:[%s5 + $0x48] sm:$0xff]
      %v1476 = vld [vmem:[%s5 + $0x50] sm:$0xff]
      %v1477 = vld [vmem:[%s5 + $0x58] sm:$0xff]
      %v1478 = vld [vmem:[%s5 + $0x60] sm:$0xff]
      %v1479 = vld [vmem:[%s5 + $0x68] sm:$0xff]
      %v1480 = vld [vmem:[%s5 + $0x70] sm:$0xff]
      %v1481 = vld [vmem:[%s5 + $0x78] sm:$0xff]
      %1482 = vmatprep.subr.mxu0 0.0
      %1483 = vmatpush1.msra.mxu0 %v1466
      %1484 = vmatprep.subr.mxu0 0.0
      %1485 = vmatpush1.msra.mxu0 %v1467
      %1486 = vmatprep.subr.mxu0 0.0
      %1487 = vmatpush1.msra.mxu0 %v1468
      %1488 = vmatprep.subr.mxu0 0.0
      %1489 = vmatpush1.msra.mxu0 %v1469
      %1490 = vmatprep.subr.mxu0 0.0
      %1491 = vmatpush1.msra.mxu0 %v1470
      %1492 = vmatprep.subr.mxu0 0.0
      %1493 = vmatpush1.msra.mxu0 %v1471
      %1494 = vmatprep.subr.mxu0 0.0
      %1495 = vmatpush1.msra.mxu0 %v1472
      %1496 = vmatprep.subr.mxu0 0.0
      %1497 = vmatpush1.msra.mxu0 %v1473
      %1498 = vmatprep.subr.mxu0 0.0
      %1499 = vmatpush1.msra.mxu0 %v1474
      %1500 = vmatprep.subr.mxu0 0.0
      %1501 = vmatpush1.msra.mxu0 %v1475
      %1502 = vmatprep.subr.mxu0 0.0
      %1503 = vmatpush1.msra.mxu0 %v1476
      %1504 = vmatprep.subr.mxu0 0.0
      %1505 = vmatpush1.msra.mxu0 %v1477
      %1506 = vmatprep.subr.mxu0 0.0
      %1507 = vmatpush1.msra.mxu0 %v1478
      %1508 = vmatprep.subr.mxu0 0.0
      %1509 = vmatpush1.msra.mxu0 %v1479
      %1510 = vmatprep.subr.mxu0 0.0
      %1511 = vmatpush1.msra.mxu0 %v1480
      %1512 = vmatprep.subr.mxu0 0.0
      %1513 = vmatpush1.msra.mxu0 %v1481
      %1514 = vmatprep.subr.mxu0 0.0
      %1515 = vmatpush1.msra.mxu0 0.0
      %1516 = vmatprep.subr.mxu0 0.0
      %1517 = vmatpush1.msra.mxu0 0.0
      %1518 = vmatprep.subr.mxu0 0.0
      %1519 = vmatpush1.msra.mxu0 0.0
      %1520 = vmatprep.subr.mxu0 0.0
      %1521 = vmatpush1.msra.mxu0 0.0
      %1522 = vmatprep.subr.mxu0 0.0
      %1523 = vmatpush1.msra.mxu0 0.0
      %1524 = vmatprep.subr.mxu0 0.0
      %1525 = vmatpush1.msra.mxu0 0.0
      %1526 = vmatprep.subr.mxu0 0.0
      %1527 = vmatpush1.msra.mxu0 0.0
      %1528 = vmatprep.subr.mxu0 0.0
      %1529 = vmatpush1.msra.mxu0 0.0
      %1530 = vmatprep.subr.mxu0 0.0
      %1531 = vmatpush1.msra.mxu0 0.0
      %1532 = vmatprep.subr.mxu0 0.0
      %1533 = vmatpush1.msra.mxu0 0.0
      %1534 = vmatprep.subr.mxu0 0.0
      %1535 = vmatpush1.msra.mxu0 0.0
      %1536 = vmatprep.subr.mxu0 0.0
      %1537 = vmatpush1.msra.mxu0 0.0
      %1538 = vmatprep.subr.mxu0 0.0
      %1539 = vmatpush1.msra.mxu0 0.0
      %1540 = vmatprep.subr.mxu0 0.0
      %1541 = vmatpush1.msra.mxu0 0.0
      %1542 = vmatprep.subr.mxu0 0.0
      %1543 = vmatpush1.msra.mxu0 0.0
      %1544 = vmatprep.subr.mxu0 0.0
      %1545 = vmatpush1.msra.mxu0 0.0
      %1546 = vmatprep.mubr.f32.mxu0 0.0
      %1547 = vmatmul.mubr.f32.gmra.mrb[0].mxu0 %v1444
      %v1548 = vpop.f32.mrb[0].mxu0
      %v1549 = vadd.f32 0.0, %v1548
      %v1550 = vpop.f32.mrb[0].mxu0
      %1551 = vdwg.mxu0
      %1552 = vmatprep.subr.mxu0 0.0
      %1553 = vmatpush1.msra.mxu0 %v1466
      %1554 = vmatprep.subr.mxu0 0.0
      %1555 = vmatpush1.msra.mxu0 %v1467
      %1556 = vmatprep.subr.mxu0 0.0
      %1557 = vmatpush1.msra.mxu0 %v1468
      %1558 = vmatprep.subr.mxu0 0.0
      %1559 = vmatpush1.msra.mxu0 %v1469
      %1560 = vmatprep.subr.mxu0 0.0
      %1561 = vmatpush1.msra.mxu0 %v1470
      %1562 = vmatprep.subr.mxu0 0.0
      %1563 = vmatpush1.msra.mxu0 %v1471
      %1564 = vmatprep.subr.mxu0 0.0
      %1565 = vmatpush1.msra.mxu0 %v1472
      %1566 = vmatprep.subr.mxu0 0.0
      %1567 = vmatpush1.msra.mxu0 %v1473
      %1568 = vmatprep.subr.mxu0 0.0
      %1569 = vmatpush1.msra.mxu0 %v1474
      %1570 = vmatprep.subr.mxu0 0.0
      %1571 = vmatpush1.msra.mxu0 %v1475
      %1572 = vmatprep.subr.mxu0 0.0
      %1573 = vmatpush1.msra.mxu0 %v1476
      %1574 = vmatprep.subr.mxu0 0.0
      %1575 = vmatpush1.msra.mxu0 %v1477
      %1576 = vmatprep.subr.mxu0 0.0
      %1577 = vmatpush1.msra.mxu0 %v1478
      %1578 = vmatprep.subr.mxu0 0.0
      %1579 = vmatpush1.msra.mxu0 %v1479
      %1580 = vmatprep.subr.mxu0 0.0
      %1581 = vmatpush1.msra.mxu0 %v1480
      %1582 = vmatprep.subr.mxu0 0.0
      %1583 = vmatpush1.msra.mxu0 %v1481
      %1584 = vmatprep.subr.mxu0 0.0
      %1585 = vmatpush1.msra.mxu0 0.0
      %1586 = vmatprep.subr.mxu0 0.0
      %1587 = vmatpush1.msra.mxu0 0.0
      %1588 = vmatprep.subr.mxu0 0.0
      %1589 = vmatpush1.msra.mxu0 0.0
      %1590 = vmatprep.subr.mxu0 0.0
      %1591 = vmatpush1.msra.mxu0 0.0
      %1592 = vmatprep.subr.mxu0 0.0
      %1593 = vmatpush1.msra.mxu0 0.0
      %1594 = vmatprep.subr.mxu0 0.0
      %1595 = vmatpush1.msra.mxu0 0.0
      %1596 = vmatprep.subr.mxu0 0.0
      %1597 = vmatpush1.msra.mxu0 0.0
      %1598 = vmatprep.subr.mxu0 0.0
      %1599 = vmatpush1.msra.mxu0 0.0
      %1600 = vmatprep.subr.mxu0 0.0
      %1601 = vmatpush1.msra.mxu0 0.0
      %1602 = vmatprep.subr.mxu0 0.0
      %1603 = vmatpush1.msra.mxu0 0.0
      %1604 = vmatprep.subr.mxu0 0.0
      %1605 = vmatpush1.msra.mxu0 0.0
      %1606 = vmatprep.subr.mxu0 0.0
      %1607 = vmatpush1.msra.mxu0 0.0
      %1608 = vmatprep.subr.mxu0 0.0
      %1609 = vmatpush1.msra.mxu0 0.0
      %1610 = vmatprep.subr.mxu0 0.0
      %1611 = vmatpush1.msra.mxu0 0.0
      %1612 = vmatprep.subr.mxu0 0.0
      %1613 = vmatpush1.msra.mxu0 0.0
      %1614 = vmatprep.subr.mxu0 0.0
      %1615 = vmatpush1.msra.mxu0 0.0
      %1616 = vmatprep.mubr.f32.mxu0 0.0
      %1617 = vmatmul.mubr.f32.gmra.mrb[0].mxu0 %v1465
      %v1618 = vpop.f32.mrb[0].mxu0
      %v1619 = vadd.f32 0.0, %v1618
      %v1620 = vpop.f32.mrb[0].mxu0
      %1621 = vdwg.mxu0
      %v1622 = vmul.f32 %v1549, 0.0009765625
      %v1623 = vmul.f32 %v1619, 0.0009765625
      %v1624 = vmul.f32 %v1622, %v1622
      %v1625 = vsub.f32 %v1623, %v1624
      %v1626 = vmax.f32 %v1625, 0.0
      %v1627 = vadd.f32 %v1626, 1e-05
      %v1628 = vrsqrt.pop %v1627
      %v1629 = vld [vmem:[%s6] sm:$0xff]
      %vm1630 = vcmask 64512
      %v1632 = vsel %vm1630, %v1622, 0
      %1634 = vmatprep.subr.mxu0 0.0
      %1635 = vmatpush1.msra.mxu0 %v1629
      %1636 = vmatprep.subr.mxu0 0.0
      %1637 = vmatpush1.msra.mxu0 0.0
      %1638 = vmatprep.subr.mxu0 0.0
      %1639 = vmatpush1.msra.mxu0 0.0
      %1640 = vmatprep.subr.mxu0 0.0
      %1641 = vmatpush1.msra.mxu0 0.0
      %1642 = vmatprep.subr.mxu0 0.0
      %1643 = vmatpush1.msra.mxu0 0.0
      %1644 = vmatprep.subr.mxu0 0.0
      %1645 = vmatpush1.msra.mxu0 0.0
      %1646 = vmatprep.subr.mxu0 0.0
      %1647 = vmatpush1.msra.mxu0 0.0
      %1648 = vmatprep.subr.mxu0 0.0
      %1649 = vmatpush1.msra.mxu0 0.0
      %1650 = vmatprep.subr.mxu0 0.0
      %1651 = vmatpush1.msra.mxu0 0.0
      %1652 = vmatprep.subr.mxu0 0.0
      %1653 = vmatpush1.msra.mxu0 0.0
      %1654 = vmatprep.subr.mxu0 0.0
      %1655 = vmatpush1.msra.mxu0 0.0
      %1656 = vmatprep.subr.mxu0 0.0
      %1657 = vmatpush1.msra.mxu0 0.0
      %1658 = vmatprep.subr.mxu0 0.0
      %1659 = vmatpush1.msra.mxu0 0.0
      %1660 = vmatprep.subr.mxu0 0.0
      %1661 = vmatpush1.msra.mxu0 0.0
      %1662 = vmatprep.subr.mxu0 0.0
      %1663 = vmatpush1.msra.mxu0 0.0
      %1664 = vmatprep.subr.mxu0 0.0
      %1665 = vmatpush1.msra.mxu0 0.0
      %1666 = vmatprep.subr.mxu0 0.0
      %1667 = vmatpush1.msra.mxu0 0.0
      %1668 = vmatprep.subr.mxu0 0.0
      %1669 = vmatpush1.msra.mxu0 0.0
      %1670 = vmatprep.subr.mxu0 0.0
      %1671 = vmatpush1.msra.mxu0 0.0
      %1672 = vmatprep.subr.mxu0 0.0
      %1673 = vmatpush1.msra.mxu0 0.0
      %1674 = vmatprep.subr.mxu0 0.0
      %1675 = vmatpush1.msra.mxu0 0.0
      %1676 = vmatprep.subr.mxu0 0.0
      %1677 = vmatpush1.msra.mxu0 0.0
      %1678 = vmatprep.subr.mxu0 0.0
      %1679 = vmatpush1.msra.mxu0 0.0
      %1680 = vmatprep.subr.mxu0 0.0
      %1681 = vmatpush1.msra.mxu0 0.0
      %1682 = vmatprep.subr.mxu0 0.0
      %1683 = vmatpush1.msra.mxu0 0.0
      %1684 = vmatprep.subr.mxu0 0.0
      %1685 = vmatpush1.msra.mxu0 0.0
      %1686 = vmatprep.subr.mxu0 0.0
      %1687 = vmatpush1.msra.mxu0 0.0
      %1688 = vmatprep.subr.mxu0 0.0
      %1689 = vmatpush1.msra.mxu0 0.0
      %1690 = vmatprep.subr.mxu0 0.0
      %1691 = vmatpush1.msra.mxu0 0.0
      %1692 = vmatprep.subr.mxu0 0.0
      %1693 = vmatpush1.msra.mxu0 0.0
      %1694 = vmatprep.subr.mxu0 0.0
      %1695 = vmatpush1.msra.mxu0 0.0
      %1696 = vmatprep.subr.mxu0 0.0
      %1697 = vmatpush1.msra.mxu0 0.0
      %1698 = vmatprep.mubr.f32.mxu0 0.0
      %1699 = vmatmul.mubr.f32.gmra.mrb[0].mxu0 %v1632
      %v1700 = vpop.f32.mrb[0].mxu0
      %v1701 = vadd.f32 0.0, %v1700
      %v1702 = vpop.f32.mrb[0].mxu0
      %1703 = vdwg.mxu0
      %v1705 = vsel %vm1630, %v1628, 0
      %1707 = vmatprep.subr.mxu0 0.0
      %1708 = vmatpush1.msra.mxu0 %v1629
      %1709 = vmatprep.subr.mxu0 0.0
      %1710 = vmatpush1.msra.mxu0 0.0
      %1711 = vmatprep.subr.mxu0 0.0
      %1712 = vmatpush1.msra.mxu0 0.0
      %1713 = vmatprep.subr.mxu0 0.0
      %1714 = vmatpush1.msra.mxu0 0.0
      %1715 = vmatprep.subr.mxu0 0.0
      %1716 = vmatpush1.msra.mxu0 0.0
      %1717 = vmatprep.subr.mxu0 0.0
      %1718 = vmatpush1.msra.mxu0 0.0
      %1719 = vmatprep.subr.mxu0 0.0
      %1720 = vmatpush1.msra.mxu0 0.0
      %1721 = vmatprep.subr.mxu0 0.0
      %1722 = vmatpush1.msra.mxu0 0.0
      %1723 = vmatprep.subr.mxu0 0.0
      %1724 = vmatpush1.msra.mxu0 0.0
      %1725 = vmatprep.subr.mxu0 0.0
      %1726 = vmatpush1.msra.mxu0 0.0
      %1727 = vmatprep.subr.mxu0 0.0
      %1728 = vmatpush1.msra.mxu0 0.0
      %1729 = vmatprep.subr.mxu0 0.0
      %1730 = vmatpush1.msra.mxu0 0.0
      %1731 = vmatprep.subr.mxu0 0.0
      %1732 = vmatpush1.msra.mxu0 0.0
      %1733 = vmatprep.subr.mxu0 0.0
      %1734 = vmatpush1.msra.mxu0 0.0
      %1735 = vmatprep.subr.mxu0 0.0
      %1736 = vmatpush1.msra.mxu0 0.0
      %1737 = vmatprep.subr.mxu0 0.0
      %1738 = vmatpush1.msra.mxu0 0.0
      %1739 = vmatprep.subr.mxu0 0.0
      %1740 = vmatpush1.msra.mxu0 0.0
      %1741 = vmatprep.subr.mxu0 0.0
      %1742 = vmatpush1.msra.mxu0 0.0
      %1743 = vmatprep.subr.mxu0 0.0
      %1744 = vmatpush1.msra.mxu0 0.0
      %1745 = vmatprep.subr.mxu0 0.0
      %1746 = vmatpush1.msra.mxu0 0.0
      %1747 = vmatprep.subr.mxu0 0.0
      %1748 = vmatpush1.msra.mxu0 0.0
      %1749 = vmatprep.subr.mxu0 0.0
      %1750 = vmatpush1.msra.mxu0 0.0
      %1751 = vmatprep.subr.mxu0 0.0
      %1752 = vmatpush1.msra.mxu0 0.0
      %1753 = vmatprep.subr.mxu0 0.0
      %1754 = vmatpush1.msra.mxu0 0.0
      %1755 = vmatprep.subr.mxu0 0.0
      %1756 = vmatpush1.msra.mxu0 0.0
      %1757 = vmatprep.subr.mxu0 0.0
      %1758 = vmatpush1.msra.mxu0 0.0
      %1759 = vmatprep.subr.mxu0 0.0
      %1760 = vmatpush1.msra.mxu0 0.0
      %1761 = vmatprep.subr.mxu0 0.0
      %1762 = vmatpush1.msra.mxu0 0.0
      %1763 = vmatprep.subr.mxu0 0.0
      %1764 = vmatpush1.msra.mxu0 0.0
      %1765 = vmatprep.subr.mxu0 0.0
      %1766 = vmatpush1.msra.mxu0 0.0
      %1767 = vmatprep.subr.mxu0 0.0
      %1768 = vmatpush1.msra.mxu0 0.0
      %1769 = vmatprep.subr.mxu0 0.0
      %1770 = vmatpush1.msra.mxu0 0.0
      %1771 = vmatprep.mubr.f32.mxu0 0.0
      %1772 = vmatmul.mubr.f32.gmra.mrb[0].mxu0 %v1705
      %v1773 = vpop.f32.mrb[0].mxu0
      %v1774 = vadd.f32 0.0, %v1773
      %v1775 = vpop.f32.mrb[0].mxu0
      %1776 = vdwg.mxu0
      %v1777 = vld [vmem:[%s3] sm:$0x1]
      %v1778 = vmul.f32 %v1774, %v1777
      %v1779 = vld [vmem:[%s4] sm:$0x1]
      %v1780 = vmul.f32 %v1701, %v1778
      %v1781 = vsub.f32 %v1779, %v1780
      %v1782 = vlaneseq
      %v1783 = vshrl.u32 %v1782, 7
      %v1784 = vsub.s32 0, %v1783
      %v1785 = vrot.slane %v1778, %v1784
      %v1786 = vmul.f32 %v1424, %v1785
      %v1787 = vmul.f32 %v1425, %v1785
      %v1788 = vmul.f32 %v1426, %v1785
      %v1789 = vmul.f32 %v1427, %v1785
      %v1790 = vmul.f32 %v1428, %v1785
      %v1791 = vmul.f32 %v1429, %v1785
      %v1792 = vmul.f32 %v1430, %v1785
      %v1793 = vmul.f32 %v1431, %v1785
      %v1795 = vlaneseq
      %v1796 = vshrl.u32 %v1795, 7
      %v1797 = vsub.s32 0, %v1796
      %v1798 = vrot.slane %v1781, %v1797
      %v1800 = vadd.f32 %v1786, %v1798
      %v1801 = vadd.f32 %v1787, %v1798
      %v1802 = vadd.f32 %v1788, %v1798
      %v1803 = vadd.f32 %v1789, %v1798
      %v1804 = vadd.f32 %v1790, %v1798
      %v1805 = vadd.f32 %v1791, %v1798
      %v1806 = vadd.f32 %v1792, %v1798
      %v1807 = vadd.f32 %v1793, %v1798
      %v1808 = vmax.f32 %v1800, 0.0
      %v1809 = vmax.f32 %v1801, 0.0
      %v1810 = vmax.f32 %v1802, 0.0
      %v1811 = vmax.f32 %v1803, 0.0
      %v1812 = vmax.f32 %v1804, 0.0
      %v1813 = vmax.f32 %v1805, 0.0
      %v1814 = vmax.f32 %v1806, 0.0
      %v1815 = vmax.f32 %v1807, 0.0
      %v1816 = vpack.c.bf16 %v1808, %v1808
      %v1817 = vpack.c.bf16 %v1809, %v1809
      %v1818 = vpack.c.bf16 %v1810, %v1810
      %v1819 = vpack.c.bf16 %v1811, %v1811
      %v1820 = vpack.c.bf16 %v1812, %v1812
      %v1821 = vpack.c.bf16 %v1813, %v1813
      %v1822 = vpack.c.bf16 %v1814, %v1814
      %v1823 = vpack.c.bf16 %v1815, %v1815
      %1824 = vst [vmem:[%s278] sm:$0xf] %v1816
      %1825 = vst [vmem:[%s278 + $0x4] sm:$0xf] %v1817
      %1826 = vst [vmem:[%s278 + $0x8] sm:$0xf] %v1818
      %1827 = vst [vmem:[%s278 + $0xc] sm:$0xf] %v1819
      %1828 = vst [vmem:[%s278 + $0x10] sm:$0xf] %v1820
      %1829 = vst [vmem:[%s278 + $0x14] sm:$0xf] %v1821
      %1830 = vst [vmem:[%s278 + $0x18] sm:$0xf] %v1822
      %1831 = vst [vmem:[%s278 + $0x1c] sm:$0xf] %v1823
      %p1832 = scmp.lt.s32.totalorder %s18, 1
      %s1833 = scalar_select %p1832, %s18, 1
      %s1834 = smul.addr %s1833, 8
      %s1835 = smul.addr %s1834, 4
      %s1836 = scalar_lea.vmem %s7, %s1835
      // Predicated region
      $region49: #{_lambda_.2} parent=47 // pred_check
        %p1837 = pneg %p188
      $region50: #{_lambda_.2} parent=47 // pred_check_branch
        %1839 = sbr.rel (%p1837) target = $region52
      $region51: #{_lambda_.2} parent=47 // pred_region
        _
      $region52: #{_lambda_.2} parent=47 // pred_fallthru
        _
    $region48: #{_lambda_.2} parent=5 // pred_fallthru
      _
    %p1840 = scmp.le.s32.totalorder 2, %s13
    // Predicated region
    $region53: #{_lambda_.2} parent=5 // pred_check
      %p1841 = pneg %p1840
    $region54: #{_lambda_.2} parent=5 // pred_check_branch
      %1843 = sbr.rel (%p1841) target = $region56
    $region55: #{_lambda_.2} parent=5 // pred_region
      %s1844 = ssub.s32 %s13, 2
      // Predicated region
      $region57: #{_lambda_.2} parent=55 // pred_check
        %p1845 = pneg %p194
      $region58: #{_lambda_.2} parent=55 // pred_check_branch
        %1847 = sbr.rel (%p1845) target = $region60
      $region59: #{_lambda_.2} parent=55 // pred_region
        %p1848 = scmp.lt.s32.totalorder %s19, 1
        %s1849 = scalar_select %p1848, %s19, 1
        %s1850 = smul.addr %s1849, 8
        %s1851 = smul.addr %s1850, 4
        %s1852 = scalar_lea.vmem %s7, %s1851
      $region60: #{_lambda_.2} parent=55 // pred_fallthru
        _
    $region56: #{_lambda_.2} parent=5 // pred_fallthru
      _
  $region6: #{_lambda_.2} parent=0 // loop_footer
    %s17 = sadd.s32 1, %s13
  $region7: #{_lambda_.2} parent=0 // loop_footer_branch
    %12 = sbr.rel target = $region3
  $region8: #{_lambda_.2} parent=0 // loop_exit
    _

// kernel: _lambda_.3
$region0: #{_lambda_.3}
  #allocation0 [shape = 'u32[]', space=smem, size = 0x4, offset = 0x4, fixed_abs, tag = 'smem constant byte address 0x4 - core index']
  #allocation1 [shape = 'u32[144,128]{1,0:T(1,128)}', space=vmem, size = 0x12000, scoped, tag = 'internal scratch']
  #allocation2 [shape = 'f32[10,10,160]{2,1,0:T(8,128)}', space=vmem, size = 0x28000, scoped, tag = 'scratch operand']
  %s0 = inlined_call_operand.vmem [shape: bf16[2,10,10,160], index: 0, kind: input, shape index: {}]
  %s1 = inlined_call_operand.vmem [shape: bf16[9,160,128], index: 1, kind: input, shape index: {}]
  %s2 = inlined_call_operand.vmem [shape: f32[1,128], index: 2, kind: input, shape index: {}]
  %s3 = inlined_call_operand.vmem [shape: f32[1,128], index: 3, kind: input, shape index: {}]
  %s4 = inlined_call_operand.vmem [shape: f32[1,128], index: 4, kind: input, shape index: {}]
  %s5 = inlined_call_operand.vmem [shape: f32[128,8], index: 5, kind: input, shape index: {}]
  %s6 = inlined_call_operand.vmem [shape: f32[8,128], index: 6, kind: input, shape index: {}]
  %s7 = inlined_call_operand.vmem [shape: f32[2,8,8,128], index: 7, kind: output, shape index: {}]
  %s8 = sld [smem:[#allocation0]]
  $region61: #{_lambda_.3} parent=0
    _
  %s10 = ssub.s32 1, %s8
  %s11 = scalar_select 0, %s10, %s8
  loop: start=0, step=1, limit=4
  $region2: #{_lambda_.3} parent=0 // loop_pre_header
    _
  $region3: #{_lambda_.3} parent=0 // loop_header
    %s13 = sphi 0, %s17
    %p14 = scmp.ge.s32.totalorder %s13, 4
    %s23 = sphi 0, %s25
    %s26 = sphi 0, %s23
    %s27 = sphi 0, %s26
    %s43 = sphi 0, %s27
    %s47 = sphi 0, %s47
    %s49 = sphi 0, %s47
    %s50 = sphi 0, %s49
    %s64 = sphi 0, %s50
    %s68 = sphi 0, %s68
    %s70 = sphi 0, %s68
    %s71 = sphi 0, %s70
    %s85 = sphi 0, %s71
    %s89 = sphi 0, %s89
    %s91 = sphi 0, %s89
    %s92 = sphi 0, %s91
    %s106 = sphi 0, %s92
    %s110 = sphi 0, %s110
    %s112 = sphi 0, %s110
    %s113 = sphi 0, %s112
    %s127 = sphi 0, %s113
    %s131 = sphi 0, %s131
    %s133 = sphi 0, %s131
    %s134 = sphi 0, %s133
    %s148 = sphi 0, %s134
    %s152 = sphi 0, %s152
    %s154 = sphi 0, %s152
    %s155 = sphi 0, %s154
    %s169 = sphi 0, %s155
    %s175 = sphi 0, %s177
    %s178 = sphi 0, %s175
    %s179 = sphi 0, %s178
    %s195 = sphi 0, %s179
  $region4: #{_lambda_.3} parent=0 // loop_header_branch
    %16 = sbr.rel (%p14) target = $region8
  $region5: #{_lambda_.3} parent=0 // loop_body
    %s18 = ssub.s32 %s13, 1
    %s19 = ssub.s32 %s13, 2
    %s20 = sadd.s32 %s13, 1
    %s21 = ssub.s32 %s13, %s20
    %p22 = scmp.eq.s32.totalorder %s21, 0
    %s24 = sadd.s32 %s23, 1
    %s25 = scalar_select %p22, %s23, %s24
    %p28 = pneg %p22
    %p29 = scmp.eq.s32.totalorder %s13, 1
    %p30 = por %p28, %p29
    %p31 = scmp.ne.s32.totalorder %s23, %s26
    %p32 = scmp.eq.s32.totalorder %s13, 0
    %p33 = por %p31, %p32
    %p34 = scmp.ne.s32.totalorder %s23, %s26
    %p35 = scmp.eq.s32.totalorder %s18, 1
    %p36 = por %p34, %p35
    %p37 = scmp.ne.s32.totalorder %s26, %s27
    %p38 = scmp.eq.s32.totalorder %s18, 0
    %p39 = por %p37, %p38
    %p40 = scmp.ne.s32.totalorder %s26, %s27
    %p41 = scmp.eq.s32.totalorder %s19, 1
    %p42 = por %p40, %p41
    %p44 = scmp.ne.s32.totalorder %s27, %s43
    %p45 = scmp.eq.s32.totalorder %s19, 0
    %p46 = por %p44, %p45
    %s48 = sadd.s32 %s47, 1
    %p51 = scmp.eq.s32.totalorder %s13, 1
    %p52 = scmp.ne.s32.totalorder %s47, %s49
    %p53 = scmp.eq.s32.totalorder %s13, 0
    %p54 = por %p52, %p53
    %p55 = scmp.ne.s32.totalorder %s47, %s49
    %p56 = scmp.eq.s32.totalorder %s18, 1
    %p57 = por %p55, %p56
    %p58 = scmp.ne.s32.totalorder %s49, %s50
    %p59 = scmp.eq.s32.totalorder %s18, 0
    %p60 = por %p58, %p59
    %p61 = scmp.ne.s32.totalorder %s49, %s50
    %p62 = scmp.eq.s32.totalorder %s19, 1
    %p63 = por %p61, %p62
    %p65 = scmp.ne.s32.totalorder %s50, %s64
    %p66 = scmp.eq.s32.totalorder %s19, 0
    %p67 = por %p65, %p66
    %s69 = sadd.s32 %s68, 1
    %p72 = scmp.eq.s32.totalorder %s13, 1
    %p73 = scmp.ne.s32.totalorder %s68, %s70
    %p74 = scmp.eq.s32.totalorder %s13, 0
    %p75 = por %p73, %p74
    %p76 = scmp.ne.s32.totalorder %s68, %s70
    %p77 = scmp.eq.s32.totalorder %s18, 1
    %p78 = por %p76, %p77
    %p79 = scmp.ne.s32.totalorder %s70, %s71
    %p80 = scmp.eq.s32.totalorder %s18, 0
    %p81 = por %p79, %p80
    %p82 = scmp.ne.s32.totalorder %s70, %s71
    %p83 = scmp.eq.s32.totalorder %s19, 1
    %p84 = por %p82, %p83
    %p86 = scmp.ne.s32.totalorder %s71, %s85
    %p87 = scmp.eq.s32.totalorder %s19, 0
    %p88 = por %p86, %p87
    %s90 = sadd.s32 %s89, 1
    %p93 = scmp.eq.s32.totalorder %s13, 1
    %p94 = scmp.ne.s32.totalorder %s89, %s91
    %p95 = scmp.eq.s32.totalorder %s13, 0
    %p96 = por %p94, %p95
    %p97 = scmp.ne.s32.totalorder %s89, %s91
    %p98 = scmp.eq.s32.totalorder %s18, 1
    %p99 = por %p97, %p98
    %p100 = scmp.ne.s32.totalorder %s91, %s92
    %p101 = scmp.eq.s32.totalorder %s18, 0
    %p102 = por %p100, %p101
    %p103 = scmp.ne.s32.totalorder %s91, %s92
    %p104 = scmp.eq.s32.totalorder %s19, 1
    %p105 = por %p103, %p104
    %p107 = scmp.ne.s32.totalorder %s92, %s106
    %p108 = scmp.eq.s32.totalorder %s19, 0
    %p109 = por %p107, %p108
    %s111 = sadd.s32 %s110, 1
    %p114 = scmp.eq.s32.totalorder %s13, 1
    %p115 = scmp.ne.s32.totalorder %s110, %s112
    %p116 = scmp.eq.s32.totalorder %s13, 0
    %p117 = por %p115, %p116
    %p118 = scmp.ne.s32.totalorder %s110, %s112
    %p119 = scmp.eq.s32.totalorder %s18, 1
    %p120 = por %p118, %p119
    %p121 = scmp.ne.s32.totalorder %s112, %s113
    %p122 = scmp.eq.s32.totalorder %s18, 0
    %p123 = por %p121, %p122
    %p124 = scmp.ne.s32.totalorder %s112, %s113
    %p125 = scmp.eq.s32.totalorder %s19, 1
    %p126 = por %p124, %p125
    %p128 = scmp.ne.s32.totalorder %s113, %s127
    %p129 = scmp.eq.s32.totalorder %s19, 0
    %p130 = por %p128, %p129
    %s132 = sadd.s32 %s131, 1
    %p135 = scmp.eq.s32.totalorder %s13, 1
    %p136 = scmp.ne.s32.totalorder %s131, %s133
    %p137 = scmp.eq.s32.totalorder %s13, 0
    %p138 = por %p136, %p137
    %p139 = scmp.ne.s32.totalorder %s131, %s133
    %p140 = scmp.eq.s32.totalorder %s18, 1
    %p141 = por %p139, %p140
    %p142 = scmp.ne.s32.totalorder %s133, %s134
    %p143 = scmp.eq.s32.totalorder %s18, 0
    %p144 = por %p142, %p143
    %p145 = scmp.ne.s32.totalorder %s133, %s134
    %p146 = scmp.eq.s32.totalorder %s19, 1
    %p147 = por %p145, %p146
    %p149 = scmp.ne.s32.totalorder %s134, %s148
    %p150 = scmp.eq.s32.totalorder %s19, 0
    %p151 = por %p149, %p150
    %s153 = sadd.s32 %s152, 1
    %p156 = scmp.eq.s32.totalorder %s13, 1
    %p157 = scmp.ne.s32.totalorder %s152, %s154
    %p158 = scmp.eq.s32.totalorder %s13, 0
    %p159 = por %p157, %p158
    %p160 = scmp.ne.s32.totalorder %s152, %s154
    %p161 = scmp.eq.s32.totalorder %s18, 1
    %p162 = por %p160, %p161
    %p163 = scmp.ne.s32.totalorder %s154, %s155
    %p164 = scmp.eq.s32.totalorder %s18, 0
    %p165 = por %p163, %p164
    %p166 = scmp.ne.s32.totalorder %s154, %s155
    %p167 = scmp.eq.s32.totalorder %s19, 1
    %p168 = por %p166, %p167
    %p170 = scmp.ne.s32.totalorder %s155, %s169
    %p171 = scmp.eq.s32.totalorder %s19, 0
    %p172 = por %p170, %p171
    %s173 = ssub.s32 %s13, %s20
    %p174 = scmp.eq.s32.totalorder %s173, 0
    %s176 = sadd.s32 %s175, 1
    %s177 = scalar_select %p174, %s175, %s176
    %p180 = pneg %p174
    %p181 = scmp.eq.s32.totalorder %s13, 1
    %p182 = por %p180, %p181
    %p183 = scmp.ne.s32.totalorder %s175, %s178
    %p184 = scmp.eq.s32.totalorder %s13, 0
    %p185 = por %p183, %p184
    %p186 = scmp.ne.s32.totalorder %s175, %s178
    %p187 = scmp.eq.s32.totalorder %s18, 1
    %p188 = por %p186, %p187
    %p189 = scmp.ne.s32.totalorder %s178, %s179
    %p190 = scmp.eq.s32.totalorder %s18, 0
    %p191 = por %p189, %p190
    %p192 = scmp.ne.s32.totalorder %s178, %s179
    %p193 = scmp.eq.s32.totalorder %s19, 1
    %p194 = por %p192, %p193
    %p196 = scmp.ne.s32.totalorder %s179, %s195
    %p197 = scmp.eq.s32.totalorder %s19, 0
    %p198 = por %p196, %p197
    %p199 = scmp.le.s32.totalorder 1, %s13
    %p200 = scmp.lt.s32.totalorder %s13, 3
    %p201 = pnand %p199, %p200
    %p202 = pneg %p201
    // Predicated region
    $region9: #{_lambda_.3} parent=5 // pred_check
      _
    $region10: #{_lambda_.3} parent=5 // pred_check_branch
      %204 = sbr.rel (%p201) target = $region12
    $region11: #{_lambda_.3} parent=5 // pred_region
      %s205 = ssub.s32 %s13, 1
      // Predicated region
      $region13: #{_lambda_.3} parent=11 // pred_check
        %p206 = pneg %p60
      $region14: #{_lambda_.3} parent=11 // pred_check_branch
        %208 = sbr.rel (%p206) target = $region16
      $region15: #{_lambda_.3} parent=11 // pred_region
        _
      $region16: #{_lambda_.3} parent=11 // pred_fallthru
        _
      // Predicated region
      $region17: #{_lambda_.3} parent=11 // pred_check
        %p209 = pneg %p81
      $region18: #{_lambda_.3} parent=11 // pred_check_branch
        %211 = sbr.rel (%p209) target = $region20
      $region19: #{_lambda_.3} parent=11 // pred_region
        _
      $region20: #{_lambda_.3} parent=11 // pred_fallthru
        _
      // Predicated region
      $region21: #{_lambda_.3} parent=11 // pred_check
        %p212 = pneg %p102
      $region22: #{_lambda_.3} parent=11 // pred_check_branch
        %214 = sbr.rel (%p212) target = $region24
      $region23: #{_lambda_.3} parent=11 // pred_region
        _
      $region24: #{_lambda_.3} parent=11 // pred_fallthru
        _
      // Predicated region
      $region25: #{_lambda_.3} parent=11 // pred_check
        %p215 = pneg %p123
      $region26: #{_lambda_.3} parent=11 // pred_check_branch
        %217 = sbr.rel (%p215) target = $region28
      $region27: #{_lambda_.3} parent=11 // pred_region
        _
      $region28: #{_lambda_.3} parent=11 // pred_fallthru
        _
      // Predicated region
      $region29: #{_lambda_.3} parent=11 // pred_check
        %p218 = pneg %p144
      $region30: #{_lambda_.3} parent=11 // pred_check_branch
        %220 = sbr.rel (%p218) target = $region32
      $region31: #{_lambda_.3} parent=11 // pred_region
        _
      $region32: #{_lambda_.3} parent=11 // pred_fallthru
        _
      // Predicated region
      $region33: #{_lambda_.3} parent=11 // pred_check
        %p221 = pneg %p165
      $region34: #{_lambda_.3} parent=11 // pred_check_branch
        %223 = sbr.rel (%p221) target = $region36
      $region35: #{_lambda_.3} parent=11 // pred_region
        _
      $region36: #{_lambda_.3} parent=11 // pred_fallthru
        _
    $region12: #{_lambda_.3} parent=5 // pred_fallthru
      _
    %p224 = scmp.lt.s32.totalorder %s13, 2
    // Predicated region
    $region37: #{_lambda_.3} parent=5 // pred_check
      %p225 = pneg %p224
    $region38: #{_lambda_.3} parent=5 // pred_check_branch
      %227 = sbr.rel (%p225) target = $region40
    $region39: #{_lambda_.3} parent=5 // pred_region
      // Predicated region
      $region41: #{_lambda_.3} parent=39 // pred_check
        %p228 = pneg %p33
      $region42: #{_lambda_.3} parent=39 // pred_check_branch
        %230 = sbr.rel (%p228) target = $region44
      $region43: #{_lambda_.3} parent=39 // pred_region
        %p231 = scmp.lt.s32.totalorder %s13, 1
        %s232 = scalar_select %p231, %s13, 1
        %s233 = smul.addr %s232, 40
        %s234 = smul.addr %s233, 4
        %s235 = scalar_lea.vmem %s0, %s234
      $region44: #{_lambda_.3} parent=39 // pred_fallthru
        _
    $region40: #{_lambda_.3} parent=5 // pred_fallthru
      _
    %p236 = scmp.le.s32.totalorder 1, %s13
    %p237 = scmp.lt.s32.totalorder %s13, 3
    %p238 = pnand %p236, %p237
    %p239 = pneg %p238
    // Predicated region
    $region45: #{_lambda_.3} parent=5 // pred_check
      _
    $region46: #{_lambda_.3} parent=5 // pred_check_branch
      %241 = sbr.rel (%p238) target = $region48
    $region47: #{_lambda_.3} parent=5 // pred_region
      %s242 = ssub.s32 %s13, 1
      %p243 = scmp.lt.s32.totalorder %s18, 1
      %s244 = scalar_select %p243, %s18, 1
      %s245 = smul.addr %s244, 40
      %s246 = smul.addr %s245, 4
      %s247 = scalar_lea.vmem %s0, %s246
      %p248 = pneg %p39
      %p249 = pneg %p36
      %p250 = pneg %p60
      %p251 = pneg %p57
      %p252 = pneg %p81
      %p253 = pneg %p78
      %p254 = pneg %p102
      %p255 = pneg %p99
      %p256 = pneg %p123
      %p257 = pneg %p120
      %p258 = pneg %p144
      %p259 = pneg %p141
      %p260 = pneg %p165
      %p261 = pneg %p162
      %p262 = pneg %p191
      %p263 = pneg %p188
      %p264 = scmp.lt.s32.totalorder %s18, 1
      %s265 = scalar_select %p264, %s18, 1
      %s266 = smul.addr %s265, 8
      %s267 = smul.addr %s266, 8
      %s268 = scalar_lea.vmem %s7, %s267
      %p269 = scmp.lt.s32.totalorder %s18, 1
      %s270 = scalar_select %p269, %s18, 1
      %s271 = smul.addr %s270, 40
      %s272 = smul.addr %s271, 4
      %s273 = scalar_lea.vmem %s0, %s272
      %p274 = scmp.lt.s32.totalorder %s18, 1
      %s275 = scalar_select %p274, %s18, 1
      %s276 = smul.addr %s275, 8
      %s277 = smul.addr %s276, 8
      %s278 = scalar_lea.vmem %s7, %s277
      %v280 = vld [vmem:[%s273] sm:$0xff]
      %v281 = vld [vmem:[%s273 + $0x8] sm:$0x11]
      %v282 = vld [vmem:[%s273 + $0x10] sm:$0xff]
      %v283 = vld [vmem:[%s273 + $0x18] sm:$0x11]
      %v284 = vld [vmem:[%s273 + $0x20] sm:$0xff]
      %v285 = vld [vmem:[%s273 + $0x28] sm:$0x11]
      %v286 = vld [vmem:[%s273 + $0x30] sm:$0xff]
      %v287 = vld [vmem:[%s273 + $0x38] sm:$0x11]
      %v288 = vld [vmem:[%s273 + $0x40] sm:$0xff]
      %v289 = vld [vmem:[%s273 + $0x48] sm:$0x11]
      %v290 = vld [vmem:[%s273 + $0x50] sm:$0xff]
      %v291 = vld [vmem:[%s273 + $0x58] sm:$0x11]
      %v292 = vld [vmem:[%s273 + $0x60] sm:$0xff]
      %v293 = vld [vmem:[%s273 + $0x68] sm:$0x11]
      %v294 = vld [vmem:[%s273 + $0x70] sm:$0xff]
      %v295 = vld [vmem:[%s273 + $0x78] sm:$0x11]
      %v296 = vld [vmem:[%s273 + $0x80] sm:$0xff]
      %v297 = vld [vmem:[%s273 + $0x88] sm:$0x11]
      %v298 = vld [vmem:[%s273 + $0x90] sm:$0xff]
      %v299 = vld [vmem:[%s273 + $0x98] sm:$0x11]
      %v300 = vunpack.c.l.bf16 %v280
      %v301 = vunpack.c.h.bf16 %v280
      %v302 = vunpack.c.l.bf16 %v281
      %v303 = vunpack.c.h.bf16 %v281
      %v304 = vunpack.c.l.bf16 %v282
      %v305 = vunpack.c.h.bf16 %v282
      %v306 = vunpack.c.l.bf16 %v283
      %v307 = vunpack.c.h.bf16 %v283
      %v308 = vunpack.c.l.bf16 %v284
      %v309 = vunpack.c.h.bf16 %v284
      %v310 = vunpack.c.l.bf16 %v285
      %v311 = vunpack.c.h.bf16 %v285
      %v312 = vunpack.c.l.bf16 %v286
      %v313 = vunpack.c.h.bf16 %v286
      %v314 = vunpack.c.l.bf16 %v287
      %v315 = vunpack.c.h.bf16 %v287
      %v316 = vunpack.c.l.bf16 %v288
      %v317 = vunpack.c.h.bf16 %v288
      %v318 = vunpack.c.l.bf16 %v289
      %v319 = vunpack.c.h.bf16 %v289
      %v320 = vunpack.c.l.bf16 %v290
      %v321 = vunpack.c.h.bf16 %v290
      %v322 = vunpack.c.l.bf16 %v291
      %v323 = vunpack.c.h.bf16 %v291
      %v324 = vunpack.c.l.bf16 %v292
      %v325 = vunpack.c.h.bf16 %v292
      %v326 = vunpack.c.l.bf16 %v293
      %v327 = vunpack.c.h.bf16 %v293
      %v328 = vunpack.c.l.bf16 %v294
      %v329 = vunpack.c.h.bf16 %v294
      %v330 = vunpack.c.l.bf16 %v295
      %v331 = vunpack.c.h.bf16 %v295
      %v332 = vunpack.c.l.bf16 %v296
      %v333 = vunpack.c.h.bf16 %v296
      %v334 = vunpack.c.l.bf16 %v297
      %v335 = vunpack.c.h.bf16 %v297
      %v336 = vunpack.c.l.bf16 %v298
      %v337 = vunpack.c.h.bf16 %v298
      %v338 = vunpack.c.l.bf16 %v299
      %v339 = vunpack.c.h.bf16 %v299
      %340 = vst [vmem:[#allocation2] sm:$0xff] %v300
      %vm341 = vcmask 261120
      %342 = vst.msk [vmem:[#allocation2 + $0x8] sm:$0xff] %vm341, %v301
      %343 = vst [vmem:[#allocation2 + $0x10] sm:$0x3] %v302
      %vm344 = vcmask 254976
      %345 = vst.msk [vmem:[#allocation2 + $0x18] sm:$0x3] %vm344, %v303
      %346 = vst [vmem:[#allocation2 + $0x20] sm:$0xff] %v304
      %347 = vst.msk [vmem:[#allocation2 + $0x28] sm:$0xff] %vm341, %v305
      %348 = vst [vmem:[#allocation2 + $0x30] sm:$0x3] %v306
      %349 = vst.msk [vmem:[#allocation2 + $0x38] sm:$0x3] %vm344, %v307
      %350 = vst [vmem:[#allocation2 + $0x40] sm:$0xff] %v308
      %351 = vst.msk [vmem:[#allocation2 + $0x48] sm:$0xff] %vm341, %v309
      %352 = vst [vmem:[#allocation2 + $0x50] sm:$0x3] %v310
      %353 = vst.msk [vmem:[#allocation2 + $0x58] sm:$0x3] %vm344, %v311
      %354 = vst [vmem:[#allocation2 + $0x60] sm:$0xff] %v312
      %355 = vst.msk [vmem:[#allocation2 + $0x68] sm:$0xff] %vm341, %v313
      %356 = vst [vmem:[#allocation2 + $0x70] sm:$0x3] %v314
      %357 = vst.msk [vmem:[#allocation2 + $0x78] sm:$0x3] %vm344, %v315
      %358 = vst [vmem:[#allocation2 + $0x80] sm:$0xff] %v316
      %359 = vst.msk [vmem:[#allocation2 + $0x88] sm:$0xff] %vm341, %v317
      %360 = vst [vmem:[#allocation2 + $0x90] sm:$0x3] %v318
      %361 = vst.msk [vmem:[#allocation2 + $0x98] sm:$0x3] %vm344, %v319
      %362 = vst [vmem:[#allocation2 + $0xa0] sm:$0xff] %v320
      %363 = vst.msk [vmem:[#allocation2 + $0xa8] sm:$0xff] %vm341, %v321
      %364 = vst [vmem:[#allocation2 + $0xb0] sm:$0x3] %v322
      %365 = vst.msk [vmem:[#allocation2 + $0xb8] sm:$0x3] %vm344, %v323
      %366 = vst [vmem:[#allocation2 + $0xc0] sm:$0xff] %v324
      %367 = vst.msk [vmem:[#allocation2 + $0xc8] sm:$0xff] %vm341, %v325
      %368 = vst [vmem:[#allocation2 + $0xd0] sm:$0x3] %v326
      %369 = vst.msk [vmem:[#allocation2 + $0xd8] sm:$0x3] %vm344, %v327
      %370 = vst [vmem:[#allocation2 + $0xe0] sm:$0xff] %v328
      %371 = vst.msk [vmem:[#allocation2 + $0xe8] sm:$0xff] %vm341, %v329
      %372 = vst [vmem:[#allocation2 + $0xf0] sm:$0x3] %v330
      %373 = vst.msk [vmem:[#allocation2 + $0xf8] sm:$0x3] %vm344, %v331
      %374 = vst [vmem:[#allocation2 + $0x100] sm:$0xff] %v332
      %375 = vst.msk [vmem:[#allocation2 + $0x108] sm:$0xff] %vm341, %v333
      %376 = vst [vmem:[#allocation2 + $0x110] sm:$0x3] %v334
      %377 = vst.msk [vmem:[#allocation2 + $0x118] sm:$0x3] %vm344, %v335
      %378 = vst [vmem:[#allocation2 + $0x120] sm:$0xff] %v336
      %379 = vst.msk [vmem:[#allocation2 + $0x128] sm:$0xff] %vm341, %v337
      %380 = vst [vmem:[#allocation2 + $0x130] sm:$0x3] %v338
      %381 = vst.msk [vmem:[#allocation2 + $0x138] sm:$0x3] %vm344, %v339
      %v382 = vld [vmem:[#allocation2] sm:$0xff]
      %v383 = vld [vmem:[#allocation2 + $0x8] sm:$0xff]
      %v384 = vld [vmem:[#allocation2 + $0x20] sm:$0xff]
      %v385 = vld [vmem:[#allocation2 + $0x28] sm:$0xff]
      %v386 = vld [vmem:[#allocation2 + $0x40] sm:$0xff]
      %v387 = vld [vmem:[#allocation2 + $0x48] sm:$0xff]
      %v388 = vld [vmem:[#allocation2 + $0x60] sm:$0xff]
      %v389 = vld [vmem:[#allocation2 + $0x68] sm:$0xff]
      %v390 = vld [vmem:[#allocation2 + $0x80] sm:$0xff]
      %v391 = vld [vmem:[#allocation2 + $0x88] sm:$0xff]
      %v392 = vld [vmem:[#allocation2 + $0xa0] sm:$0xff]
      %v393 = vld [vmem:[#allocation2 + $0xa8] sm:$0xff]
      %v394 = vld [vmem:[#allocation2 + $0xc0] sm:$0xff]
      %v395 = vld [vmem:[#allocation2 + $0xc8] sm:$0xff]
      %v396 = vld [vmem:[#allocation2 + $0xe0] sm:$0xff]
      %v397 = vld [vmem:[#allocation2 + $0xe8] sm:$0xff]
      %v398 = vpack.c.bf16 %v384, %v382
      %v399 = vpack.c.bf16 %v385, %v383
      %v400 = vpack.c.bf16 %v388, %v386
      %v401 = vpack.c.bf16 %v389, %v387
      %v402 = vpack.c.bf16 %v392, %v390
      %v403 = vpack.c.bf16 %v393, %v391
      %v404 = vpack.c.bf16 %v396, %v394
      %v405 = vpack.c.bf16 %v397, %v395
      %v406 = vld [vmem:[%s1] sm:$0xf]
      %v407 = vld [vmem:[%s1 + $0x4] sm:$0xf]
      %v408 = vld [vmem:[%s1 + $0x8] sm:$0xf]
      %v409 = vld [vmem:[%s1 + $0xc] sm:$0xf]
      %v410 = vld [vmem:[%s1 + $0x10] sm:$0xf]
      %v411 = vld [vmem:[%s1 + $0x14] sm:$0xf]
      %v412 = vld [vmem:[%s1 + $0x18] sm:$0xf]
      %v413 = vld [vmem:[%s1 + $0x1c] sm:$0xf]
      %v414 = vld [vmem:[%s1 + $0x20] sm:$0xf]
      %v415 = vld [vmem:[%s1 + $0x24] sm:$0xf]
      %v416 = vld [vmem:[%s1 + $0x28] sm:$0xf]
      %v417 = vld [vmem:[%s1 + $0x2c] sm:$0xf]
      %v418 = vld [vmem:[%s1 + $0x30] sm:$0xf]
      %v419 = vld [vmem:[%s1 + $0x34] sm:$0xf]
      %v420 = vld [vmem:[%s1 + $0x38] sm:$0xf]
      %v421 = vld [vmem:[%s1 + $0x3c] sm:$0xf]
      %v422 = vld [vmem:[%s1 + $0x40] sm:$0xf]
      %v423 = vld [vmem:[%s1 + $0x44] sm:$0xf]
      %v424 = vld [vmem:[%s1 + $0x48] sm:$0xf]
      %v425 = vld [vmem:[%s1 + $0x4c] sm:$0xf]
      %v426 = vld [vmem:[#allocation2] sm:$0xfe]
      %v427 = vld [vmem:[#allocation2 + $0x8] sm:$0xfe]
      %v428 = vld [vmem:[#allocation2 + $0x10] sm:$0x1]
      %v429 = vld [vmem:[#allocation2 + $0x18] sm:$0x1]
      %v430 = vld [vmem:[#allocation2 + $0x20] sm:$0xfe]
      %v431 = vld [vmem:[#allocation2 + $0x28] sm:$0xfe]
      %v432 = vld [vmem:[#allocation2 + $0x30] sm:$0x1]
      %v433 = vld [vmem:[#allocation2 + $0x38] sm:$0x1]
      %v434 = vld [vmem:[#allocation2 + $0x40] sm:$0xfe]
      %v435 = vld [vmem:[#allocation2 + $0x48] sm:$0xfe]
      %v436 = vld [vmem:[#allocation2 + $0x50] sm:$0x1]
      %v437 = vld [vmem:[#allocation2 + $0x58] sm:$0x1]
      %v438 = vld [vmem:[#allocation2 + $0x60] sm:$0xfe]
      %v439 = vld [vmem:[#allocation2 + $0x68] sm:$0xfe]
      %v440 = vld [vmem:[#allocation2 + $0x70] sm:$0x1]
      %v441 = vld [vmem:[#allocation2 + $0x78] sm:$0x1]
      %v442 = vld [vmem:[#allocation2 + $0x80] sm:$0xfe]
      %v443 = vld [vmem:[#allocation2 + $0x88] sm:$0xfe]
      %v444 = vld [vmem:[#allocation2 + $0x90] sm:$0x1]
      %v445 = vld [vmem:[#allocation2 + $0x98] sm:$0x1]
      %v446 = vld [vmem:[#allocation2 + $0xa0] sm:$0xfe]
      %v447 = vld [vmem:[#allocation2 + $0xa8] sm:$0xfe]
      %v448 = vld [vmem:[#allocation2 + $0xb0] sm:$0x1]
      %v449 = vld [vmem:[#allocation2 + $0xb8] sm:$0x1]
      %v450 = vld [vmem:[#allocation2 + $0xc0] sm:$0xfe]
      %v451 = vld [vmem:[#allocation2 + $0xc8] sm:$0xfe]
      %v452 = vld [vmem:[#allocation2 + $0xd0] sm:$0x1]
      %v453 = vld [vmem:[#allocation2 + $0xd8] sm:$0x1]
      %v454 = vld [vmem:[#allocation2 + $0xe0] sm:$0xfe]
      %v455 = vld [vmem:[#allocation2 + $0xe8] sm:$0xfe]
      %v456 = vld [vmem:[#allocation2 + $0xf0] sm:$0x1]
      %v457 = vld [vmem:[#allocation2 + $0xf8] sm:$0x1]
      %vm490 = vcmask 1046528
      %v491 = vrot.slane %v426, 1
      %v492 = vrot.slane %v428, 1
      %v493 = vsel %vm490, %v491, %v492
      %v494 = vrot.slane %v427, 1
      %v495 = vrot.slane %v429, 1
      %v496 = vsel %vm490, %v494, %v495
      %v497 = vrot.slane %v430, 1
      %v498 = vrot.slane %v432, 1
      %v499 = vsel %vm490, %v497, %v498
      %v500 = vrot.slane %v431, 1
      %v501 = vrot.slane %v433, 1
      %v502 = vsel %vm490, %v500, %v501
      %v503 = vrot.slane %v434, 1
      %v504 = vrot.slane %v436, 1
      %v505 = vsel %vm490, %v503, %v504
      %v506 = vrot.slane %v435, 1
      %v507 = vrot.slane %v437, 1
      %v508 = vsel %vm490, %v506, %v507
      %v509 = vrot.slane %v438, 1
      %v510 = vrot.slane %v440, 1
      %v511 = vsel %vm490, %v509, %v510
      %v512 = vrot.slane %v439, 1
      %v513 = vrot.slane %v441, 1
      %v514 = vsel %vm490, %v512, %v513
      %v515 = vrot.slane %v442, 1
      %v516 = vrot.slane %v444, 1
      %v517 = vsel %vm490, %v515, %v516
      %v518 = vrot.slane %v443, 1
      %v519 = vrot.slane %v445, 1
      %v520 = vsel %vm490, %v518, %v519
      %v521 = vrot.slane %v446, 1
      %v522 = vrot.slane %v448, 1
      %v523 = vsel %vm490, %v521, %v522
      %v524 = vrot.slane %v447, 1
      %v525 = vrot.slane %v449, 1
      %v526 = vsel %vm490, %v524, %v525
      %v527 = vrot.slane %v450, 1
      %v528 = vrot.slane %v452, 1
      %v529 = vsel %vm490, %v527, %v528
      %v530 = vrot.slane %v451, 1
      %v531 = vrot.slane %v453, 1
      %v532 = vsel %vm490, %v530, %v531
      %v533 = vrot.slane %v454, 1
      %v534 = vrot.slane %v456, 1
      %v535 = vsel %vm490, %v533, %v534
      %v536 = vrot.slane %v455, 1
      %v537 = vrot.slane %v457, 1
      %v538 = vsel %vm490, %v536, %v537
      %v555 = vpack.c.bf16 %v499, %v493
      %v556 = vpack.c.bf16 %v502, %v496
      %v557 = vpack.c.bf16 %v511, %v505
      %v558 = vpack.c.bf16 %v514, %v508
      %v559 = vpack.c.bf16 %v523, %v517
      %v560 = vpack.c.bf16 %v526, %v520
      %v561 = vpack.c.bf16 %v535, %v529
      %v562 = vpack.c.bf16 %v538, %v532
      %s563 = scalar_lea.vmem %s1, 80
      %v564 = vld [vmem:[%s563] sm:$0xf]
      %v565 = vld [vmem:[%s563 + $0x4] sm:$0xf]
      %v566 = vld [vmem:[%s563 + $0x8] sm:$0xf]
      %v567 = vld [vmem:[%s563 + $0xc] sm:$0xf]
      %v568 = vld [vmem:[%s563 + $0x10] sm:$0xf]
      %v569 = vld [vmem:[%s563 + $0x14] sm:$0xf]
      %v570 = vld [vmem:[%s563 + $0x18] sm:$0xf]
      %v571 = vld [vmem:[%s563 + $0x1c] sm:$0xf]
      %v572 = vld [vmem:[%s563 + $0x20] sm:$0xf]
      %v573 = vld [vmem:[%s563 + $0x24] sm:$0xf]
      %v574 = vld [vmem:[%s563 + $0x28] sm:$0xf]
      %v575 = vld [vmem:[%s563 + $0x2c] sm:$0xf]
      %v576 = vld [vmem:[%s563 + $0x30] sm:$0xf]
      %v577 = vld [vmem:[%s563 + $0x34] sm:$0xf]
      %v578 = vld [vmem:[%s563 + $0x38] sm:$0xf]
      %v579 = vld [vmem:[%s563 + $0x3c] sm:$0xf]
      %v580 = vld [vmem:[%s563 + $0x40] sm:$0xf]
      %v581 = vld [vmem:[%s563 + $0x44] sm:$0xf]
      %v582 = vld [vmem:[%s563 + $0x48] sm:$0xf]
      %v583 = vld [vmem:[%s563 + $0x4c] sm:$0xf]
      %v604 = vunpack.c.l.b16 %v564
      %v605 = vunpack.c.l.b16 %v565
      %v606 = vunpack.c.l.b16 %v566
      %v607 = vunpack.c.l.b16 %v567
      %v608 = vunpack.c.l.b16 %v568
      %v609 = vunpack.c.l.b16 %v569
      %v610 = vunpack.c.l.b16 %v570
      %v611 = vunpack.c.l.b16 %v571
      %v612 = vunpack.c.l.b16 %v572
      %v613 = vunpack.c.l.b16 %v573
      %v614 = vunpack.c.l.b16 %v574
      %v615 = vunpack.c.l.b16 %v575
      %v616 = vunpack.c.l.b16 %v576
      %v617 = vunpack.c.l.b16 %v577
      %v618 = vunpack.c.l.b16 %v578
      %v619 = vunpack.c.l.b16 %v579
      %v620 = vunpack.c.l.b16 %v580
      %v621 = vunpack.c.l.b16 %v581
      %v622 = vunpack.c.l.b16 %v582
      %v623 = vunpack.c.l.b16 %v583
      %v624 = vpack.c.b16 %v605, %v604
      %v625 = vpack.c.b16 %v607, %v606
      %v626 = vpack.c.b16 %v609, %v608
      %v627 = vpack.c.b16 %v611, %v610
      %v628 = vpack.c.b16 %v613, %v612
      %v629 = vpack.c.b16 %v615, %v614
      %v630 = vpack.c.b16 %v617, %v616
      %v631 = vpack.c.b16 %v619, %v618
      %v632 = vpack.c.b16 %v621, %v620
      %v633 = vpack.c.b16 %v623, %v622
      %v645 = vsel %vm341, %v556, 0
      %v648 = vsel %vm341, %v558, 0
      %v651 = vsel %vm341, %v560, 0
      %v654 = vsel %vm341, %v562, 0
      %656 = vmatprep.subr.bf16.mxu0 0
      %657 = vmatpush1.bf16.msra.mxu0 %v624
      %658 = vmatprep.subr.bf16.mxu0 0
      %659 = vmatpush1.bf16.msra.mxu0 %v625
      %660 = vmatprep.subr.bf16.mxu0 0
      %661 = vmatpush1.bf16.msra.mxu0 %v626
      %662 = vmatprep.subr.bf16.mxu0 0
      %663 = vmatpush1.bf16.msra.mxu0 %v627
      %664 = vmatprep.subr.bf16.mxu0 0
      %665 = vmatpush1.bf16.msra.mxu0 %v628
      %666 = vmatprep.subr.bf16.mxu0 0
      %667 = vmatpush1.bf16.msra.mxu0 %v629
      %668 = vmatprep.subr.bf16.mxu0 0
      %669 = vmatpush1.bf16.msra.mxu0 %v630
      %670 = vmatprep.subr.bf16.mxu0 0
      %671 = vmatpush1.bf16.msra.mxu0 %v631
      %672 = vmatprep.subr.bf16.mxu0 0
      %673 = vmatpush1.bf16.msra.mxu0 %v632
      %674 = vmatprep.subr.bf16.mxu0 0
      %675 = vmatpush1.bf16.msra.mxu0 %v633
      %676 = vmatprep.subr.bf16.mxu0 0
      %677 = vmatpush1.bf16.msra.mxu0 0
      %678 = vmatprep.subr.bf16.mxu0 0
      %679 = vmatpush1.bf16.msra.mxu0 0
      %680 = vmatprep.subr.bf16.mxu0 0
      %681 = vmatpush1.bf16.msra.mxu0 0
      %682 = vmatprep.subr.bf16.mxu0 0
      %683 = vmatpush1.bf16.msra.mxu0 0
      %684 = vmatprep.subr.bf16.mxu0 0
      %685 = vmatpush1.bf16.msra.mxu0 0
      %686 = vmatprep.subr.bf16.mxu0 0
      %687 = vmatpush1.bf16.msra.mxu0 0
      %688 = vmatprep.mubr.bf16.mxu0 %v645
      %689 = vmatmul.mubr.bf16.gmra.mrb[0].mxu0 %v555
      %v690 = vpop.f32.mrb[0].mxu0
      %v691 = vadd.f32 0.0, %v690
      %v692 = vpop.f32.mrb[0].mxu0
      %v693 = vpop.f32.mrb[0].mxu0
      %v694 = vadd.f32 0.0, %v693
      %v695 = vpop.f32.mrb[0].mxu0
      %696 = vmatprep.mubr.bf16.mxu0 %v648
      %697 = vmatmul.mubr.bf16.gmra.mrb[0].mxu0 %v557
      %v698 = vpop.f32.mrb[0].mxu0
      %v699 = vadd.f32 0.0, %v698
      %v700 = vpop.f32.mrb[0].mxu0
      %v701 = vpop.f32.mrb[0].mxu0
      %v702 = vadd.f32 0.0, %v701
      %v703 = vpop.f32.mrb[0].mxu0
      %704 = vmatprep.mubr.bf16.mxu0 %v651
      %705 = vmatmul.mubr.bf16.gmra.mrb[0].mxu0 %v559
      %v706 = vpop.f32.mrb[0].mxu0
      %v707 = vadd.f32 0.0, %v706
      %v708 = vpop.f32.mrb[0].mxu0
      %v709 = vpop.f32.mrb[0].mxu0
      %v710 = vadd.f32 0.0, %v709
      %v711 = vpop.f32.mrb[0].mxu0
      %712 = vmatprep.mubr.bf16.mxu0 %v654
      %713 = vmatmul.mubr.bf16.gmra.mrb[0].mxu0 %v561
      %v714 = vpop.f32.mrb[0].mxu0
      %v715 = vadd.f32 0.0, %v714
      %v716 = vpop.f32.mrb[0].mxu0
      %v717 = vpop.f32.mrb[0].mxu0
      %v718 = vadd.f32 0.0, %v717
      %v719 = vpop.f32.mrb[0].mxu0
      %720 = vdwg.mxu0
      %v741 = vunpack.c.l.b16 %v406
      %v742 = vunpack.c.l.b16 %v407
      %v743 = vunpack.c.l.b16 %v408
      %v744 = vunpack.c.l.b16 %v409
      %v745 = vunpack.c.l.b16 %v410
      %v746 = vunpack.c.l.b16 %v411
      %v747 = vunpack.c.l.b16 %v412
      %v748 = vunpack.c.l.b16 %v413
      %v749 = vunpack.c.l.b16 %v414
      %v750 = vunpack.c.l.b16 %v415
      %v751 = vunpack.c.l.b16 %v416
      %v752 = vunpack.c.l.b16 %v417
      %v753 = vunpack.c.l.b16 %v418
      %v754 = vunpack.c.l.b16 %v419
      %v755 = vunpack.c.l.b16 %v420
      %v756 = vunpack.c.l.b16 %v421
      %v757 = vunpack.c.l.b16 %v422
      %v758 = vunpack.c.l.b16 %v423
      %v759 = vunpack.c.l.b16 %v424
      %v760 = vunpack.c.l.b16 %v425
      %v761 = vpack.c.b16 %v742, %v741
      %v762 = vpack.c.b16 %v744, %v743
      %v763 = vpack.c.b16 %v746, %v745
      %v764 = vpack.c.b16 %v748, %v747
      %v765 = vpack.c.b16 %v750, %v749
      %v766 = vpack.c.b16 %v752, %v751
      %v767 = vpack.c.b16 %v754, %v753
      %v768 = vpack.c.b16 %v756, %v755
      %v769 = vpack.c.b16 %v758, %v757
      %v770 = vpack.c.b16 %v760, %v759
      %v782 = vsel %vm341, %v399, 0
      %v785 = vsel %vm341, %v401, 0
      %v788 = vsel %vm341, %v403, 0
      %v791 = vsel %vm341, %v405, 0
      %793 = vmatprep.subr.bf16.mxu0 0
      %794 = vmatpush1.bf16.msra.mxu0 %v761
      %795 = vmatprep.subr.bf16.mxu0 0
      %796 = vmatpush1.bf16.msra.mxu0 %v762
      %797 = vmatprep.subr.bf16.mxu0 0
      %798 = vmatpush1.bf16.msra.mxu0 %v763
      %799 = vmatprep.subr.bf16.mxu0 0
      %800 = vmatpush1.bf16.msra.mxu0 %v764
      %801 = vmatprep.subr.bf16.mxu0 0
      %802 = vmatpush1.bf16.msra.mxu0 %v765
      %803 = vmatprep.subr.bf16.mxu0 0
      %804 = vmatpush1.bf16.msra.mxu0 %v766
      %805 = vmatprep.subr.bf16.mxu0 0
      %806 = vmatpush1.bf16.msra.mxu0 %v767
      %807 = vmatprep.subr.bf16.mxu0 0
      %808 = vmatpush1.bf16.msra.mxu0 %v768
      %809 = vmatprep.subr.bf16.mxu0 0
      %810 = vmatpush1.bf16.msra.mxu0 %v769
      %811 = vmatprep.subr.bf16.mxu0 0
      %812 = vmatpush1.bf16.msra.mxu0 %v770
      %813 = vmatprep.subr.bf16.mxu0 0
      %814 = vmatpush1.bf16.msra.mxu0 0
      %815 = vmatprep.subr.bf16.mxu0 0
      %816 = vmatpush1.bf16.msra.mxu0 0
      %817 = vmatprep.subr.bf16.mxu0 0
      %818 = vmatpush1.bf16.msra.mxu0 0
      %819 = vmatprep.subr.bf16.mxu0 0
      %820 = vmatpush1.bf16.msra.mxu0 0
      %821 = vmatprep.subr.bf16.mxu0 0
      %822 = vmatpush1.bf16.msra.mxu0 0
      %823 = vmatprep.subr.bf16.mxu0 0
      %824 = vmatpush1.bf16.msra.mxu0 0
      %825 = vmatprep.mubr.bf16.mxu0 %v782
      %826 = vmatmul.mubr.bf16.gmra.mrb[0].mxu0 %v398
      %v827 = vpop.f32.mrb[0].mxu0
      %v828 = vadd.f32 %v691, %v827
      %v829 = vpop.f32.mrb[0].mxu0
      %v830 = vpop.f32.mrb[0].mxu0
      %v831 = vadd.f32 %v694, %v830
      %v832 = vpop.f32.mrb[0].mxu0
      %833 = vmatprep.mubr.bf16.mxu0 %v785
      %834 = vmatmul.mubr.bf16.gmra.mrb[0].mxu0 %v400
      %v835 = vpop.f32.mrb[0].mxu0
      %v836 = vadd.f32 %v699, %v835
      %v837 = vpop.f32.mrb[0].mxu0
      %v838 = vpop.f32.mrb[0].mxu0
      %v839 = vadd.f32 %v702, %v838
      %v840 = vpop.f32.mrb[0].mxu0
      %841 = vmatprep.mubr.bf16.mxu0 %v788
      %842 = vmatmul.mubr.bf16.gmra.mrb[0].mxu0 %v402
      %v843 = vpop.f32.mrb[0].mxu0
      %v844 = vadd.f32 %v707, %v843
      %v845 = vpop.f32.mrb[0].mxu0
      %v846 = vpop.f32.mrb[0].mxu0
      %v847 = vadd.f32 %v710, %v846
      %v848 = vpop.f32.mrb[0].mxu0
      %849 = vmatprep.mubr.bf16.mxu0 %v791
      %850 = vmatmul.mubr.bf16.gmra.mrb[0].mxu0 %v404
      %v851 = vpop.f32.mrb[0].mxu0
      %v852 = vadd.f32 %v715, %v851
      %v853 = vpop.f32.mrb[0].mxu0
      %v854 = vpop.f32.mrb[0].mxu0
      %v855 = vadd.f32 %v718, %v854
      %v856 = vpop.f32.mrb[0].mxu0
      %857 = vdwg.mxu0
      %v858 = vld [vmem:[#allocation2] sm:$0xfc]
      %v859 = vld [vmem:[#allocation2 + $0x8] sm:$0xfc]
      %v860 = vld [vmem:[#allocation2 + $0x10] sm:$0x3]
      %v861 = vld [vmem:[#allocation2 + $0x18] sm:$0x3]
      %v862 = vld [vmem:[#allocation2 + $0x20] sm:$0xfc]
      %v863 = vld [vmem:[#allocation2 + $0x28] sm:$0xfc]
      %v864 = vld [vmem:[#allocation2 + $0x30] sm:$0x3]
      %v865 = vld [vmem:[#allocation2 + $0x38] sm:$0x3]
      %v866 = vld [vmem:[#allocation2 + $0x40] sm:$0xfc]
      %v867 = vld [vmem:[#allocation2 + $0x48] sm:$0xfc]
      %v868 = vld [vmem:[#allocation2 + $0x50] sm:$0x3]
      %v869 = vld [vmem:[#allocation2 + $0x58] sm:$0x3]
      %v870 = vld [vmem:[#allocation2 + $0x60] sm:$0xfc]
      %v871 = vld [vmem:[#allocation2 + $0x68] sm:$0xfc]
      %v872 = vld [vmem:[#allocation2 + $0x70] sm:$0x3]
      %v873 = vld [vmem:[#allocation2 + $0x78] sm:$0x3]
      %v874 = vld [vmem:[#allocation2 + $0x80] sm:$0xfc]
      %v875 = vld [vmem:[#allocation2 + $0x88] sm:$0xfc]
      %v876 = vld [vmem:[#allocation2 + $0x90] sm:$0x3]
      %v877 = vld [vmem:[#allocation2 + $0x98] sm:$0x3]
      %v878 = vld [vmem:[#allocation2 + $0xa0] sm:$0xfc]
      %v879 = vld [vmem:[#allocation2 + $0xa8] sm:$0xfc]
      %v880 = vld [vmem:[#allocation2 + $0xb0] sm:$0x3]
      %v881 = vld [vmem:[#allocation2 + $0xb8] sm:$0x3]
      %v882 = vld [vmem:[#allocation2 + $0xc0] sm:$0xfc]
      %v883 = vld [vmem:[#allocation2 + $0xc8] sm:$0xfc]
      %v884 = vld [vmem:[#allocation2 + $0xd0] sm:$0x3]
      %v885 = vld [vmem:[#allocation2 + $0xd8] sm:$0x3]
      %v886 = vld [vmem:[#allocation2 + $0xe0] sm:$0xfc]
      %v887 = vld [vmem:[#allocation2 + $0xe8] sm:$0xfc]
      %v888 = vld [vmem:[#allocation2 + $0xf0] sm:$0x3]
      %v889 = vld [vmem:[#allocation2 + $0xf8] sm:$0x3]
      %vm922 = vcmask 1045504
      %v923 = vrot.slane %v858, 2
      %v924 = vrot.slane %v860, 2
      %v925 = vsel %vm922, %v923, %v924
      %v926 = vrot.slane %v859, 2
      %v927 = vrot.slane %v861, 2
      %v928 = vsel %vm922, %v926, %v927
      %v929 = vrot.slane %v862, 2
      %v930 = vrot.slane %v864, 2
      %v931 = vsel %vm922, %v929, %v930
      %v932 = vrot.slane %v863, 2
      %v933 = vrot.slane %v865, 2
      %v934 = vsel %vm922, %v932, %v933
      %v935 = vrot.slane %v866, 2
      %v936 = vrot.slane %v868, 2
      %v937 = vsel %vm922, %v935, %v936
      %v938 = vrot.slane %v867, 2
      %v939 = vrot.slane %v869, 2
      %v940 = vsel %vm922, %v938, %v939
      %v941 = vrot.slane %v870, 2
      %v942 = vrot.slane %v872, 2
      %v943 = vsel %vm922, %v941, %v942
      %v944 = vrot.slane %v871, 2
      %v945 = vrot.slane %v873, 2
      %v946 = vsel %vm922, %v944, %v945
      %v947 = vrot.slane %v874, 2
      %v948 = vrot.slane %v876, 2
      %v949 = vsel %vm922, %v947, %v948
      %v950 = vrot.slane %v875, 2
      %v951 = vrot.slane %v877, 2
      %v952 = vsel %vm922, %v950, %v951
      %v953 = vrot.slane %v878, 2
      %v954 = vrot.slane %v880, 2
      %v955 = vsel %vm922, %v953, %v954
      %v956 = vrot.slane %v879, 2
      %v957 = vrot.slane %v881, 2
      %v958 = vsel %vm922, %v956, %v957
      %v959 = vrot.slane %v882, 2
      %v960 = vrot.slane %v884, 2
      %v961 = vsel %vm922, %v959, %v960
      %v962 = vrot.slane %v883, 2
      %v963 = vrot.slane %v885, 2
      %v964 = vsel %vm922, %v962, %v963
      %v965 = vrot.slane %v886, 2
      %v966 = vrot.slane %v888, 2
      %v967 = vsel %vm922, %v965, %v966
      %v968 = vrot.slane %v887, 2
      %v969 = vrot.slane %v889, 2
      %v970 = vsel %vm922, %v968, %v969
      %v987 = vpack.c.bf16 %v931, %v925
      %v988 = vpack.c.bf16 %v934, %v928
      %v989 = vpack.c.bf16 %v943, %v937
      %v990 = vpack.c.bf16 %v946, %v940
      %v991 = vpack.c.bf16 %v955, %v949
      %v992 = vpack.c.bf16 %v958, %v952
      %v993 = vpack.c.bf16 %v967, %v961
      %v994 = vpack.c.bf16 %v970, %v964
      %s995 = scalar_lea.vmem %s1, 160
      %v996 = vld [vmem:[%s995] sm:$0xf]
      %v997 = vld [vmem:[%s995 + $0x4] sm:$0xf]
      %v998 = vld [vmem:[%s995 + $0x8] sm:$0xf]
      %v999 = vld [vmem:[%s995 + $0xc] sm:$0xf]
      %v1000 = vld [vmem:[%s995 + $0x10] sm:$0xf]
      %v1001 = vld [vmem:[%s995 + $0x14] sm:$0xf]
      %v1002 = vld [vmem:[%s995 + $0x18] sm:$0xf]
      %v1003 = vld [vmem:[%s995 + $0x1c] sm:$0xf]
      %v1004 = vld [vmem:[%s995 + $0x20] sm:$0xf]
      %v1005 = vld [vmem:[%s995 + $0x24] sm:$0xf]
      %v1006 = vld [vmem:[%s995 + $0x28] sm:$0xf]
      %v1007 = vld [vmem:[%s995 + $0x2c] sm:$0xf]
      %v1008 = vld [vmem:[%s995 + $0x30] sm:$0xf]
      %v1009 = vld [vmem:[%s995 + $0x34] sm:$0xf]
      %v1010 = vld [vmem:[%s995 + $0x38] sm:$0xf]
      %v1011 = vld [vmem:[%s995 + $0x3c] sm:$0xf]
      %v1012 = vld [vmem:[%s995 + $0x40] sm:$0xf]
      %v1013 = vld [vmem:[%s995 + $0x44] sm:$0xf]
      %v1014 = vld [vmem:[%s995 + $0x48] sm:$0xf]
      %v1015 = vld [vmem:[%s995 + $0x4c] sm:$0xf]
      %v1036 = vunpack.c.l.b16 %v996
      %v1037 = vunpack.c.l.b16 %v997
      %v1038 = vunpack.c.l.b16 %v998
      %v1039 = vunpack.c.l.b16 %v999
      %v1040 = vunpack.c.l.b16 %v1000
      %v1041 = vunpack.c.l.b16 %v1001
      %v1042 = vunpack.c.l.b16 %v1002
      %v1043 = vunpack.c.l.b16 %v1003
      %v1044 = vunpack.c.l.b16 %v1004
      %v1045 = vunpack.c.l.b16 %v1005
      %v1046 = vunpack.c.l.b16 %v1006
      %v1047 = vunpack.c.l.b16 %v1007
      %v1048 = vunpack.c.l.b16 %v1008
      %v1049 = vunpack.c.l.b16 %v1009
      %v1050 = vunpack.c.l.b16 %v1010
      %v1051 = vunpack.c.l.b16 %v1011
      %v1052 = vunpack.c.l.b16 %v1012
      %v1053 = vunpack.c.l.b16 %v1013
      %v1054 = vunpack.c.l.b16 %v1014
      %v1055 = vunpack.c.l.b16 %v1015
      %v1056 = vpack.c.b16 %v1037, %v1036
      %v1057 = vpack.c.b16 %v1039, %v1038
      %v1058 = vpack.c.b16 %v1041, %v1040
      %v1059 = vpack.c.b16 %v1043, %v1042
      %v1060 = vpack.c.b16 %v1045, %v1044
      %v1061 = vpack.c.b16 %v1047, %v1046
      %v1062 = vpack.c.b16 %v1049, %v1048
      %v1063 = vpack.c.b16 %v1051, %v1050
      %v1064 = vpack.c.b16 %v1053, %v1052
      %v1065 = vpack.c.b16 %v1055, %v1054
      %v1077 = vsel %vm341, %v988, 0
      %v1080 = vsel %vm341, %v990, 0
      %v1083 = vsel %vm341, %v992, 0
      %v1086 = vsel %vm341, %v994, 0
      %1088 = vmatprep.subr.bf16.mxu0 0
      %1089 = vmatpush1.bf16.msra.mxu0 %v1056
      %1090 = vmatprep.subr.bf16.mxu0 0
      %1091 = vmatpush1.bf16.msra.mxu0 %v1057
      %1092 = vmatprep.subr.bf16.mxu0 0
      %1093 = vmatpush1.bf16.msra.mxu0 %v1058
      %1094 = vmatprep.subr.bf16.mxu0 0
      %1095 = vmatpush1.bf16.msra.mxu0 %v1059
      %1096 = vmatprep.subr.bf16.mxu0 0
      %1097 = vmatpush1.bf16.msra.mxu0 %v1060
      %1098 = vmatprep.subr.bf16.mxu0 0
      %1099 = vmatpush1.bf16.msra.mxu0 %v1061
      %1100 = vmatprep.subr.bf16.mxu0 0
      %1101 = vmatpush1.bf16.msra.mxu0 %v1062
      %1102 = vmatprep.subr.bf16.mxu0 0
      %1103 = vmatpush1.bf16.msra.mxu0 %v1063
      %1104 = vmatprep.subr.bf16.mxu0 0
      %1105 = vmatpush1.bf16.msra.mxu0 %v1064
      %1106 = vmatprep.subr.bf16.mxu0 0
      %1107 = vmatpush1.bf16.msra.mxu0 %v1065
      %1108 = vmatprep.subr.bf16.mxu0 0
      %1109 = vmatpush1.bf16.msra.mxu0 0
      %1110 = vmatprep.subr.bf16.mxu0 0
      %1111 = vmatpush1.bf16.msra.mxu0 0
      %1112 = vmatprep.subr.bf16.mxu0 0
      %1113 = vmatpush1.bf16.msra.mxu0 0
      %1114 = vmatprep.subr.bf16.mxu0 0
      %1115 = vmatpush1.bf16.msra.mxu0 0
      %1116 = vmatprep.subr.bf16.mxu0 0
      %1117 = vmatpush1.bf16.msra.mxu0 0
      %1118 = vmatprep.subr.bf16.mxu0 0
      %1119 = vmatpush1.bf16.msra.mxu0 0
      %1120 = vmatprep.mubr.bf16.mxu0 %v1077
      %1121 = vmatmul.mubr.bf16.gmra.mrb[0].mxu0 %v987
      %v1122 = vpop.f32.mrb[0].mxu0
      %v1123 = vadd.f32 0.0, %v1122
      %v1124 = vpop.f32.mrb[0].mxu0
      %v1125 = vpop.f32.mrb[0].mxu0
      %v1126 = vadd.f32 0.0, %v1125
      %v1127 = vpop.f32.mrb[0].mxu0
      %1128 = vmatprep.mubr.bf16.mxu0 %v1080
      %1129 = vmatmul.mubr.bf16.gmra.mrb[0].mxu0 %v989
      %v1130 = vpop.f32.mrb[0].mxu0
      %v1131 = vadd.f32 0.0, %v1130
      %v1132 = vpop.f32.mrb[0].mxu0
      %v1133 = vpop.f32.mrb[0].mxu0
      %v1134 = vadd.f32 0.0, %v1133
      %v1135 = vpop.f32.mrb[0].mxu0
      %1136 = vmatprep.mubr.bf16.mxu0 %v1083
      %1137 = vmatmul.mubr.bf16.gmra.mrb[0].mxu0 %v991
      %v1138 = vpop.f32.mrb[0].mxu0
      %v1139 = vadd.f32 0.0, %v1138
      %v1140 = vpop.f32.mrb[0].mxu0
      %v1141 = vpop.f32.mrb[0].mxu0
      %v1142 = vadd.f32 0.0, %v1141
      %v1143 = vpop.f32.mrb[0].mxu0
      %1144 = vmatprep.mubr.bf16.mxu0 %v1086
      %1145 = vmatmul.mubr.bf16.gmra.mrb[0].mxu0 %v993
      %v1146 = vpop.f32.mrb[0].mxu0
      %v1147 = vadd.f32 0.0, %v1146
      %v1148 = vpop.f32.mrb[0].mxu0
      %v1149 = vpop.f32.mrb[0].mxu0
      %v1150 = vadd.f32 0.0, %v1149
      %v1151 = vpop.f32.mrb[0].mxu0
      %1152 = vdwg.mxu0
      %v1153 = vadd.f32 %v828, %v1123
      %v1154 = vadd.f32 %v831, %v1126
      %v1155 = vadd.f32 %v836, %v1131
      %v1156 = vadd.f32 %v839, %v1134
      %v1157 = vadd.f32 %v844, %v1139
      %v1158 = vadd.f32 %v847, %v1142
      %v1159 = vadd.f32 %v852, %v1147
      %v1160 = vadd.f32 %v855, %v1150
      %s1161 = scalar_lea.vmem [#allocation2], 32
      %v1162 = vld [vmem:[%s1161] sm:$0xff]
      %v1163 = vld [vmem:[%s1161 + $0x8] sm:$0xff]
      %v1164 = vld [vmem:[%s1161 + $0x20] sm:$0xff]
      %v1165 = vld [vmem:[%s1161 + $0x28] sm:$0xff]
      %v1166 = vld [vmem:[%s1161 + $0x40] sm:$0xff]
      %v1167 = vld [vmem:[%s1161 + $0x48] sm:$0xff]
      %v1168 = vld [vmem:[%s1161 + $0x60] sm:$0xff]
      %v1169 = vld [vmem:[%s1161 + $0x68] sm:$0xff]
      %v1170 = vld [vmem:[%s1161 + $0x80] sm:$0xff]
      %v1171 = vld [vmem:[%s1161 + $0x88] sm:$0xff]
      %v1172 = vld [vmem:[%s1161 + $0xa0] sm:$0xff]
      %v1173 = vld [vmem:[%s1161 + $0xa8] sm:$0xff]
      %v1174 = vld [vmem:[%s1161 + $0xc0] sm:$0xff]
      %v1175 = vld [vmem:[%s1161 + $0xc8] sm:$0xff]
      %v1176 = vld [vmem:[%s1161 + $0xe0] sm:$0xff]
      %v1177 = vld [vmem:[%s1161 + $0xe8] sm:$0xff]
      %v1178 = vpack.c.bf16 %v1164, %v1162
      %v1179 = vpack.c.bf16 %v1165, %v1163
      %v1180 = vpack.c.bf16 %v1168, %v1166
      %v1181 = vpack.c.bf16 %v1169, %v1167
      %v1182 = vpack.c.bf16 %v1172, %v1170
      %v1183 = vpack.c.bf16 %v1173, %v1171
      %v1184 = vpack.c.bf16 %v1176, %v1174
      %v1185 = vpack.c.bf16 %v1177, %v1175
      %s1186 = scalar_lea.vmem %s1, 240
      %v1187 = vld [vmem:[%s1186] sm:$0xf]
      %v1188 = vld [vmem:[%s1186 + $0x4] sm:$0xf]
      %v1189 = vld [vmem:[%s1186 + $0x8] sm:$0xf]
      %v1190 = vld [vmem:[%s1186 + $0xc] sm:$0xf]
      %v1191 = vld [vmem:[%s1186 + $0x10] sm:$0xf]
      %v1192 = vld [vmem:[%s1186 + $0x14] sm:$0xf]
      %v1193 = vld [vmem:[%s1186 + $0x18] sm:$0xf]
      %v1194 = vld [vmem:[%s1186 + $0x1c] sm:$0xf]
      %v1195 = vld [vmem:[%s1186 + $0x20] sm:$0xf]
      %v1196 = vld [vmem:[%s1186 + $0x24] sm:$0xf]
      %v1197 = vld [vmem:[%s1186 + $0x28] sm:$0xf]
      %v1198 = vld [vmem:[%s1186 + $0x2c] sm:$0xf]
      %v1199 = vld [vmem:[%s1186 + $0x30] sm:$0xf]
      %v1200 = vld [vmem:[%s1186 + $0x34] sm:$0xf]
      %v1201 = vld [vmem:[%s1186 + $0x38] sm:$0xf]
      %v1202 = vld [vmem:[%s1186 + $0x3c] sm:$0xf]
      %v1203 = vld [vmem:[%s1186 + $0x40] sm:$0xf]
      %v1204 = vld [vmem:[%s1186 + $0x44] sm:$0xf]
      %v1205 = vld [vmem:[%s1186 + $0x48] sm:$0xf]
      %v1206 = vld [vmem:[%s1186 + $0x4c] sm:$0xf]
      %v1227 = vunpack.c.l.b16 %v1187
      %v1228 = vunpack.c.l.b16 %v1188
      %v1229 = vunpack.c.l.b16 %v1189
      %v1230 = vunpack.c.l.b16 %v1190
      %v1231 = vunpack.c.l.b16 %v1191
      %v1232 = vunpack.c.l.b16 %v1192
      %v1233 = vunpack.c.l.b16 %v1193
      %v1234 = vunpack.c.l.b16 %v1194
      %v1235 = vunpack.c.l.b16 %v1195
      %v1236 = vunpack.c.l.b16 %v1196
      %v1237 = vunpack.c.l.b16 %v1197
      %v1238 = vunpack.c.l.b16 %v1198
      %v1239 = vunpack.c.l.b16 %v1199
      %v1240 = vunpack.c.l.b16 %v1200
      %v1241 = vunpack.c.l.b16 %v1201
      %v1242 = vunpack.c.l.b16 %v1202
      %v1243 = vunpack.c.l.b16 %v1203
      %v1244 = vunpack.c.l.b16 %v1204
      %v1245 = vunpack.c.l.b16 %v1205
      %v1246 = vunpack.c.l.b16 %v1206
      %v1247 = vpack.c.b16 %v1228, %v1227
      %v1248 = vpack.c.b16 %v1230, %v1229
      %v1249 = vpack.c.b16 %v1232, %v1231
      %v1250 = vpack.c.b16 %v1234, %v1233
      %v1251 = vpack.c.b16 %v1236, %v1235
      %v1252 = vpack.c.b16 %v1238, %v1237
      %v1253 = vpack.c.b16 %v1240, %v1239
      %v1254 = vpack.c.b16 %v1242, %v1241
      %v1255 = vpack.c.b16 %v1244, %v1243
      %v1256 = vpack.c.b16 %v1246, %v1245
      %v1268 = vsel %vm341, %v1179, 0
      %v1271 = vsel %vm341, %v1181, 0
      %v1274 = vsel %vm341, %v1183, 0
      %v1277 = vsel %vm341, %v1185, 0
      %1279 = vmatprep.subr.bf16.mxu0 0
      %1280 = vmatpush1.bf16.msra.mxu0 %v1247
      %1281 = vmatprep.subr.bf16.mxu0 0
      %1282 = vmatpush1.bf16.msra.mxu0 %v1248
      %1283 = vmatprep.subr.bf16.mxu0 0
      %1284 = vmatpush1.bf16.msra.mxu0 %v1249
      %1285 = vmatprep.subr.bf16.mxu0 0
      %1286 = vmatpush1.bf16.msra.mxu0 %v1250
      %1287 = vmatprep.subr.bf16.mxu0 0
      %1288 = vmatpush1.bf16.msra.mxu0 %v1251
      %1289 = vmatprep.subr.bf16.mxu0 0
      %1290 = vmatpush1.bf16.msra.mxu0 %v1252
      %1291 = vmatprep.subr.bf16.mxu0 0
      %1292 = vmatpush1.bf16.msra.mxu0 %v1253
      %1293 = vmatprep.subr.bf16.mxu0 0
      %1294 = vmatpush1.bf16.msra.mxu0 %v1254
      %1295 = vmatprep.subr.bf16.mxu0 0
      %1296 = vmatpush1.bf16.msra.mxu0 %v1255
      %1297 = vmatprep.subr.bf16.mxu0 0
      %1298 = vmatpush1.bf16.msra.mxu0 %v1256
      %1299 = vmatprep.subr.bf16.mxu0 0
      %1300 = vmatpush1.bf16.msra.mxu0 0
      %1301 = vmatprep.subr.bf16.mxu0 0
      %1302 = vmatpush1.bf16.msra.mxu0 0
      %1303 = vmatprep.subr.bf16.mxu0 0
      %1304 = vmatpush1.bf16.msra.mxu0 0
      %1305 = vmatprep.subr.bf16.mxu0 0
      %1306 = vmatpush1.bf16.msra.mxu0 0
      %1307 = vmatprep.subr.bf16.mxu0 0
      %1308 = vmatpush1.bf16.msra.mxu0 0
      %1309 = vmatprep.subr.bf16.mxu0 0
      %1310 = vmatpush1.bf16.msra.mxu0 0
      %1311 = vmatprep.mubr.bf16.mxu0 %v1268
      %1312 = vmatmul.mubr.bf16.gmra.mrb[0].mxu0 %v1178
      %v1313 = vpop.f32.mrb[0].mxu0
      %v1314 = vadd.f32 0.0, %v1313
      %v1315 = vpop.f32.mrb[0].mxu0
      %v1316 = vpop.f32.mrb[0].mxu0
      %v1317 = vadd.f32 0.0, %v1316
      %v1318 = vpop.f32.mrb[0].mxu0
      %1319 = vmatprep.mubr.bf16.mxu0 %v1271
      %1320 = vmatmul.mubr.bf16.gmra.mrb[0].mxu0 %v1180
      %v1321 = vpop.f32.mrb[0].mxu0
      %v1322 = vadd.f32 0.0, %v1321
      %v1323 = vpop.f32.mrb[0].mxu0
      %v1324 = vpop.f32.mrb[0].mxu0
      %v1325 = vadd.f32 0.0, %v1324
      %v1326 = vpop.f32.mrb[0].mxu0
      %1327 = vmatprep.mubr.bf16.mxu0 %v1274
      %1328 = vmatmul.mubr.bf16.gmra.mrb[0].mxu0 %v1182
      %v1329 = vpop.f32.mrb[0].mxu0
      %v1330 = vadd.f32 0.0, %v1329
      %v1331 = vpop.f32.mrb[0].mxu0
      %v1332 = vpop.f32.mrb[0].mxu0
      %v1333 = vadd.f32 0.0, %v1332
      %v1334 = vpop.f32.mrb[0].mxu0
      %1335 = vmatprep.mubr.bf16.mxu0 %v1277
      %1336 = vmatmul.mubr.bf16.gmra.mrb[0].mxu0 %v1184
      %v1337 = vpop.f32.mrb[0].mxu0
      %v1338 = vadd.f32 0.0, %v1337
      %v1339 = vpop.f32.mrb[0].mxu0
      %v1340 = vpop.f32.mrb[0].mxu0
      %v1341 = vadd.f32 0.0, %v1340
      %v1342 = vpop.f32.mrb[0].mxu0
      %1343 = vdwg.mxu0
      %v1344 = vadd.f32 %v1153, %v1314
      %v1345 = vadd.f32 %v1154, %v1317
      %v1346 = vadd.f32 %v1155, %v1322
      %v1347 = vadd.f32 %v1156, %v1325
      %v1348 = vadd.f32 %v1157, %v1330
      %v1349 = vadd.f32 %v1158, %v1333
      %v1350 = vadd.f32 %v1159, %v1338
      %v1351 = vadd.f32 %v1160, %v1341
      %v1352 = vld [vmem:[%s1161] sm:$0xfe]
      %v1353 = vld [vmem:[%s1161 + $0x8] sm:$0xfe]
      %v1354 = vld [vmem:[%s1161 + $0x10] sm:$0x1]
      %v1355 = vld [vmem:[%s1161 + $0x18] sm:$0x1]
      %v1356 = vld [vmem:[%s1161 + $0x20] sm:$0xfe]
      %v1357 = vld [vmem:[%s1161 + $0x28] sm:$0xfe]
      %v1358 = vld [vmem:[%s1161 + $0x30] sm:$0x1]
      %v1359 = vld [vmem:[%s1161 + $0x38] sm:$0x1]
      %v1360 = vld [vmem:[%s1161 + $0x40] sm:$0xfe]
      %v1361 = vld [vmem:[%s1161 + $0x48] sm:$0xfe]
      %v1362 = vld [vmem:[%s1161 + $0x50] sm:$0x1]
      %v1363 = vld [vmem:[%s1161 + $0x58] sm:$0x1]
      %v1364 = vld [vmem:[%s1161 + $0x60] sm:$0xfe]
      %v1365 = vld [vmem:[%s1161 + $0x68] sm:$0xfe]
      %v1366 = vld [vmem:[%s1161 + $0x70] sm:$0x1]
      %v1367 = vld [vmem:[%s1161 + $0x78] sm:$0x1]
      %v1368 = vld [vmem:[%s1161 + $0x80] sm:$0xfe]
      %v1369 = vld [vmem:[%s1161 + $0x88] sm:$0xfe]
      %v1370 = vld [vmem:[%s1161 + $0x90] sm:$0x1]
      %v1371 = vld [vmem:[%s1161 + $0x98] sm:$0x1]
      %v1372 = vld [vmem:[%s1161 + $0xa0] sm:$0xfe]
      %v1373 = vld [vmem:[%s1161 + $0xa8] sm:$0xfe]
      %v1374 = vld [vmem:[%s1161 + $0xb0] sm:$0x1]
      %v1375 = vld [vmem:[%s1161 + $0xb8] sm:$0x1]
      %v1376 = vld [vmem:[%s1161 + $0xc0] sm:$0xfe]
      %v1377 = vld [vmem:[%s1161 + $0xc8] sm:$0xfe]
      %v1378 = vld [vmem:[%s1161 + $0xd0] sm:$0x1]
      %v1379 = vld [vmem:[%s1161 + $0xd8] sm:$0x1]
      %v1380 = vld [vmem:[%s1161 + $0xe0] sm:$0xfe]
      %v1381 = vld [vmem:[%s1161 + $0xe8] sm:$0xfe]
      %v1382 = vld [vmem:[%s1161 + $0xf0] sm:$0x1]
      %v1383 = vld [vmem:[%s1161 + $0xf8] sm:$0x1]
      %v1416 = vrot.slane %v1352, 1
      %v1417 = vrot.slane %v1354, 1
      %v1418 = vsel %vm490, %v1416, %v1417
      %v1419 = vrot.slane %v1353, 1
      %v1420 = vrot.slane %v1355, 1
      %v1421 = vsel %vm490, %v1419, %v1420
      %v1422 = vrot.slane %v1356, 1
      %v1423 = vrot.slane %v1358, 1
      %v1424 = vsel %vm490, %v1422, %v1423
      %v1425 = vrot.slane %v1357, 1
      %v1426 = vrot.slane %v1359, 1
      %v1427 = vsel %vm490, %v1425, %v1426
      %v1428 = vrot.slane %v1360, 1
      %v1429 = vrot.slane %v1362, 1
      %v1430 = vsel %vm490, %v1428, %v1429
      %v1431 = vrot.slane %v1361, 1
      %v1432 = vrot.slane %v1363, 1
      %v1433 = vsel %vm490, %v1431, %v1432
      %v1434 = vrot.slane %v1364, 1
      %v1435 = vrot.slane %v1366, 1
      %v1436 = vsel %vm490, %v1434, %v1435
      %v1437 = vrot.slane %v1365, 1
      %v1438 = vrot.slane %v1367, 1
      %v1439 = vsel %vm490, %v1437, %v1438
      %v1440 = vrot.slane %v1368, 1
      %v1441 = vrot.slane %v1370, 1
      %v1442 = vsel %vm490, %v1440, %v1441
      %v1443 = vrot.slane %v1369, 1
      %v1444 = vrot.slane %v1371, 1
      %v1445 = vsel %vm490, %v1443, %v1444
      %v1446 = vrot.slane %v1372, 1
      %v1447 = vrot.slane %v1374, 1
      %v1448 = vsel %vm490, %v1446, %v1447
      %v1449 = vrot.slane %v1373, 1
      %v1450 = vrot.slane %v1375, 1
      %v1451 = vsel %vm490, %v1449, %v1450
      %v1452 = vrot.slane %v1376, 1
      %v1453 = vrot.slane %v1378, 1
      %v1454 = vsel %vm490, %v1452, %v1453
      %v1455 = vrot.slane %v1377, 1
      %v1456 = vrot.slane %v1379, 1
      %v1457 = vsel %vm490, %v1455, %v1456
      %v1458 = vrot.slane %v1380, 1
      %v1459 = vrot.slane %v1382, 1
      %v1460 = vsel %vm490, %v1458, %v1459
      %v1461 = vrot.slane %v1381, 1
      %v1462 = vrot.slane %v1383, 1
      %v1463 = vsel %vm490, %v1461, %v1462
      %v1480 = vpack.c.bf16 %v1424, %v1418
      %v1481 = vpack.c.bf16 %v1427, %v1421
      %v1482 = vpack.c.bf16 %v1436, %v1430
      %v1483 = vpack.c.bf16 %v1439, %v1433
      %v1484 = vpack.c.bf16 %v1448, %v1442
      %v1485 = vpack.c.bf16 %v1451, %v1445
      %v1486 = vpack.c.bf16 %v1460, %v1454
      %v1487 = vpack.c.bf16 %v1463, %v1457
      %s1488 = scalar_lea.vmem %s1, 320
      %v1489 = vld [vmem:[%s1488] sm:$0xf]
      %v1490 = vld [vmem:[%s1488 + $0x4] sm:$0xf]
      %v1491 = vld [vmem:[%s1488 + $0x8] sm:$0xf]
      %v1492 = vld [vmem:[%s1488 + $0xc] sm:$0xf]
      %v1493 = vld [vmem:[%s1488 + $0x10] sm:$0xf]
      %v1494 = vld [vmem:[%s1488 + $0x14] sm:$0xf]
      %v1495 = vld [vmem:[%s1488 + $0x18] sm:$0xf]
      %v1496 = vld [vmem:[%s1488 + $0x1c] sm:$0xf]
      %v1497 = vld [vmem:[%s1488 + $0x20] sm:$0xf]
      %v1498 = vld [vmem:[%s1488 + $0x24] sm:$0xf]
      %v1499 = vld [vmem:[%s1488 + $0x28] sm:$0xf]
      %v1500 = vld [vmem:[%s1488 + $0x2c] sm:$0xf]
      %v1501 = vld [vmem:[%s1488 + $0x30] sm:$0xf]
      %v1502 = vld [vmem:[%s1488 + $0x34] sm:$0xf]
      %v1503 = vld [vmem:[%s1488 + $0x38] sm:$0xf]
      %v1504 = vld [vmem:[%s1488 + $0x3c] sm:$0xf]
      %v1505 = vld [vmem:[%s1488 + $0x40] sm:$0xf]
      %v1506 = vld [vmem:[%s1488 + $0x44] sm:$0xf]
      %v1507 = vld [vmem:[%s1488 + $0x48] sm:$0xf]
      %v1508 = vld [vmem:[%s1488 + $0x4c] sm:$0xf]
      %v1529 = vunpack.c.l.b16 %v1489
      %v1530 = vunpack.c.l.b16 %v1490
      %v1531 = vunpack.c.l.b16 %v1491
      %v1532 = vunpack.c.l.b16 %v1492
      %v1533 = vunpack.c.l.b16 %v1493
      %v1534 = vunpack.c.l.b16 %v1494
      %v1535 = vunpack.c.l.b16 %v1495
      %v1536 = vunpack.c.l.b16 %v1496
      %v1537 = vunpack.c.l.b16 %v1497
      %v1538 = vunpack.c.l.b16 %v1498
      %v1539 = vunpack.c.l.b16 %v1499
      %v1540 = vunpack.c.l.b16 %v1500
      %v1541 = vunpack.c.l.b16 %v1501
      %v1542 = vunpack.c.l.b16 %v1502
      %v1543 = vunpack.c.l.b16 %v1503
      %v1544 = vunpack.c.l.b16 %v1504
      %v1545 = vunpack.c.l.b16 %v1505
      %v1546 = vunpack.c.l.b16 %v1506
      %v1547 = vunpack.c.l.b16 %v1507
      %v1548 = vunpack.c.l.b16 %v1508
      %v1549 = vpack.c.b16 %v1530, %v1529
      %v1550 = vpack.c.b16 %v1532, %v1531
      %v1551 = vpack.c.b16 %v1534, %v1533
      %v1552 = vpack.c.b16 %v1536, %v1535
      %v1553 = vpack.c.b16 %v1538, %v1537
      %v1554 = vpack.c.b16 %v1540, %v1539
      %v1555 = vpack.c.b16 %v1542, %v1541
      %v1556 = vpack.c.b16 %v1544, %v1543
      %v1557 = vpack.c.b16 %v1546, %v1545
      %v1558 = vpack.c.b16 %v1548, %v1547
      %v1570 = vsel %vm341, %v1481, 0
      %v1573 = vsel %vm341, %v1483, 0
      %v1576 = vsel %vm341, %v1485, 0
      %v1579 = vsel %vm341, %v1487, 0
      %1581 = vmatprep.subr.bf16.mxu0 0
      %1582 = vmatpush1.bf16.msra.mxu0 %v1549
      %1583 = vmatprep.subr.bf16.mxu0 0
      %1584 = vmatpush1.bf16.msra.mxu0 %v1550
      %1585 = vmatprep.subr.bf16.mxu0 0
      %1586 = vmatpush1.bf16.msra.mxu0 %v1551
      %1587 = vmatprep.subr.bf16.mxu0 0
      %1588 = vmatpush1.bf16.msra.mxu0 %v1552
      %1589 = vmatprep.subr.bf16.mxu0 0
      %1590 = vmatpush1.bf16.msra.mxu0 %v1553
      %1591 = vmatprep.subr.bf16.mxu0 0
      %1592 = vmatpush1.bf16.msra.mxu0 %v1554
      %1593 = vmatprep.subr.bf16.mxu0 0
      %1594 = vmatpush1.bf16.msra.mxu0 %v1555
      %1595 = vmatprep.subr.bf16.mxu0 0
      %1596 = vmatpush1.bf16.msra.mxu0 %v1556
      %1597 = vmatprep.subr.bf16.mxu0 0
      %1598 = vmatpush1.bf16.msra.mxu0 %v1557
      %1599 = vmatprep.subr.bf16.mxu0 0
      %1600 = vmatpush1.bf16.msra.mxu0 %v1558
      %1601 = vmatprep.subr.bf16.mxu0 0
      %1602 = vmatpush1.bf16.msra.mxu0 0
      %1603 = vmatprep.subr.bf16.mxu0 0
      %1604 = vmatpush1.bf16.msra.mxu0 0
      %1605 = vmatprep.subr.bf16.mxu0 0
      %1606 = vmatpush1.bf16.msra.mxu0 0
      %1607 = vmatprep.subr.bf16.mxu0 0
      %1608 = vmatpush1.bf16.msra.mxu0 0
      %1609 = vmatprep.subr.bf16.mxu0 0
      %1610 = vmatpush1.bf16.msra.mxu0 0
      %1611 = vmatprep.subr.bf16.mxu0 0
      %1612 = vmatpush1.bf16.msra.mxu0 0
      %1613 = vmatprep.mubr.bf16.mxu0 %v1570
      %1614 = vmatmul.mubr.bf16.gmra.mrb[0].mxu0 %v1480
      %v1615 = vpop.f32.mrb[0].mxu0
      %v1616 = vadd.f32 0.0, %v1615
      %v1617 = vpop.f32.mrb[0].mxu0
      %v1618 = vpop.f32.mrb[0].mxu0
      %v1619 = vadd.f32 0.0, %v1618
      %v1620 = vpop.f32.mrb[0].mxu0
      %1621 = vmatprep.mubr.bf16.mxu0 %v1573
      %1622 = vmatmul.mubr.bf16.gmra.mrb[0].mxu0 %v1482
      %v1623 = vpop.f32.mrb[0].mxu0
      %v1624 = vadd.f32 0.0, %v1623
      %v1625 = vpop.f32.mrb[0].mxu0
      %v1626 = vpop.f32.mrb[0].mxu0
      %v1627 = vadd.f32 0.0, %v1626
      %v1628 = vpop.f32.mrb[0].mxu0
      %1629 = vmatprep.mubr.bf16.mxu0 %v1576
      %1630 = vmatmul.mubr.bf16.gmra.mrb[0].mxu0 %v1484
      %v1631 = vpop.f32.mrb[0].mxu0
      %v1632 = vadd.f32 0.0, %v1631
      %v1633 = vpop.f32.mrb[0].mxu0
      %v1634 = vpop.f32.mrb[0].mxu0
      %v1635 = vadd.f32 0.0, %v1634
      %v1636 = vpop.f32.mrb[0].mxu0
      %1637 = vmatprep.mubr.bf16.mxu0 %v1579
      %1638 = vmatmul.mubr.bf16.gmra.mrb[0].mxu0 %v1486
      %v1639 = vpop.f32.mrb[0].mxu0
      %v1640 = vadd.f32 0.0, %v1639
      %v1641 = vpop.f32.mrb[0].mxu0
      %v1642 = vpop.f32.mrb[0].mxu0
      %v1643 = vadd.f32 0.0, %v1642
      %v1644 = vpop.f32.mrb[0].mxu0
      %1645 = vdwg.mxu0
      %v1646 = vadd.f32 %v1344, %v1616
      %v1647 = vadd.f32 %v1345, %v1619
      %v1648 = vadd.f32 %v1346, %v1624
      %v1649 = vadd.f32 %v1347, %v1627
      %v1650 = vadd.f32 %v1348, %v1632
      %v1651 = vadd.f32 %v1349, %v1635
      %v1652 = vadd.f32 %v1350, %v1640
      %v1653 = vadd.f32 %v1351, %v1643
      %v1654 = vld [vmem:[%s1161] sm:$0xfc]
      %v1655 = vld [vmem:[%s1161 + $0x8] sm:$0xfc]
      %v1656 = vld [vmem:[%s1161 + $0x10] sm:$0x3]
      %v1657 = vld [vmem:[%s1161 + $0x18] sm:$0x3]
      %v1658 = vld [vmem:[%s1161 + $0x20] sm:$0xfc]
      %v1659 = vld [vmem:[%s1161 + $0x28] sm:$0xfc]
      %v1660 = vld [vmem:[%s1161 + $0x30] sm:$0x3]
      %v1661 = vld [vmem:[%s1161 + $0x38] sm:$0x3]
      %v1662 = vld [vmem:[%s1161 + $0x40] sm:$0xfc]
      %v1663 = vld [vmem:[%s1161 + $0x48] sm:$0xfc]
      %v1664 = vld [vmem:[%s1161 + $0x50] sm:$0x3]
      %v1665 = vld [vmem:[%s1161 + $0x58] sm:$0x3]
      %v1666 = vld [vmem:[%s1161 + $0x60] sm:$0xfc]
      %v1667 = vld [vmem:[%s1161 + $0x68] sm:$0xfc]
      %v1668 = vld [vmem:[%s1161 + $0x70] sm:$0x3]
      %v1669 = vld [vmem:[%s1161 + $0x78] sm:$0x3]
      %v1670 = vld [vmem:[%s1161 + $0x80] sm:$0xfc]
      %v1671 = vld [vmem:[%s1161 + $0x88] sm:$0xfc]
      %v1672 = vld [vmem:[%s1161 + $0x90] sm:$0x3]
      %v1673 = vld [vmem:[%s1161 + $0x98] sm:$0x3]
      %v1674 = vld [vmem:[%s1161 + $0xa0] sm:$0xfc]
      %v1675 = vld [vmem:[%s1161 + $0xa8] sm:$0xfc]
      %v1676 = vld [vmem:[%s1161 + $0xb0] sm:$0x3]
      %v1677 = vld [vmem:[%s1161 + $0xb8] sm:$0x3]
      %v1678 = vld [vmem:[%s1161 + $0xc0] sm:$0xfc]
      %v1679 = vld [vmem:[%s1161 + $0xc8] sm:$0xfc]
      %v1680 = vld [vmem:[%s1161 + $0xd0] sm:$0x3]
      %v1681 = vld [vmem:[%s1161 + $0xd8] sm:$0x3]
      %v1682 = vld [vmem:[%s1161 + $0xe0] sm:$0xfc]
      %v1683 = vld [vmem:[%s1161 + $0xe8] sm:$0xfc]
      %v1684 = vld [vmem:[%s1161 + $0xf0] sm:$0x3]
      %v1685 = vld [vmem:[%s1161 + $0xf8] sm:$0x3]
      %v1718 = vrot.slane %v1654, 2
      %v1719 = vrot.slane %v1656, 2
      %v1720 = vsel %vm922, %v1718, %v1719
      %v1721 = vrot.slane %v1655, 2
      %v1722 = vrot.slane %v1657, 2
      %v1723 = vsel %vm922, %v1721, %v1722
      %v1724 = vrot.slane %v1658, 2
      %v1725 = vrot.slane %v1660, 2
      %v1726 = vsel %vm922, %v1724, %v1725
      %v1727 = vrot.slane %v1659, 2
      %v1728 = vrot.slane %v1661, 2
      %v1729 = vsel %vm922, %v1727, %v1728
      %v1730 = vrot.slane %v1662, 2
      %v1731 = vrot.slane %v1664, 2
      %v1732 = vsel %vm922, %v1730, %v1731
      %v1733 = vrot.slane %v1663, 2
      %v1734 = vrot.slane %v1665, 2
      %v1735 = vsel %vm922, %v1733, %v1734
      %v1736 = vrot.slane %v1666, 2
      %v1737 = vrot.slane %v1668, 2
      %v1738 = vsel %vm922, %v1736, %v1737
      %v1739 = vrot.slane %v1667, 2
      %v1740 = vrot.slane %v1669, 2
      %v1741 = vsel %vm922, %v1739, %v1740
      %v1742 = vrot.slane %v1670, 2
      %v1743 = vrot.slane %v1672, 2
      %v1744 = vsel %vm922, %v1742, %v1743
      %v1745 = vrot.slane %v1671, 2
      %v1746 = vrot.slane %v1673, 2
      %v1747 = vsel %vm922, %v1745, %v1746
      %v1748 = vrot.slane %v1674, 2
      %v1749 = vrot.slane %v1676, 2
      %v1750 = vsel %vm922, %v1748, %v1749
      %v1751 = vrot.slane %v1675, 2
      %v1752 = vrot.slane %v1677, 2
      %v1753 = vsel %vm922, %v1751, %v1752
      %v1754 = vrot.slane %v1678, 2
      %v1755 = vrot.slane %v1680, 2
      %v1756 = vsel %vm922, %v1754, %v1755
      %v1757 = vrot.slane %v1679, 2
      %v1758 = vrot.slane %v1681, 2
      %v1759 = vsel %vm922, %v1757, %v1758
      %v1760 = vrot.slane %v1682, 2
      %v1761 = vrot.slane %v1684, 2
      %v1762 = vsel %vm922, %v1760, %v1761
      %v1763 = vrot.slane %v1683, 2
      %v1764 = vrot.slane %v1685, 2
      %v1765 = vsel %vm922, %v1763, %v1764
      %v1782 = vpack.c.bf16 %v1726, %v1720
      %v1783 = vpack.c.bf16 %v1729, %v1723
      %v1784 = vpack.c.bf16 %v1738, %v1732
      %v1785 = vpack.c.bf16 %v1741, %v1735
      %v1786 = vpack.c.bf16 %v1750, %v1744
      %v1787 = vpack.c.bf16 %v1753, %v1747
      %v1788 = vpack.c.bf16 %v1762, %v1756
      %v1789 = vpack.c.bf16 %v1765, %v1759
      %s1790 = scalar_lea.vmem %s1, 400
      %v1791 = vld [vmem:[%s1790] sm:$0xf]
      %v1792 = vld [vmem:[%s1790 + $0x4] sm:$0xf]
      %v1793 = vld [vmem:[%s1790 + $0x8] sm:$0xf]
      %v1794 = vld [vmem:[%s1790 + $0xc] sm:$0xf]
      %v1795 = vld [vmem:[%s1790 + $0x10] sm:$0xf]
      %v1796 = vld [vmem:[%s1790 + $0x14] sm:$0xf]
      %v1797 = vld [vmem:[%s1790 + $0x18] sm:$0xf]
      %v1798 = vld [vmem:[%s1790 + $0x1c] sm:$0xf]
      %v1799 = vld [vmem:[%s1790 + $0x20] sm:$0xf]
      %v1800 = vld [vmem:[%s1790 + $0x24] sm:$0xf]
      %v1801 = vld [vmem:[%s1790 + $0x28] sm:$0xf]
      %v1802 = vld [vmem:[%s1790 + $0x2c] sm:$0xf]
      %v1803 = vld [vmem:[%s1790 + $0x30] sm:$0xf]
      %v1804 = vld [vmem:[%s1790 + $0x34] sm:$0xf]
      %v1805 = vld [vmem:[%s1790 + $0x38] sm:$0xf]
      %v1806 = vld [vmem:[%s1790 + $0x3c] sm:$0xf]
      %v1807 = vld [vmem:[%s1790 + $0x40] sm:$0xf]
      %v1808 = vld [vmem:[%s1790 + $0x44] sm:$0xf]
      %v1809 = vld [vmem:[%s1790 + $0x48] sm:$0xf]
      %v1810 = vld [vmem:[%s1790 + $0x4c] sm:$0xf]
      %v1831 = vunpack.c.l.b16 %v1791
      %v1832 = vunpack.c.l.b16 %v1792
      %v1833 = vunpack.c.l.b16 %v1793
      %v1834 = vunpack.c.l.b16 %v1794
      %v1835 = vunpack.c.l.b16 %v1795
      %v1836 = vunpack.c.l.b16 %v1796
      %v1837 = vunpack.c.l.b16 %v1797
      %v1838 = vunpack.c.l.b16 %v1798
      %v1839 = vunpack.c.l.b16 %v1799
      %v1840 = vunpack.c.l.b16 %v1800
      %v1841 = vunpack.c.l.b16 %v1801
      %v1842 = vunpack.c.l.b16 %v1802
      %v1843 = vunpack.c.l.b16 %v1803
      %v1844 = vunpack.c.l.b16 %v1804
      %v1845 = vunpack.c.l.b16 %v1805
      %v1846 = vunpack.c.l.b16 %v1806
      %v1847 = vunpack.c.l.b16 %v1807
      %v1848 = vunpack.c.l.b16 %v1808
      %v1849 = vunpack.c.l.b16 %v1809
      %v1850 = vunpack.c.l.b16 %v1810
      %v1851 = vpack.c.b16 %v1832, %v1831
      %v1852 = vpack.c.b16 %v1834, %v1833
      %v1853 = vpack.c.b16 %v1836, %v1835
      %v1854 = vpack.c.b16 %v1838, %v1837
      %v1855 = vpack.c.b16 %v1840, %v1839
      %v1856 = vpack.c.b16 %v1842, %v1841
      %v1857 = vpack.c.b16 %v1844, %v1843
      %v1858 = vpack.c.b16 %v1846, %v1845
      %v1859 = vpack.c.b16 %v1848, %v1847
      %v1860 = vpack.c.b16 %v1850, %v1849
      %v1872 = vsel %vm341, %v1783, 0
      %v1875 = vsel %vm341, %v1785, 0
      %v1878 = vsel %vm341, %v1787, 0
      %v1881 = vsel %vm341, %v1789, 0
      %1883 = vmatprep.subr.bf16.mxu0 0
      %1884 = vmatpush1.bf16.msra.mxu0 %v1851
      %1885 = vmatprep.subr.bf16.mxu0 0
      %1886 = vmatpush1.bf16.msra.mxu0 %v1852
      %1887 = vmatprep.subr.bf16.mxu0 0
      %1888 = vmatpush1.bf16.msra.mxu0 %v1853
      %1889 = vmatprep.subr.bf16.mxu0 0
      %1890 = vmatpush1.bf16.msra.mxu0 %v1854
      %1891 = vmatprep.subr.bf16.mxu0 0
      %1892 = vmatpush1.bf16.msra.mxu0 %v1855
      %1893 = vmatprep.subr.bf16.mxu0 0
      %1894 = vmatpush1.bf16.msra.mxu0 %v1856
      %1895 = vmatprep.subr.bf16.mxu0 0
      %1896 = vmatpush1.bf16.msra.mxu0 %v1857
      %1897 = vmatprep.subr.bf16.mxu0 0
      %1898 = vmatpush1.bf16.msra.mxu0 %v1858
      %1899 = vmatprep.subr.bf16.mxu0 0
      %1900 = vmatpush1.bf16.msra.mxu0 %v1859
      %1901 = vmatprep.subr.bf16.mxu0 0
      %1902 = vmatpush1.bf16.msra.mxu0 %v1860
      %1903 = vmatprep.subr.bf16.mxu0 0
      %1904 = vmatpush1.bf16.msra.mxu0 0
      %1905 = vmatprep.subr.bf16.mxu0 0
      %1906 = vmatpush1.bf16.msra.mxu0 0
      %1907 = vmatprep.subr.bf16.mxu0 0
      %1908 = vmatpush1.bf16.msra.mxu0 0
      %1909 = vmatprep.subr.bf16.mxu0 0
      %1910 = vmatpush1.bf16.msra.mxu0 0
      %1911 = vmatprep.subr.bf16.mxu0 0
      %1912 = vmatpush1.bf16.msra.mxu0 0
      %1913 = vmatprep.subr.bf16.mxu0 0
      %1914 = vmatpush1.bf16.msra.mxu0 0
      %1915 = vmatprep.mubr.bf16.mxu0 %v1872
      %1916 = vmatmul.mubr.bf16.gmra.mrb[0].mxu0 %v1782
      %v1917 = vpop.f32.mrb[0].mxu0
      %v1918 = vadd.f32 0.0, %v1917
      %v1919 = vpop.f32.mrb[0].mxu0
      %v1920 = vpop.f32.mrb[0].mxu0
      %v1921 = vadd.f32 0.0, %v1920
      %v1922 = vpop.f32.mrb[0].mxu0
      %1923 = vmatprep.mubr.bf16.mxu0 %v1875
      %1924 = vmatmul.mubr.bf16.gmra.mrb[0].mxu0 %v1784
      %v1925 = vpop.f32.mrb[0].mxu0
      %v1926 = vadd.f32 0.0, %v1925
      %v1927 = vpop.f32.mrb[0].mxu0
      %v1928 = vpop.f32.mrb[0].mxu0
      %v1929 = vadd.f32 0.0, %v1928
      %v1930 = vpop.f32.mrb[0].mxu0
      %1931 = vmatprep.mubr.bf16.mxu0 %v1878
      %1932 = vmatmul.mubr.bf16.gmra.mrb[0].mxu0 %v1786
      %v1933 = vpop.f32.mrb[0].mxu0
      %v1934 = vadd.f32 0.0, %v1933
      %v1935 = vpop.f32.mrb[0].mxu0
      %v1936 = vpop.f32.mrb[0].mxu0
      %v1937 = vadd.f32 0.0, %v1936
      %v1938 = vpop.f32.mrb[0].mxu0
      %1939 = vmatprep.mubr.bf16.mxu0 %v1881
      %1940 = vmatmul.mubr.bf16.gmra.mrb[0].mxu0 %v1788
      %v1941 = vpop.f32.mrb[0].mxu0
      %v1942 = vadd.f32 0.0, %v1941
      %v1943 = vpop.f32.mrb[0].mxu0
      %v1944 = vpop.f32.mrb[0].mxu0
      %v1945 = vadd.f32 0.0, %v1944
      %v1946 = vpop.f32.mrb[0].mxu0
      %1947 = vdwg.mxu0
      %v1948 = vadd.f32 %v1646, %v1918
      %v1949 = vadd.f32 %v1647, %v1921
      %v1950 = vadd.f32 %v1648, %v1926
      %v1951 = vadd.f32 %v1649, %v1929
      %v1952 = vadd.f32 %v1650, %v1934
      %v1953 = vadd.f32 %v1651, %v1937
      %v1954 = vadd.f32 %v1652, %v1942
      %v1955 = vadd.f32 %v1653, %v1945
      %s1956 = scalar_lea.vmem [#allocation2], 64
      %v1957 = vld [vmem:[%s1956] sm:$0xff]
      %v1958 = vld [vmem:[%s1956 + $0x8] sm:$0xff]
      %v1959 = vld [vmem:[%s1956 + $0x20] sm:$0xff]
      %v1960 = vld [vmem:[%s1956 + $0x28] sm:$0xff]
      %v1961 = vld [vmem:[%s1956 + $0x40] sm:$0xff]
      %v1962 = vld [vmem:[%s1956 + $0x48] sm:$0xff]
      %v1963 = vld [vmem:[%s1956 + $0x60] sm:$0xff]
      %v1964 = vld [vmem:[%s1956 + $0x68] sm:$0xff]
      %v1965 = vld [vmem:[%s1956 + $0x80] sm:$0xff]
      %v1966 = vld [vmem:[%s1956 + $0x88] sm:$0xff]
      %v1967 = vld [vmem:[%s1956 + $0xa0] sm:$0xff]
      %v1968 = vld [vmem:[%s1956 + $0xa8] sm:$0xff]
      %v1969 = vld [vmem:[%s1956 + $0xc0] sm:$0xff]
      %v1970 = vld [vmem:[%s1956 + $0xc8] sm:$0xff]
      %v1971 = vld [vmem:[%s1956 + $0xe0] sm:$0xff]
      %v1972 = vld [vmem:[%s1956 + $0xe8] sm:$0xff]
      %v1973 = vpack.c.bf16 %v1959, %v1957
      %v1974 = vpack.c.bf16 %v1960, %v1958
      %v1975 = vpack.c.bf16 %v1963, %v1961
      %v1976 = vpack.c.bf16 %v1964, %v1962
      %v1977 = vpack.c.bf16 %v1967, %v1965
      %v1978 = vpack.c.bf16 %v1968, %v1966
      %v1979 = vpack.c.bf16 %v1971, %v1969
      %v1980 = vpack.c.bf16 %v1972, %v1970
      %s1981 = scalar_lea.vmem %s1, 480
      %v1982 = vld [vmem:[%s1981] sm:$0xf]
      %v1983 = vld [vmem:[%s1981 + $0x4] sm:$0xf]
      %v1984 = vld [vmem:[%s1981 + $0x8] sm:$0xf]
      %v1985 = vld [vmem:[%s1981 + $0xc] sm:$0xf]
      %v1986 = vld [vmem:[%s1981 + $0x10] sm:$0xf]
      %v1987 = vld [vmem:[%s1981 + $0x14] sm:$0xf]
      %v1988 = vld [vmem:[%s1981 + $0x18] sm:$0xf]
      %v1989 = vld [vmem:[%s1981 + $0x1c] sm:$0xf]
      %v1990 = vld [vmem:[%s1981 + $0x20] sm:$0xf]
      %v1991 = vld [vmem:[%s1981 + $0x24] sm:$0xf]
      %v1992 = vld [vmem:[%s1981 + $0x28] sm:$0xf]
      %v1993 = vld [vmem:[%s1981 + $0x2c] sm:$0xf]
      %v1994 = vld [vmem:[%s1981 + $0x30] sm:$0xf]
      %v1995 = vld [vmem:[%s1981 + $0x34] sm:$0xf]
      %v1996 = vld [vmem:[%s1981 + $0x38] sm:$0xf]
      %v1997 = vld [vmem:[%s1981 + $0x3c] sm:$0xf]
      %v1998 = vld [vmem:[%s1981 + $0x40] sm:$0xf]
      %v1999 = vld [vmem:[%s1981 + $0x44] sm:$0xf]
      %v2000 = vld [vmem:[%s1981 + $0x48] sm:$0xf]
      %v2001 = vld [vmem:[%s1981 + $0x4c] sm:$0xf]
      %v2022 = vunpack.c.l.b16 %v1982
      %v2023 = vunpack.c.l.b16 %v1983
      %v2024 = vunpack.c.l.b16 %v1984
      %v2025 = vunpack.c.l.b16 %v1985
      %v2026 = vunpack.c.l.b16 %v1986
      %v2027 = vunpack.c.l.b16 %v1987
      %v2028 = vunpack.c.l.b16 %v1988
      %v2029 = vunpack.c.l.b16 %v1989
      %v2030 = vunpack.c.l.b16 %v1990
      %v2031 = vunpack.c.l.b16 %v1991
      %v2032 = vunpack.c.l.b16 %v1992
      %v2033 = vunpack.c.l.b16 %v1993
      %v2034 = vunpack.c.l.b16 %v1994
      %v2035 = vunpack.c.l.b16 %v1995
      %v2036 = vunpack.c.l.b16 %v1996
      %v2037 = vunpack.c.l.b16 %v1997
      %v2038 = vunpack.c.l.b16 %v1998
      %v2039 = vunpack.c.l.b16 %v1999
      %v2040 = vunpack.c.l.b16 %v2000
      %v2041 = vunpack.c.l.b16 %v2001
      %v2042 = vpack.c.b16 %v2023, %v2022
      %v2043 = vpack.c.b16 %v2025, %v2024
      %v2044 = vpack.c.b16 %v2027, %v2026
      %v2045 = vpack.c.b16 %v2029, %v2028
      %v2046 = vpack.c.b16 %v2031, %v2030
      %v2047 = vpack.c.b16 %v2033, %v2032
      %v2048 = vpack.c.b16 %v2035, %v2034
      %v2049 = vpack.c.b16 %v2037, %v2036
      %v2050 = vpack.c.b16 %v2039, %v2038
      %v2051 = vpack.c.b16 %v2041, %v2040
      %v2063 = vsel %vm341, %v1974, 0
      %v2066 = vsel %vm341, %v1976, 0
      %v2069 = vsel %vm341, %v1978, 0
      %v2072 = vsel %vm341, %v1980, 0
      %2074 = vmatprep.subr.bf16.mxu0 0
      %2075 = vmatpush1.bf16.msra.mxu0 %v2042
      %2076 = vmatprep.subr.bf16.mxu0 0
      %2077 = vmatpush1.bf16.msra.mxu0 %v2043
      %2078 = vmatprep.subr.bf16.mxu0 0
      %2079 = vmatpush1.bf16.msra.mxu0 %v2044
      %2080 = vmatprep.subr.bf16.mxu0 0
      %2081 = vmatpush1.bf16.msra.mxu0 %v2045
      %2082 = vmatprep.subr.bf16.mxu0 0
      %2083 = vmatpush1.bf16.msra.mxu0 %v2046
      %2084 = vmatprep.subr.bf16.mxu0 0
      %2085 = vmatpush1.bf16.msra.mxu0 %v2047
      %2086 = vmatprep.subr.bf16.mxu0 0
      %2087 = vmatpush1.bf16.msra.mxu0 %v2048
      %2088 = vmatprep.subr.bf16.mxu0 0
      %2089 = vmatpush1.bf16.msra.mxu0 %v2049
      %2090 = vmatprep.subr.bf16.mxu0 0
      %2091 = vmatpush1.bf16.msra.mxu0 %v2050
      %2092 = vmatprep.subr.bf16.mxu0 0
      %2093 = vmatpush1.bf16.msra.mxu0 %v2051
      %2094 = vmatprep.subr.bf16.mxu0 0
      %2095 = vmatpush1.bf16.msra.mxu0 0
      %2096 = vmatprep.subr.bf16.mxu0 0
      %2097 = vmatpush1.bf16.msra.mxu0 0
      %2098 = vmatprep.subr.bf16.mxu0 0
      %2099 = vmatpush1.bf16.msra.mxu0 0
      %2100 = vmatprep.subr.bf16.mxu0 0
      %2101 = vmatpush1.bf16.msra.mxu0 0
      %2102 = vmatprep.subr.bf16.mxu0 0
      %2103 = vmatpush1.bf16.msra.mxu0 0
      %2104 = vmatprep.subr.bf16.mxu0 0
      %2105 = vmatpush1.bf16.msra.mxu0 0
      %2106 = vmatprep.mubr.bf16.mxu0 %v2063
      %2107 = vmatmul.mubr.bf16.gmra.mrb[0].mxu0 %v1973
      %v2108 = vpop.f32.mrb[0].mxu0
      %v2109 = vadd.f32 0.0, %v2108
      %v2110 = vpop.f32.mrb[0].mxu0
      %v2111 = vpop.f32.mrb[0].mxu0
      %v2112 = vadd.f32 0.0, %v2111
      %v2113 = vpop.f32.mrb[0].mxu0
      %2114 = vmatprep.mubr.bf16.mxu0 %v2066
      %2115 = vmatmul.mubr.bf16.gmra.mrb[0].mxu0 %v1975
      %v2116 = vpop.f32.mrb[0].mxu0
      %v2117 = vadd.f32 0.0, %v2116
      %v2118 = vpop.f32.mrb[0].mxu0
      %v2119 = vpop.f32.mrb[0].mxu0
      %v2120 = vadd.f32 0.0, %v2119
      %v2121 = vpop.f32.mrb[0].mxu0
      %2122 = vmatprep.mubr.bf16.mxu0 %v2069
      %2123 = vmatmul.mubr.bf16.gmra.mrb[0].mxu0 %v1977
      %v2124 = vpop.f32.mrb[0].mxu0
      %v2125 = vadd.f32 0.0, %v2124
      %v2126 = vpop.f32.mrb[0].mxu0
      %v2127 = vpop.f32.mrb[0].mxu0
      %v2128 = vadd.f32 0.0, %v2127
      %v2129 = vpop.f32.mrb[0].mxu0
      %2130 = vmatprep.mubr.bf16.mxu0 %v2072
      %2131 = vmatmul.mubr.bf16.gmra.mrb[0].mxu0 %v1979
      %v2132 = vpop.f32.mrb[0].mxu0
      %v2133 = vadd.f32 0.0, %v2132
      %v2134 = vpop.f32.mrb[0].mxu0
      %v2135 = vpop.f32.mrb[0].mxu0
      %v2136 = vadd.f32 0.0, %v2135
      %v2137 = vpop.f32.mrb[0].mxu0
      %2138 = vdwg.mxu0
      %v2139 = vadd.f32 %v1948, %v2109
      %v2140 = vadd.f32 %v1949, %v2112
      %v2141 = vadd.f32 %v1950, %v2117
      %v2142 = vadd.f32 %v1951, %v2120
      %v2143 = vadd.f32 %v1952, %v2125
      %v2144 = vadd.f32 %v1953, %v2128
      %v2145 = vadd.f32 %v1954, %v2133
      %v2146 = vadd.f32 %v1955, %v2136
      %v2147 = vld [vmem:[%s1956] sm:$0xfe]
      %v2148 = vld [vmem:[%s1956 + $0x8] sm:$0xfe]
      %v2149 = vld [vmem:[%s1956 + $0x10] sm:$0x1]
      %v2150 = vld [vmem:[%s1956 + $0x18] sm:$0x1]
      %v2151 = vld [vmem:[%s1956 + $0x20] sm:$0xfe]
      %v2152 = vld [vmem:[%s1956 + $0x28] sm:$0xfe]
      %v2153 = vld [vmem:[%s1956 + $0x30] sm:$0x1]
      %v2154 = vld [vmem:[%s1956 + $0x38] sm:$0x1]
      %v2155 = vld [vmem:[%s1956 + $0x40] sm:$0xfe]
      %v2156 = vld [vmem:[%s1956 + $0x48] sm:$0xfe]
      %v2157 = vld [vmem:[%s1956 + $0x50] sm:$0x1]
      %v2158 = vld [vmem:[%s1956 + $0x58] sm:$0x1]
      %v2159 = vld [vmem:[%s1956 + $0x60] sm:$0xfe]
      %v2160 = vld [vmem:[%s1956 + $0x68] sm:$0xfe]
      %v2161 = vld [vmem:[%s1956 + $0x70] sm:$0x1]
      %v2162 = vld [vmem:[%s1956 + $0x78] sm:$0x1]
      %v2163 = vld [vmem:[%s1956 + $0x80] sm:$0xfe]
      %v2164 = vld [vmem:[%s1956 + $0x88] sm:$0xfe]
      %v2165 = vld [vmem:[%s1956 + $0x90] sm:$0x1]
      %v2166 = vld [vmem:[%s1956 + $0x98] sm:$0x1]
      %v2167 = vld [vmem:[%s1956 + $0xa0] sm:$0xfe]
      %v2168 = vld [vmem:[%s1956 + $0xa8] sm:$0xfe]
      %v2169 = vld [vmem:[%s1956 + $0xb0] sm:$0x1]
      %v2170 = vld [vmem:[%s1956 + $0xb8] sm:$0x1]
      %v2171 = vld [vmem:[%s1956 + $0xc0] sm:$0xfe]
      %v2172 = vld [vmem:[%s1956 + $0xc8] sm:$0xfe]
      %v2173 = vld [vmem:[%s1956 + $0xd0] sm:$0x1]
      %v2174 = vld [vmem:[%s1956 + $0xd8] sm:$0x1]
      %v2175 = vld [vmem:[%s1956 + $0xe0] sm:$0xfe]
      %v2176 = vld [vmem:[%s1956 + $0xe8] sm:$0xfe]
      %v2177 = vld [vmem:[%s1956 + $0xf0] sm:$0x1]
      %v2178 = vld [vmem:[%s1956 + $0xf8] sm:$0x1]
      %v2211 = vrot.slane %v2147, 1
      %v2212 = vrot.slane %v2149, 1
      %v2213 = vsel %vm490, %v2211, %v2212
      %v2214 = vrot.slane %v2148, 1
      %v2215 = vrot.slane %v2150, 1
      %v2216 = vsel %vm490, %v2214, %v2215
      %v2217 = vrot.slane %v2151, 1
      %v2218 = vrot.slane %v2153, 1
      %v2219 = vsel %vm490, %v2217, %v2218
      %v2220 = vrot.slane %v2152, 1
      %v2221 = vrot.slane %v2154, 1
      %v2222 = vsel %vm490, %v2220, %v2221
      %v2223 = vrot.slane %v2155, 1
      %v2224 = vrot.slane %v2157, 1
      %v2225 = vsel %vm490, %v2223, %v2224
      %v2226 = vrot.slane %v2156, 1
      %v2227 = vrot.slane %v2158, 1
      %v2228 = vsel %vm490, %v2226, %v2227
      %v2229 = vrot.slane %v2159, 1
      %v2230 = vrot.slane %v2161, 1
      %v2231 = vsel %vm490, %v2229, %v2230
      %v2232 = vrot.slane %v2160, 1
      %v2233 = vrot.slane %v2162, 1
      %v2234 = vsel %vm490, %v2232, %v2233
      %v2235 = vrot.slane %v2163, 1
      %v2236 = vrot.slane %v2165, 1
      %v2237 = vsel %vm490, %v2235, %v2236
      %v2238 = vrot.slane %v2164, 1
      %v2239 = vrot.slane %v2166, 1
      %v2240 = vsel %vm490, %v2238, %v2239
      %v2241 = vrot.slane %v2167, 1
      %v2242 = vrot.slane %v2169, 1
      %v2243 = vsel %vm490, %v2241, %v2242
      %v2244 = vrot.slane %v2168, 1
      %v2245 = vrot.slane %v2170, 1
      %v2246 = vsel %vm490, %v2244, %v2245
      %v2247 = vrot.slane %v2171, 1
      %v2248 = vrot.slane %v2173, 1
      %v2249 = vsel %vm490, %v2247, %v2248
      %v2250 = vrot.slane %v2172, 1
      %v2251 = vrot.slane %v2174, 1
      %v2252 = vsel %vm490, %v2250, %v2251
      %v2253 = vrot.slane %v2175, 1
      %v2254 = vrot.slane %v2177, 1
      %v2255 = vsel %vm490, %v2253, %v2254
      %v2256 = vrot.slane %v2176, 1
      %v2257 = vrot.slane %v2178, 1
      %v2258 = vsel %vm490, %v2256, %v2257
      %v2275 = vpack.c.bf16 %v2219, %v2213
      %v2276 = vpack.c.bf16 %v2222, %v2216
      %v2277 = vpack.c.bf16 %v2231, %v2225
      %v2278 = vpack.c.bf16 %v2234, %v2228
      %v2279 = vpack.c.bf16 %v2243, %v2237
      %v2280 = vpack.c.bf16 %v2246, %v2240
      %v2281 = vpack.c.bf16 %v2255, %v2249
      %v2282 = vpack.c.bf16 %v2258, %v2252
      %s2283 = scalar_lea.vmem %s1, 560
      %v2284 = vld [vmem:[%s2283] sm:$0xf]
      %v2285 = vld [vmem:[%s2283 + $0x4] sm:$0xf]
      %v2286 = vld [vmem:[%s2283 + $0x8] sm:$0xf]
      %v2287 = vld [vmem:[%s2283 + $0xc] sm:$0xf]
      %v2288 = vld [vmem:[%s2283 + $0x10] sm:$0xf]
      %v2289 = vld [vmem:[%s2283 + $0x14] sm:$0xf]
      %v2290 = vld [vmem:[%s2283 + $0x18] sm:$0xf]
      %v2291 = vld [vmem:[%s2283 + $0x1c] sm:$0xf]
      %v2292 = vld [vmem:[%s2283 + $0x20] sm:$0xf]
      %v2293 = vld [vmem:[%s2283 + $0x24] sm:$0xf]
      %v2294 = vld [vmem:[%s2283 + $0x28] sm:$0xf]
      %v2295 = vld [vmem:[%s2283 + $0x2c] sm:$0xf]
      %v2296 = vld [vmem:[%s2283 + $0x30] sm:$0xf]
      %v2297 = vld [vmem:[%s2283 + $0x34] sm:$0xf]
      %v2298 = vld [vmem:[%s2283 + $0x38] sm:$0xf]
      %v2299 = vld [vmem:[%s2283 + $0x3c] sm:$0xf]
      %v2300 = vld [vmem:[%s2283 + $0x40] sm:$0xf]
      %v2301 = vld [vmem:[%s2283 + $0x44] sm:$0xf]
      %v2302 = vld [vmem:[%s2283 + $0x48] sm:$0xf]
      %v2303 = vld [vmem:[%s2283 + $0x4c] sm:$0xf]
      %v2324 = vunpack.c.l.b16 %v2284
      %v2325 = vunpack.c.l.b16 %v2285
      %v2326 = vunpack.c.l.b16 %v2286
      %v2327 = vunpack.c.l.b16 %v2287
      %v2328 = vunpack.c.l.b16 %v2288
      %v2329 = vunpack.c.l.b16 %v2289
      %v2330 = vunpack.c.l.b16 %v2290
      %v2331 = vunpack.c.l.b16 %v2291
      %v2332 = vunpack.c.l.b16 %v2292
      %v2333 = vunpack.c.l.b16 %v2293
      %v2334 = vunpack.c.l.b16 %v2294
      %v2335 = vunpack.c.l.b16 %v2295
      %v2336 = vunpack.c.l.b16 %v2296
      %v2337 = vunpack.c.l.b16 %v2297
      %v2338 = vunpack.c.l.b16 %v2298
      %v2339 = vunpack.c.l.b16 %v2299
      %v2340 = vunpack.c.l.b16 %v2300
      %v2341 = vunpack.c.l.b16 %v2301
      %v2342 = vunpack.c.l.b16 %v2302
      %v2343 = vunpack.c.l.b16 %v2303
      %v2344 = vpack.c.b16 %v2325, %v2324
      %v2345 = vpack.c.b16 %v2327, %v2326
      %v2346 = vpack.c.b16 %v2329, %v2328
      %v2347 = vpack.c.b16 %v2331, %v2330
      %v2348 = vpack.c.b16 %v2333, %v2332
      %v2349 = vpack.c.b16 %v2335, %v2334
      %v2350 = vpack.c.b16 %v2337, %v2336
      %v2351 = vpack.c.b16 %v2339, %v2338
      %v2352 = vpack.c.b16 %v2341, %v2340
      %v2353 = vpack.c.b16 %v2343, %v2342
      %v2365 = vsel %vm341, %v2276, 0
      %v2368 = vsel %vm341, %v2278, 0
      %v2371 = vsel %vm341, %v2280, 0
      %v2374 = vsel %vm341, %v2282, 0
      %2376 = vmatprep.subr.bf16.mxu0 0
      %2377 = vmatpush1.bf16.msra.mxu0 %v2344
      %2378 = vmatprep.subr.bf16.mxu0 0
      %2379 = vmatpush1.bf16.msra.mxu0 %v2345
      %2380 = vmatprep.subr.bf16.mxu0 0
      %2381 = vmatpush1.bf16.msra.mxu0 %v2346
      %2382 = vmatprep.subr.bf16.mxu0 0
      %2383 = vmatpush1.bf16.msra.mxu0 %v2347
      %2384 = vmatprep.subr.bf16.mxu0 0
      %2385 = vmatpush1.bf16.msra.mxu0 %v2348
      %2386 = vmatprep.subr.bf16.mxu0 0
      %2387 = vmatpush1.bf16.msra.mxu0 %v2349
      %2388 = vmatprep.subr.bf16.mxu0 0
      %2389 = vmatpush1.bf16.msra.mxu0 %v2350
      %2390 = vmatprep.subr.bf16.mxu0 0
      %2391 = vmatpush1.bf16.msra.mxu0 %v2351
      %2392 = vmatprep.subr.bf16.mxu0 0
      %2393 = vmatpush1.bf16.msra.mxu0 %v2352
      %2394 = vmatprep.subr.bf16.mxu0 0
      %2395 = vmatpush1.bf16.msra.mxu0 %v2353
      %2396 = vmatprep.subr.bf16.mxu0 0
      %2397 = vmatpush1.bf16.msra.mxu0 0
      %2398 = vmatprep.subr.bf16.mxu0 0
      %2399 = vmatpush1.bf16.msra.mxu0 0
      %2400 = vmatprep.subr.bf16.mxu0 0
      %2401 = vmatpush1.bf16.msra.mxu0 0
      %2402 = vmatprep.subr.bf16.mxu0 0
      %2403 = vmatpush1.bf16.msra.mxu0 0
      %2404 = vmatprep.subr.bf16.mxu0 0
      %2405 = vmatpush1.bf16.msra.mxu0 0
      %2406 = vmatprep.subr.bf16.mxu0 0
      %2407 = vmatpush1.bf16.msra.mxu0 0
      %2408 = vmatprep.mubr.bf16.mxu0 %v2365
      %2409 = vmatmul.mubr.bf16.gmra.mrb[0].mxu0 %v2275
      %v2410 = vpop.f32.mrb[0].mxu0
      %v2411 = vadd.f32 0.0, %v2410
      %v2412 = vpop.f32.mrb[0].mxu0
      %v2413 = vpop.f32.mrb[0].mxu0
      %v2414 = vadd.f32 0.0, %v2413
      %v2415 = vpop.f32.mrb[0].mxu0
      %2416 = vmatprep.mubr.bf16.mxu0 %v2368
      %2417 = vmatmul.mubr.bf16.gmra.mrb[0].mxu0 %v2277
      %v2418 = vpop.f32.mrb[0].mxu0
      %v2419 = vadd.f32 0.0, %v2418
      %v2420 = vpop.f32.mrb[0].mxu0
      %v2421 = vpop.f32.mrb[0].mxu0
      %v2422 = vadd.f32 0.0, %v2421
      %v2423 = vpop.f32.mrb[0].mxu0
      %2424 = vmatprep.mubr.bf16.mxu0 %v2371
      %2425 = vmatmul.mubr.bf16.gmra.mrb[0].mxu0 %v2279
      %v2426 = vpop.f32.mrb[0].mxu0
      %v2427 = vadd.f32 0.0, %v2426
      %v2428 = vpop.f32.mrb[0].mxu0
      %v2429 = vpop.f32.mrb[0].mxu0
      %v2430 = vadd.f32 0.0, %v2429
      %v2431 = vpop.f32.mrb[0].mxu0
      %2432 = vmatprep.mubr.bf16.mxu0 %v2374
      %2433 = vmatmul.mubr.bf16.gmra.mrb[0].mxu0 %v2281
      %v2434 = vpop.f32.mrb[0].mxu0
      %v2435 = vadd.f32 0.0, %v2434
      %v2436 = vpop.f32.mrb[0].mxu0
      %v2437 = vpop.f32.mrb[0].mxu0
      %v2438 = vadd.f32 0.0, %v2437
      %v2439 = vpop.f32.mrb[0].mxu0
      %2440 = vdwg.mxu0
      %v2441 = vadd.f32 %v2139, %v2411
      %v2442 = vadd.f32 %v2140, %v2414
      %v2443 = vadd.f32 %v2141, %v2419
      %v2444 = vadd.f32 %v2142, %v2422
      %v2445 = vadd.f32 %v2143, %v2427
      %v2446 = vadd.f32 %v2144, %v2430
      %v2447 = vadd.f32 %v2145, %v2435
      %v2448 = vadd.f32 %v2146, %v2438
      %v2449 = vld [vmem:[%s1956] sm:$0xfc]
      %v2450 = vld [vmem:[%s1956 + $0x8] sm:$0xfc]
      %v2451 = vld [vmem:[%s1956 + $0x10] sm:$0x3]
      %v2452 = vld [vmem:[%s1956 + $0x18] sm:$0x3]
      %v2453 = vld [vmem:[%s1956 + $0x20] sm:$0xfc]
      %v2454 = vld [vmem:[%s1956 + $0x28] sm:$0xfc]
      %v2455 = vld [vmem:[%s1956 + $0x30] sm:$0x3]
      %v2456 = vld [vmem:[%s1956 + $0x38] sm:$0x3]
      %v2457 = vld [vmem:[%s1956 + $0x40] sm:$0xfc]
      %v2458 = vld [vmem:[%s1956 + $0x48] sm:$0xfc]
      %v2459 = vld [vmem:[%s1956 + $0x50] sm:$0x3]
      %v2460 = vld [vmem:[%s1956 + $0x58] sm:$0x3]
      %v2461 = vld [vmem:[%s1956 + $0x60] sm:$0xfc]
      %v2462 = vld [vmem:[%s1956 + $0x68] sm:$0xfc]
      %v2463 = vld [vmem:[%s1956 + $0x70] sm:$0x3]
      %v2464 = vld [vmem:[%s1956 + $0x78] sm:$0x3]
      %v2465 = vld [vmem:[%s1956 + $0x80] sm:$0xfc]
      %v2466 = vld [vmem:[%s1956 + $0x88] sm:$0xfc]
      %v2467 = vld [vmem:[%s1956 + $0x90] sm:$0x3]
      %v2468 = vld [vmem:[%s1956 + $0x98] sm:$0x3]
      %v2469 = vld [vmem:[%s1956 + $0xa0] sm:$0xfc]
      %v2470 = vld [vmem:[%s1956 + $0xa8] sm:$0xfc]
      %v2471 = vld [vmem:[%s1956 + $0xb0] sm:$0x3]
      %v2472 = vld [vmem:[%s1956 + $0xb8] sm:$0x3]
      %v2473 = vld [vmem:[%s1956 + $0xc0] sm:$0xfc]
      %v2474 = vld [vmem:[%s1956 + $0xc8] sm:$0xfc]
      %v2475 = vld [vmem:[%s1956 + $0xd0] sm:$0x3]
      %v2476 = vld [vmem:[%s1956 + $0xd8] sm:$0x3]
      %v2477 = vld [vmem:[%s1956 + $0xe0] sm:$0xfc]
      %v2478 = vld [vmem:[%s1956 + $0xe8] sm:$0xfc]
      %v2479 = vld [vmem:[%s1956 + $0xf0] sm:$0x3]
      %v2480 = vld [vmem:[%s1956 + $0xf8] sm:$0x3]
      %v2513 = vrot.slane %v2449, 2
      %v2514 = vrot.slane %v2451, 2
      %v2515 = vsel %vm922, %v2513, %v2514
      %v2516 = vrot.slane %v2450, 2
      %v2517 = vrot.slane %v2452, 2
      %v2518 = vsel %vm922, %v2516, %v2517
      %v2519 = vrot.slane %v2453, 2
      %v2520 = vrot.slane %v2455, 2
      %v2521 = vsel %vm922, %v2519, %v2520
      %v2522 = vrot.slane %v2454, 2
      %v2523 = vrot.slane %v2456, 2
      %v2524 = vsel %vm922, %v2522, %v2523
      %v2525 = vrot.slane %v2457, 2
      %v2526 = vrot.slane %v2459, 2
      %v2527 = vsel %vm922, %v2525, %v2526
      %v2528 = vrot.slane %v2458, 2
      %v2529 = vrot.slane %v2460, 2
      %v2530 = vsel %vm922, %v2528, %v2529
      %v2531 = vrot.slane %v2461, 2
      %v2532 = vrot.slane %v2463, 2
      %v2533 = vsel %vm922, %v2531, %v2532
      %v2534 = vrot.slane %v2462, 2
      %v2535 = vrot.slane %v2464, 2
      %v2536 = vsel %vm922, %v2534, %v2535
      %v2537 = vrot.slane %v2465, 2
      %v2538 = vrot.slane %v2467, 2
      %v2539 = vsel %vm922, %v2537, %v2538
      %v2540 = vrot.slane %v2466, 2
      %v2541 = vrot.slane %v2468, 2
      %v2542 = vsel %vm922, %v2540, %v2541
      %v2543 = vrot.slane %v2469, 2
      %v2544 = vrot.slane %v2471, 2
      %v2545 = vsel %vm922, %v2543, %v2544
      %v2546 = vrot.slane %v2470, 2
      %v2547 = vrot.slane %v2472, 2
      %v2548 = vsel %vm922, %v2546, %v2547
      %v2549 = vrot.slane %v2473, 2
      %v2550 = vrot.slane %v2475, 2
      %v2551 = vsel %vm922, %v2549, %v2550
      %v2552 = vrot.slane %v2474, 2
      %v2553 = vrot.slane %v2476, 2
      %v2554 = vsel %vm922, %v2552, %v2553
      %v2555 = vrot.slane %v2477, 2
      %v2556 = vrot.slane %v2479, 2
      %v2557 = vsel %vm922, %v2555, %v2556
      %v2558 = vrot.slane %v2478, 2
      %v2559 = vrot.slane %v2480, 2
      %v2560 = vsel %vm922, %v2558, %v2559
      %v2577 = vpack.c.bf16 %v2521, %v2515
      %v2578 = vpack.c.bf16 %v2524, %v2518
      %v2579 = vpack.c.bf16 %v2533, %v2527
      %v2580 = vpack.c.bf16 %v2536, %v2530
      %v2581 = vpack.c.bf16 %v2545, %v2539
      %v2582 = vpack.c.bf16 %v2548, %v2542
      %v2583 = vpack.c.bf16 %v2557, %v2551
      %v2584 = vpack.c.bf16 %v2560, %v2554
      %s2585 = scalar_lea.vmem %s1, 640
      %v2586 = vld [vmem:[%s2585] sm:$0xf]
      %v2587 = vld [vmem:[%s2585 + $0x4] sm:$0xf]
      %v2588 = vld [vmem:[%s2585 + $0x8] sm:$0xf]
      %v2589 = vld [vmem:[%s2585 + $0xc] sm:$0xf]
      %v2590 = vld [vmem:[%s2585 + $0x10] sm:$0xf]
      %v2591 = vld [vmem:[%s2585 + $0x14] sm:$0xf]
      %v2592 = vld [vmem:[%s2585 + $0x18] sm:$0xf]
      %v2593 = vld [vmem:[%s2585 + $0x1c] sm:$0xf]
      %v2594 = vld [vmem:[%s2585 + $0x20] sm:$0xf]
      %v2595 = vld [vmem:[%s2585 + $0x24] sm:$0xf]
      %v2596 = vld [vmem:[%s2585 + $0x28] sm:$0xf]
      %v2597 = vld [vmem:[%s2585 + $0x2c] sm:$0xf]
      %v2598 = vld [vmem:[%s2585 + $0x30] sm:$0xf]
      %v2599 = vld [vmem:[%s2585 + $0x34] sm:$0xf]
      %v2600 = vld [vmem:[%s2585 + $0x38] sm:$0xf]
      %v2601 = vld [vmem:[%s2585 + $0x3c] sm:$0xf]
      %v2602 = vld [vmem:[%s2585 + $0x40] sm:$0xf]
      %v2603 = vld [vmem:[%s2585 + $0x44] sm:$0xf]
      %v2604 = vld [vmem:[%s2585 + $0x48] sm:$0xf]
      %v2605 = vld [vmem:[%s2585 + $0x4c] sm:$0xf]
      %v2626 = vunpack.c.l.b16 %v2586
      %v2627 = vunpack.c.l.b16 %v2587
      %v2628 = vunpack.c.l.b16 %v2588
      %v2629 = vunpack.c.l.b16 %v2589
      %v2630 = vunpack.c.l.b16 %v2590
      %v2631 = vunpack.c.l.b16 %v2591
      %v2632 = vunpack.c.l.b16 %v2592
      %v2633 = vunpack.c.l.b16 %v2593
      %v2634 = vunpack.c.l.b16 %v2594
      %v2635 = vunpack.c.l.b16 %v2595
      %v2636 = vunpack.c.l.b16 %v2596
      %v2637 = vunpack.c.l.b16 %v2597
      %v2638 = vunpack.c.l.b16 %v2598
      %v2639 = vunpack.c.l.b16 %v2599
      %v2640 = vunpack.c.l.b16 %v2600
      %v2641 = vunpack.c.l.b16 %v2601
      %v2642 = vunpack.c.l.b16 %v2602
      %v2643 = vunpack.c.l.b16 %v2603
      %v2644 = vunpack.c.l.b16 %v2604
      %v2645 = vunpack.c.l.b16 %v2605
      %v2646 = vpack.c.b16 %v2627, %v2626
      %v2647 = vpack.c.b16 %v2629, %v2628
      %v2648 = vpack.c.b16 %v2631, %v2630
      %v2649 = vpack.c.b16 %v2633, %v2632
      %v2650 = vpack.c.b16 %v2635, %v2634
      %v2651 = vpack.c.b16 %v2637, %v2636
      %v2652 = vpack.c.b16 %v2639, %v2638
      %v2653 = vpack.c.b16 %v2641, %v2640
      %v2654 = vpack.c.b16 %v2643, %v2642
      %v2655 = vpack.c.b16 %v2645, %v2644
      %v2667 = vsel %vm341, %v2578, 0
      %v2670 = vsel %vm341, %v2580, 0
      %v2673 = vsel %vm341, %v2582, 0
      %v2676 = vsel %vm341, %v2584, 0
      %2678 = vmatprep.subr.bf16.mxu0 0
      %2679 = vmatpush1.bf16.msra.mxu0 %v2646
      %2680 = vmatprep.subr.bf16.mxu0 0
      %2681 = vmatpush1.bf16.msra.mxu0 %v2647
      %2682 = vmatprep.subr.bf16.mxu0 0
      %2683 = vmatpush1.bf16.msra.mxu0 %v2648
      %2684 = vmatprep.subr.bf16.mxu0 0
      %2685 = vmatpush1.bf16.msra.mxu0 %v2649
      %2686 = vmatprep.subr.bf16.mxu0 0
      %2687 = vmatpush1.bf16.msra.mxu0 %v2650
      %2688 = vmatprep.subr.bf16.mxu0 0
      %2689 = vmatpush1.bf16.msra.mxu0 %v2651
      %2690 = vmatprep.subr.bf16.mxu0 0
      %2691 = vmatpush1.bf16.msra.mxu0 %v2652
      %2692 = vmatprep.subr.bf16.mxu0 0
      %2693 = vmatpush1.bf16.msra.mxu0 %v2653
      %2694 = vmatprep.subr.bf16.mxu0 0
      %2695 = vmatpush1.bf16.msra.mxu0 %v2654
      %2696 = vmatprep.subr.bf16.mxu0 0
      %2697 = vmatpush1.bf16.msra.mxu0 %v2655
      %2698 = vmatprep.subr.bf16.mxu0 0
      %2699 = vmatpush1.bf16.msra.mxu0 0
      %2700 = vmatprep.subr.bf16.mxu0 0
      %2701 = vmatpush1.bf16.msra.mxu0 0
      %2702 = vmatprep.subr.bf16.mxu0 0
      %2703 = vmatpush1.bf16.msra.mxu0 0
      %2704 = vmatprep.subr.bf16.mxu0 0
      %2705 = vmatpush1.bf16.msra.mxu0 0
      %2706 = vmatprep.subr.bf16.mxu0 0
      %2707 = vmatpush1.bf16.msra.mxu0 0
      %2708 = vmatprep.subr.bf16.mxu0 0
      %2709 = vmatpush1.bf16.msra.mxu0 0
      %2710 = vmatprep.mubr.bf16.mxu0 %v2667
      %2711 = vmatmul.mubr.bf16.gmra.mrb[0].mxu0 %v2577
      %v2712 = vpop.f32.mrb[0].mxu0
      %v2713 = vadd.f32 0.0, %v2712
      %v2714 = vpop.f32.mrb[0].mxu0
      %v2715 = vpop.f32.mrb[0].mxu0
      %v2716 = vadd.f32 0.0, %v2715
      %v2717 = vpop.f32.mrb[0].mxu0
      %2718 = vmatprep.mubr.bf16.mxu0 %v2670
      %2719 = vmatmul.mubr.bf16.gmra.mrb[0].mxu0 %v2579
      %v2720 = vpop.f32.mrb[0].mxu0
      %v2721 = vadd.f32 0.0, %v2720
      %v2722 = vpop.f32.mrb[0].mxu0
      %v2723 = vpop.f32.mrb[0].mxu0
      %v2724 = vadd.f32 0.0, %v2723
      %v2725 = vpop.f32.mrb[0].mxu0
      %2726 = vmatprep.mubr.bf16.mxu0 %v2673
      %2727 = vmatmul.mubr.bf16.gmra.mrb[0].mxu0 %v2581
      %v2728 = vpop.f32.mrb[0].mxu0
      %v2729 = vadd.f32 0.0, %v2728
      %v2730 = vpop.f32.mrb[0].mxu0
      %v2731 = vpop.f32.mrb[0].mxu0
      %v2732 = vadd.f32 0.0, %v2731
      %v2733 = vpop.f32.mrb[0].mxu0
      %2734 = vmatprep.mubr.bf16.mxu0 %v2676
      %2735 = vmatmul.mubr.bf16.gmra.mrb[0].mxu0 %v2583
      %v2736 = vpop.f32.mrb[0].mxu0
      %v2737 = vadd.f32 0.0, %v2736
      %v2738 = vpop.f32.mrb[0].mxu0
      %v2739 = vpop.f32.mrb[0].mxu0
      %v2740 = vadd.f32 0.0, %v2739
      %v2741 = vpop.f32.mrb[0].mxu0
      %2742 = vdwg.mxu0
      %v2743 = vadd.f32 %v2441, %v2713
      %v2744 = vadd.f32 %v2442, %v2716
      %v2745 = vadd.f32 %v2443, %v2721
      %v2746 = vadd.f32 %v2444, %v2724
      %v2747 = vadd.f32 %v2445, %v2729
      %v2748 = vadd.f32 %v2446, %v2732
      %v2749 = vadd.f32 %v2447, %v2737
      %v2750 = vadd.f32 %v2448, %v2740
      %v2751 = vld [vmem:[%s2] sm:$0x1]
      %v2753 = vlaneseq
      %v2754 = vshrl.u32 %v2753, 7
      %v2755 = vsub.s32 0, %v2754
      %v2756 = vrot.slane %v2751, %v2755
      %v2758 = vadd.f32 %v2743, %v2756
      %v2759 = vadd.f32 %v2744, %v2756
      %v2760 = vadd.f32 %v2745, %v2756
      %v2761 = vadd.f32 %v2746, %v2756
      %v2762 = vadd.f32 %v2747, %v2756
      %v2763 = vadd.f32 %v2748, %v2756
      %v2764 = vadd.f32 %v2749, %v2756
      %v2765 = vadd.f32 %v2750, %v2756
      %v2766 = vadd.f32 %v2758, %v2759
      %v2767 = vadd.f32 %v2766, %v2760
      %v2768 = vadd.f32 %v2767, %v2761
      %v2769 = vadd.f32 %v2768, %v2762
      %v2770 = vadd.f32 %v2769, %v2763
      %v2771 = vadd.f32 %v2770, %v2764
      %v2772 = vadd.f32 %v2771, %v2765
      %v2773 = vrot.slane %v2772, 4
      %v2774 = vadd.f32 %v2772, %v2773
      %v2775 = vrot.slane %v2774, 2
      %v2776 = vadd.f32 %v2774, %v2775
      %v2777 = vrot.slane %v2776, 1
      %v2778 = vadd.f32 %v2776, %v2777
      %v2779 = vmul.f32 %v2758, %v2758
      %v2780 = vmul.f32 %v2759, %v2759
      %v2781 = vmul.f32 %v2760, %v2760
      %v2782 = vmul.f32 %v2761, %v2761
      %v2783 = vmul.f32 %v2762, %v2762
      %v2784 = vmul.f32 %v2763, %v2763
      %v2785 = vmul.f32 %v2764, %v2764
      %v2786 = vmul.f32 %v2765, %v2765
      %v2787 = vadd.f32 %v2779, %v2780
      %v2788 = vadd.f32 %v2787, %v2781
      %v2789 = vadd.f32 %v2788, %v2782
      %v2790 = vadd.f32 %v2789, %v2783
      %v2791 = vadd.f32 %v2790, %v2784
      %v2792 = vadd.f32 %v2791, %v2785
      %v2793 = vadd.f32 %v2792, %v2786
      %v2794 = vrot.slane %v2793, 4
      %v2795 = vadd.f32 %v2793, %v2794
      %v2796 = vrot.slane %v2795, 2
      %v2797 = vadd.f32 %v2795, %v2796
      %v2798 = vrot.slane %v2797, 1
      %v2799 = vadd.f32 %v2797, %v2798
      %v2800 = vld [vmem:[%s5] sm:$0xff]
      %v2801 = vld [vmem:[%s5 + $0x8] sm:$0xff]
      %v2802 = vld [vmem:[%s5 + $0x10] sm:$0xff]
      %v2803 = vld [vmem:[%s5 + $0x18] sm:$0xff]
      %v2804 = vld [vmem:[%s5 + $0x20] sm:$0xff]
      %v2805 = vld [vmem:[%s5 + $0x28] sm:$0xff]
      %v2806 = vld [vmem:[%s5 + $0x30] sm:$0xff]
      %v2807 = vld [vmem:[%s5 + $0x38] sm:$0xff]
      %v2808 = vld [vmem:[%s5 + $0x40] sm:$0xff]
      %v2809 = vld [vmem:[%s5 + $0x48] sm:$0xff]
      %v2810 = vld [vmem:[%s5 + $0x50] sm:$0xff]
      %v2811 = vld [vmem:[%s5 + $0x58] sm:$0xff]
      %v2812 = vld [vmem:[%s5 + $0x60] sm:$0xff]
      %v2813 = vld [vmem:[%s5 + $0x68] sm:$0xff]
      %v2814 = vld [vmem:[%s5 + $0x70] sm:$0xff]
      %v2815 = vld [vmem:[%s5 + $0x78] sm:$0xff]
      %2816 = vmatprep.subr.mxu0 0.0
      %2817 = vmatpush1.msra.mxu0 %v2800
      %2818 = vmatprep.subr.mxu0 0.0
      %2819 = vmatpush1.msra.mxu0 %v2801
      %2820 = vmatprep.subr.mxu0 0.0
      %2821 = vmatpush1.msra.mxu0 %v2802
      %2822 = vmatprep.subr.mxu0 0.0
      %2823 = vmatpush1.msra.mxu0 %v2803
      %2824 = vmatprep.subr.mxu0 0.0
      %2825 = vmatpush1.msra.mxu0 %v2804
      %2826 = vmatprep.subr.mxu0 0.0
      %2827 = vmatpush1.msra.mxu0 %v2805
      %2828 = vmatprep.subr.mxu0 0.0
      %2829 = vmatpush1.msra.mxu0 %v2806
      %2830 = vmatprep.subr.mxu0 0.0
      %2831 = vmatpush1.msra.mxu0 %v2807
      %2832 = vmatprep.subr.mxu0 0.0
      %2833 = vmatpush1.msra.mxu0 %v2808
      %2834 = vmatprep.subr.mxu0 0.0
      %2835 = vmatpush1.msra.mxu0 %v2809
      %2836 = vmatprep.subr.mxu0 0.0
      %2837 = vmatpush1.msra.mxu0 %v2810
      %2838 = vmatprep.subr.mxu0 0.0
      %2839 = vmatpush1.msra.mxu0 %v2811
      %2840 = vmatprep.subr.mxu0 0.0
      %2841 = vmatpush1.msra.mxu0 %v2812
      %2842 = vmatprep.subr.mxu0 0.0
      %2843 = vmatpush1.msra.mxu0 %v2813
      %2844 = vmatprep.subr.mxu0 0.0
      %2845 = vmatpush1.msra.mxu0 %v2814
      %2846 = vmatprep.subr.mxu0 0.0
      %2847 = vmatpush1.msra.mxu0 %v2815
      %2848 = vmatprep.subr.mxu0 0.0
      %2849 = vmatpush1.msra.mxu0 0.0
      %2850 = vmatprep.subr.mxu0 0.0
      %2851 = vmatpush1.msra.mxu0 0.0
      %2852 = vmatprep.subr.mxu0 0.0
      %2853 = vmatpush1.msra.mxu0 0.0
      %2854 = vmatprep.subr.mxu0 0.0
      %2855 = vmatpush1.msra.mxu0 0.0
      %2856 = vmatprep.subr.mxu0 0.0
      %2857 = vmatpush1.msra.mxu0 0.0
      %2858 = vmatprep.subr.mxu0 0.0
      %2859 = vmatpush1.msra.mxu0 0.0
      %2860 = vmatprep.subr.mxu0 0.0
      %2861 = vmatpush1.msra.mxu0 0.0
      %2862 = vmatprep.subr.mxu0 0.0
      %2863 = vmatpush1.msra.mxu0 0.0
      %2864 = vmatprep.subr.mxu0 0.0
      %2865 = vmatpush1.msra.mxu0 0.0
      %2866 = vmatprep.subr.mxu0 0.0
      %2867 = vmatpush1.msra.mxu0 0.0
      %2868 = vmatprep.subr.mxu0 0.0
      %2869 = vmatpush1.msra.mxu0 0.0
      %2870 = vmatprep.subr.mxu0 0.0
      %2871 = vmatpush1.msra.mxu0 0.0
      %2872 = vmatprep.subr.mxu0 0.0
      %2873 = vmatpush1.msra.mxu0 0.0
      %2874 = vmatprep.subr.mxu0 0.0
      %2875 = vmatpush1.msra.mxu0 0.0
      %2876 = vmatprep.subr.mxu0 0.0
      %2877 = vmatpush1.msra.mxu0 0.0
      %2878 = vmatprep.subr.mxu0 0.0
      %2879 = vmatpush1.msra.mxu0 0.0
      %2880 = vmatprep.mubr.f32.mxu0 0.0
      %2881 = vmatmul.mubr.f32.gmra.mrb[0].mxu0 %v2778
      %v2882 = vpop.f32.mrb[0].mxu0
      %v2883 = vadd.f32 0.0, %v2882
      %v2884 = vpop.f32.mrb[0].mxu0
      %2885 = vdwg.mxu0
      %2886 = vmatprep.subr.mxu0 0.0
      %2887 = vmatpush1.msra.mxu0 %v2800
      %2888 = vmatprep.subr.mxu0 0.0
      %2889 = vmatpush1.msra.mxu0 %v2801
      %2890 = vmatprep.subr.mxu0 0.0
      %2891 = vmatpush1.msra.mxu0 %v2802
      %2892 = vmatprep.subr.mxu0 0.0
      %2893 = vmatpush1.msra.mxu0 %v2803
      %2894 = vmatprep.subr.mxu0 0.0
      %2895 = vmatpush1.msra.mxu0 %v2804
      %2896 = vmatprep.subr.mxu0 0.0
      %2897 = vmatpush1.msra.mxu0 %v2805
      %2898 = vmatprep.subr.mxu0 0.0
      %2899 = vmatpush1.msra.mxu0 %v2806
      %2900 = vmatprep.subr.mxu0 0.0
      %2901 = vmatpush1.msra.mxu0 %v2807
      %2902 = vmatprep.subr.mxu0 0.0
      %2903 = vmatpush1.msra.mxu0 %v2808
      %2904 = vmatprep.subr.mxu0 0.0
      %2905 = vmatpush1.msra.mxu0 %v2809
      %2906 = vmatprep.subr.mxu0 0.0
      %2907 = vmatpush1.msra.mxu0 %v2810
      %2908 = vmatprep.subr.mxu0 0.0
      %2909 = vmatpush1.msra.mxu0 %v2811
      %2910 = vmatprep.subr.mxu0 0.0
      %2911 = vmatpush1.msra.mxu0 %v2812
      %2912 = vmatprep.subr.mxu0 0.0
      %2913 = vmatpush1.msra.mxu0 %v2813
      %2914 = vmatprep.subr.mxu0 0.0
      %2915 = vmatpush1.msra.mxu0 %v2814
      %2916 = vmatprep.subr.mxu0 0.0
      %2917 = vmatpush1.msra.mxu0 %v2815
      %2918 = vmatprep.subr.mxu0 0.0
      %2919 = vmatpush1.msra.mxu0 0.0
      %2920 = vmatprep.subr.mxu0 0.0
      %2921 = vmatpush1.msra.mxu0 0.0
      %2922 = vmatprep.subr.mxu0 0.0
      %2923 = vmatpush1.msra.mxu0 0.0
      %2924 = vmatprep.subr.mxu0 0.0
      %2925 = vmatpush1.msra.mxu0 0.0
      %2926 = vmatprep.subr.mxu0 0.0
      %2927 = vmatpush1.msra.mxu0 0.0
      %2928 = vmatprep.subr.mxu0 0.0
      %2929 = vmatpush1.msra.mxu0 0.0
      %2930 = vmatprep.subr.mxu0 0.0
      %2931 = vmatpush1.msra.mxu0 0.0
      %2932 = vmatprep.subr.mxu0 0.0
      %2933 = vmatpush1.msra.mxu0 0.0
      %2934 = vmatprep.subr.mxu0 0.0
      %2935 = vmatpush1.msra.mxu0 0.0
      %2936 = vmatprep.subr.mxu0 0.0
      %2937 = vmatpush1.msra.mxu0 0.0
      %2938 = vmatprep.subr.mxu0 0.0
      %2939 = vmatpush1.msra.mxu0 0.0
      %2940 = vmatprep.subr.mxu0 0.0
      %2941 = vmatpush1.msra.mxu0 0.0
      %2942 = vmatprep.subr.mxu0 0.0
      %2943 = vmatpush1.msra.mxu0 0.0
      %2944 = vmatprep.subr.mxu0 0.0
      %2945 = vmatpush1.msra.mxu0 0.0
      %2946 = vmatprep.subr.mxu0 0.0
      %2947 = vmatpush1.msra.mxu0 0.0
      %2948 = vmatprep.subr.mxu0 0.0
      %2949 = vmatpush1.msra.mxu0 0.0
      %2950 = vmatprep.mubr.f32.mxu0 0.0
      %2951 = vmatmul.mubr.f32.gmra.mrb[0].mxu0 %v2799
      %v2952 = vpop.f32.mrb[0].mxu0
      %v2953 = vadd.f32 0.0, %v2952
      %v2954 = vpop.f32.mrb[0].mxu0
      %2955 = vdwg.mxu0
      %v2956 = vmul.f32 %v2883, 0.0009765625
      %v2957 = vmul.f32 %v2953, 0.0009765625
      %v2958 = vmul.f32 %v2956, %v2956
      %v2959 = vsub.f32 %v2957, %v2958
      %v2960 = vmax.f32 %v2959, 0.0
      %v2961 = vadd.f32 %v2960, 1e-05
      %v2962 = vrsqrt.pop %v2961
      %v2963 = vld [vmem:[%s6] sm:$0xff]
      %vm2964 = vcmask 64512
      %v2966 = vsel %vm2964, %v2956, 0
      %2968 = vmatprep.subr.mxu0 0.0
      %2969 = vmatpush1.msra.mxu0 %v2963
      %2970 = vmatprep.subr.mxu0 0.0
      %2971 = vmatpush1.msra.mxu0 0.0
      %2972 = vmatprep.subr.mxu0 0.0
      %2973 = vmatpush1.msra.mxu0 0.0
      %2974 = vmatprep.subr.mxu0 0.0
      %2975 = vmatpush1.msra.mxu0 0.0
      %2976 = vmatprep.subr.mxu0 0.0
      %2977 = vmatpush1.msra.mxu0 0.0
      %2978 = vmatprep.subr.mxu0 0.0
      %2979 = vmatpush1.msra.mxu0 0.0
      %2980 = vmatprep.subr.mxu0 0.0
      %2981 = vmatpush1.msra.mxu0 0.0
      %2982 = vmatprep.subr.mxu0 0.0
      %2983 = vmatpush1.msra.mxu0 0.0
      %2984 = vmatprep.subr.mxu0 0.0
      %2985 = vmatpush1.msra.mxu0 0.0
      %2986 = vmatprep.subr.mxu0 0.0
      %2987 = vmatpush1.msra.mxu0 0.0
      %2988 = vmatprep.subr.mxu0 0.0
      %2989 = vmatpush1.msra.mxu0 0.0
      %2990 = vmatprep.subr.mxu0 0.0
      %2991 = vmatpush1.msra.mxu0 0.0
      %2992 = vmatprep.subr.mxu0 0.0
      %2993 = vmatpush1.msra.mxu0 0.0
      %2994 = vmatprep.subr.mxu0 0.0
      %2995 = vmatpush1.msra.mxu0 0.0
      %2996 = vmatprep.subr.mxu0 0.0
      %2997 = vmatpush1.msra.mxu0 0.0
      %2998 = vmatprep.subr.mxu0 0.0
      %2999 = vmatpush1.msra.mxu0 0.0
      %3000 = vmatprep.subr.mxu0 0.0
      %3001 = vmatpush1.msra.mxu0 0.0
      %3002 = vmatprep.subr.mxu0 0.0
      %3003 = vmatpush1.msra.mxu0 0.0
      %3004 = vmatprep.subr.mxu0 0.0
      %3005 = vmatpush1.msra.mxu0 0.0
      %3006 = vmatprep.subr.mxu0 0.0
      %3007 = vmatpush1.msra.mxu0 0.0
      %3008 = vmatprep.subr.mxu0 0.0
      %3009 = vmatpush1.msra.mxu0 0.0
      %3010 = vmatprep.subr.mxu0 0.0
      %3011 = vmatpush1.msra.mxu0 0.0
      %3012 = vmatprep.subr.mxu0 0.0
      %3013 = vmatpush1.msra.mxu0 0.0
      %3014 = vmatprep.subr.mxu0 0.0
      %3015 = vmatpush1.msra.mxu0 0.0
      %3016 = vmatprep.subr.mxu0 0.0
      %3017 = vmatpush1.msra.mxu0 0.0
      %3018 = vmatprep.subr.mxu0 0.0
      %3019 = vmatpush1.msra.mxu0 0.0
      %3020 = vmatprep.subr.mxu0 0.0
      %3021 = vmatpush1.msra.mxu0 0.0
      %3022 = vmatprep.subr.mxu0 0.0
      %3023 = vmatpush1.msra.mxu0 0.0
      %3024 = vmatprep.subr.mxu0 0.0
      %3025 = vmatpush1.msra.mxu0 0.0
      %3026 = vmatprep.subr.mxu0 0.0
      %3027 = vmatpush1.msra.mxu0 0.0
      %3028 = vmatprep.subr.mxu0 0.0
      %3029 = vmatpush1.msra.mxu0 0.0
      %3030 = vmatprep.subr.mxu0 0.0
      %3031 = vmatpush1.msra.mxu0 0.0
      %3032 = vmatprep.mubr.f32.mxu0 0.0
      %3033 = vmatmul.mubr.f32.gmra.mrb[0].mxu0 %v2966
      %v3034 = vpop.f32.mrb[0].mxu0
      %v3035 = vadd.f32 0.0, %v3034
      %v3036 = vpop.f32.mrb[0].mxu0
      %3037 = vdwg.mxu0
      %v3039 = vsel %vm2964, %v2962, 0
      %3041 = vmatprep.subr.mxu0 0.0
      %3042 = vmatpush1.msra.mxu0 %v2963
      %3043 = vmatprep.subr.mxu0 0.0
      %3044 = vmatpush1.msra.mxu0 0.0
      %3045 = vmatprep.subr.mxu0 0.0
      %3046 = vmatpush1.msra.mxu0 0.0
      %3047 = vmatprep.subr.mxu0 0.0
      %3048 = vmatpush1.msra.mxu0 0.0
      %3049 = vmatprep.subr.mxu0 0.0
      %3050 = vmatpush1.msra.mxu0 0.0
      %3051 = vmatprep.subr.mxu0 0.0
      %3052 = vmatpush1.msra.mxu0 0.0
      %3053 = vmatprep.subr.mxu0 0.0
      %3054 = vmatpush1.msra.mxu0 0.0
      %3055 = vmatprep.subr.mxu0 0.0
      %3056 = vmatpush1.msra.mxu0 0.0
      %3057 = vmatprep.subr.mxu0 0.0
      %3058 = vmatpush1.msra.mxu0 0.0
      %3059 = vmatprep.subr.mxu0 0.0
      %3060 = vmatpush1.msra.mxu0 0.0
      %3061 = vmatprep.subr.mxu0 0.0
      %3062 = vmatpush1.msra.mxu0 0.0
      %3063 = vmatprep.subr.mxu0 0.0
      %3064 = vmatpush1.msra.mxu0 0.0
      %3065 = vmatprep.subr.mxu0 0.0
      %3066 = vmatpush1.msra.mxu0 0.0
      %3067 = vmatprep.subr.mxu0 0.0
      %3068 = vmatpush1.msra.mxu0 0.0
      %3069 = vmatprep.subr.mxu0 0.0
      %3070 = vmatpush1.msra.mxu0 0.0
      %3071 = vmatprep.subr.mxu0 0.0
      %3072 = vmatpush1.msra.mxu0 0.0
      %3073 = vmatprep.subr.mxu0 0.0
      %3074 = vmatpush1.msra.mxu0 0.0
      %3075 = vmatprep.subr.mxu0 0.0
      %3076 = vmatpush1.msra.mxu0 0.0
      %3077 = vmatprep.subr.mxu0 0.0
      %3078 = vmatpush1.msra.mxu0 0.0
      %3079 = vmatprep.subr.mxu0 0.0
      %3080 = vmatpush1.msra.mxu0 0.0
      %3081 = vmatprep.subr.mxu0 0.0
      %3082 = vmatpush1.msra.mxu0 0.0
      %3083 = vmatprep.subr.mxu0 0.0
      %3084 = vmatpush1.msra.mxu0 0.0
      %3085 = vmatprep.subr.mxu0 0.0
      %3086 = vmatpush1.msra.mxu0 0.0
      %3087 = vmatprep.subr.mxu0 0.0
      %3088 = vmatpush1.msra.mxu0 0.0
      %3089 = vmatprep.subr.mxu0 0.0
      %3090 = vmatpush1.msra.mxu0 0.0
      %3091 = vmatprep.subr.mxu0 0.0
      %3092 = vmatpush1.msra.mxu0 0.0
      %3093 = vmatprep.subr.mxu0 0.0
      %3094 = vmatpush1.msra.mxu0 0.0
      %3095 = vmatprep.subr.mxu0 0.0
      %3096 = vmatpush1.msra.mxu0 0.0
      %3097 = vmatprep.subr.mxu0 0.0
      %3098 = vmatpush1.msra.mxu0 0.0
      %3099 = vmatprep.subr.mxu0 0.0
      %3100 = vmatpush1.msra.mxu0 0.0
      %3101 = vmatprep.subr.mxu0 0.0
      %3102 = vmatpush1.msra.mxu0 0.0
      %3103 = vmatprep.subr.mxu0 0.0
      %3104 = vmatpush1.msra.mxu0 0.0
      %3105 = vmatprep.mubr.f32.mxu0 0.0
      %3106 = vmatmul.mubr.f32.gmra.mrb[0].mxu0 %v3039
      %v3107 = vpop.f32.mrb[0].mxu0
      %v3108 = vadd.f32 0.0, %v3107
      %v3109 = vpop.f32.mrb[0].mxu0
      %3110 = vdwg.mxu0
      %v3111 = vld [vmem:[%s3] sm:$0x1]
      %v3112 = vmul.f32 %v3108, %v3111
      %v3113 = vld [vmem:[%s4] sm:$0x1]
      %v3114 = vmul.f32 %v3035, %v3112
      %v3115 = vsub.f32 %v3113, %v3114
      %v3116 = vlaneseq
      %v3117 = vshrl.u32 %v3116, 7
      %v3118 = vsub.s32 0, %v3117
      %v3119 = vrot.slane %v3112, %v3118
      %v3120 = vmul.f32 %v2758, %v3119
      %v3121 = vmul.f32 %v2759, %v3119
      %v3122 = vmul.f32 %v2760, %v3119
      %v3123 = vmul.f32 %v2761, %v3119
      %v3124 = vmul.f32 %v2762, %v3119
      %v3125 = vmul.f32 %v2763, %v3119
      %v3126 = vmul.f32 %v2764, %v3119
      %v3127 = vmul.f32 %v2765, %v3119
      %v3129 = vlaneseq
      %v3130 = vshrl.u32 %v3129, 7
      %v3131 = vsub.s32 0, %v3130
      %v3132 = vrot.slane %v3115, %v3131
      %v3134 = vadd.f32 %v3120, %v3132
      %v3135 = vadd.f32 %v3121, %v3132
      %v3136 = vadd.f32 %v3122, %v3132
      %v3137 = vadd.f32 %v3123, %v3132
      %v3138 = vadd.f32 %v3124, %v3132
      %v3139 = vadd.f32 %v3125, %v3132
      %v3140 = vadd.f32 %v3126, %v3132
      %v3141 = vadd.f32 %v3127, %v3132
      %v3142 = vmax.f32 %v3134, 0.0
      %v3143 = vmax.f32 %v3135, 0.0
      %v3144 = vmax.f32 %v3136, 0.0
      %v3145 = vmax.f32 %v3137, 0.0
      %v3146 = vmax.f32 %v3138, 0.0
      %v3147 = vmax.f32 %v3139, 0.0
      %v3148 = vmax.f32 %v3140, 0.0
      %v3149 = vmax.f32 %v3141, 0.0
      %3150 = vst [vmem:[%s278] sm:$0xff] %v3142
      %3151 = vst [vmem:[%s278 + $0x8] sm:$0xff] %v3143
      %3152 = vst [vmem:[%s278 + $0x10] sm:$0xff] %v3144
      %3153 = vst [vmem:[%s278 + $0x18] sm:$0xff] %v3145
      %3154 = vst [vmem:[%s278 + $0x20] sm:$0xff] %v3146
      %3155 = vst [vmem:[%s278 + $0x28] sm:$0xff] %v3147
      %3156 = vst [vmem:[%s278 + $0x30] sm:$0xff] %v3148
      %3157 = vst [vmem:[%s278 + $0x38] sm:$0xff] %v3149
      %p3158 = scmp.lt.s32.totalorder %s18, 1
      %s3159 = scalar_select %p3158, %s18, 1
      %s3160 = smul.addr %s3159, 8
      %s3161 = smul.addr %s3160, 8
      %s3162 = scalar_lea.vmem %s7, %s3161
      // Predicated region
      $region49: #{_lambda_.3} parent=47 // pred_check
        %p3163 = pneg %p188
      $region50: #{_lambda_.3} parent=47 // pred_check_branch
        %3165 = sbr.rel (%p3163) target = $region52
      $region51: #{_lambda_.3} parent=47 // pred_region
        _
      $region52: #{_lambda_.3} parent=47 // pred_fallthru
        _
    $region48: #{_lambda_.3} parent=5 // pred_fallthru
      _
    %p3166 = scmp.le.s32.totalorder 2, %s13
    // Predicated region
    $region53: #{_lambda_.3} parent=5 // pred_check
      %p3167 = pneg %p3166
    $region54: #{_lambda_.3} parent=5 // pred_check_branch
      %3169 = sbr.rel (%p3167) target = $region56
    $region55: #{_lambda_.3} parent=5 // pred_region
      %s3170 = ssub.s32 %s13, 2
      // Predicated region
      $region57: #{_lambda_.3} parent=55 // pred_check
        %p3171 = pneg %p194
      $region58: #{_lambda_.3} parent=55 // pred_check_branch
        %3173 = sbr.rel (%p3171) target = $region60
      $region59: #{_lambda_.3} parent=55 // pred_region
        %p3174 = scmp.lt.s32.totalorder %s19, 1
        %s3175 = scalar_select %p3174, %s19, 1
        %s3176 = smul.addr %s3175, 8
        %s3177 = smul.addr %s3176, 8
        %s3178 = scalar_lea.vmem %s7, %s3177
      $region60: #{_lambda_.3} parent=55 // pred_fallthru
        _
    $region56: #{_lambda_.3} parent=5 // pred_fallthru
      _
  $region6: #{_lambda_.3} parent=0 // loop_footer
    %s17 = sadd.s32 1, %s13
  $region7: #{_lambda_.3} parent=0 // loop_footer_branch
    %12 = sbr.rel target = $region3
  $region8: #{_lambda_.3} parent=0 // loop_exit
    _

</llo_original>
